<compile_context>
chip_gen: v7x
topology: tpu7x:2x2x1
jax: 0.10.0
libtpu: 0.0.40
codegen_flags: <defaults>
</compile_context>

<pallas_src>
import jax
import jax.numpy as jnp
from jax import lax
from jax.experimental import pallas as pl
from jax.experimental.pallas import tpu as pltpu


def _flip_rows(x):
    """Exact reversal along axis 0 (sublanes) of a (T, T) tile, T % 8 == 0.

    Coarse: reverse the order of the 8-row (vreg-row) groups with static,
    sublane-aligned slices + one concatenate (pure vreg copies).
    Fine: reverse the 8 rows inside every group with a fixed 3-step bit-flip
    butterfly built from pltpu.roll (XLU) + one select (VALU) per step.
    Bit-exact permutation for any dtype; cost independent of T.
    """
    t = x.shape[0]
    g = t // 8
    if g > 1:
        x = jnp.concatenate(
            [x[(g - 1 - q) * 8:(g - q) * 8, :] for q in range(g)], axis=0)
    row = lax.broadcasted_iota(jnp.int32, x.shape, 0)
    for s in (4, 2, 1):
        fwd = pltpu.roll(x, t - s, axis=0)   # fwd[i] = x[i + s]  (roll by -s)
        bwd = pltpu.roll(x, s, axis=0)       # bwd[i] = x[i - s]
        x = jnp.where((row & s) == 0, fwd, bwd)
    return x


def _rot90_kernel(idx_ref, x_ref, o_ref):
    """idx_ref: SMEM (B,) rotation indices; x_ref/o_ref: VMEM (T, T) tiles.

    Tile-to-tile routing happens in the data-dependent input index_map; here
    only the matching intra-tile rotation is applied, expressed as shared
    predicated stages (each emitted once, gated by pl.when) built solely from
    XLU transposes and sublane row flips -- no lane-axis reversal:
        a=0: x
        a=1: F(T(x))            (90 deg CCW)
        a=2: F(T(F(T(x))))      (180 deg == 90 deg applied twice)
        a=3: T(F(x))            (270 deg CCW)
    """
    a = idx_ref[pl.program_id(0)]
    t1 = jnp.logical_or(a == 1, a == 2)

    @pl.when(t1)
    def _():
        o_ref[...] = x_ref[...].T

    @pl.when(jnp.logical_not(t1))
    def _():
        o_ref[...] = x_ref[...]

    @pl.when(a != 0)
    def _():
        o_ref[...] = _flip_rows(o_ref[...])

    @pl.when(jnp.logical_or(a == 2, a == 3))
    def _():
        o_ref[...] = o_ref[...].T

    @pl.when(a == 2)
    def _():
        o_ref[...] = _flip_rows(o_ref[...])


def random_rotation_90deg(batch, key, *, max_tile=512, angle_idx=None):
    """Pallas equivalent of RandomRotation90deg.forward.

    batch: (B, C, H, W) array (NCHW, any dtype), H == W.
    Returns (rotated_batch, angle_idx).  `angle_idx` may be supplied
    explicitly (testing); otherwise it is sampled with
    jax.random.randint(key, (B,), 0, 4) -- the torch.randint equivalent.
    """
    B, C, H, W = batch.shape
    assert H == W, "90-degree rotation kernel assumes square images"
    S = H

    if angle_idx is None:
        angle_idx = jax.random.randint(key, (B,), 0, 4, dtype=jnp.int32)
    else:
        angle_idx = jnp.asarray(angle_idx, dtype=jnp.int32)

    # Pad spatial dims to a multiple of 128 so every block is lane-dense and
    # (8,128)-aligned; the valid window is cropped back per image afterwards.
    P = ((S + 127) // 128) * 128
    x = batch
    if P != S:
        x = jnp.pad(batch, ((0, 0), (0, 0), (0, P - S), (0, P - S)))

    # Largest square tile dividing the (padded) image, capped at max_tile
    # (default 512: safe under v5e's 16 MiB default scoped VMEM, ~85% roofline).
    assert max_tile >= 128
    tile = max(t for t in (128, 256, 512, 1024) if t <= max_tile and P % t == 0)
    nt = P // tile

    block_bytes = tile * tile * batch.dtype.itemsize
    cp_kwargs = dict(
        dimension_semantics=("parallel", "parallel", "parallel", "parallel"))
    if 4 * block_bytes > (12 << 20):
        # Only needed for very large tiles (e.g. 1024 f32); keep < v7x VMEM.
        cp_kwargs["vmem_limit_bytes"] = min(4 * block_bytes + (8 << 20), 60 << 20)

    # Output tile (ti, tj) is produced from input tile:
    #   a=0: (ti, tj)            a=1: (tj, nt-1-ti)
    #   a=2: (nt-1-ti, nt-1-tj)  a=3: (nt-1-tj, ti)
    # i.e. the coarse part of the rotation is folded into the DMA addressing.
    def in_index_map(b, c, ti, tj, idx_ref):
        a = idx_ref[b]
        ri = nt - 1 - ti
        rj = nt - 1 - tj
        si = jnp.where(a == 0, ti, jnp.where(a == 1, tj, jnp.where(a == 2, ri, rj)))
        sj = jnp.where(a == 0, tj, jnp.where(a == 1, ri, jnp.where(a == 2, rj, ti)))
        return (b, c, si, sj)

    def out_index_map(b, c, ti, tj, idx_ref):
        return (b, c, ti, tj)

    rotated = pl.pallas_call(
        _rot90_kernel,
        out_shape=jax.ShapeDtypeStruct((B, C, P, P), batch.dtype),
        grid_spec=pltpu.PrefetchScalarGridSpec(
            num_scalar_prefetch=1,               # angle_idx lands in SMEM
            grid=(B, C, nt, nt),
            in_specs=[pl.BlockSpec((None, None, tile, tile), in_index_map)],
            out_specs=pl.BlockSpec((None, None, tile, tile), out_index_map),
        ),
        compiler_params=pltpu.CompilerParams(**cp_kwargs),
    )(angle_idx, x)

    if P != S:
        d = P - S

        def crop_one(img, a):
            r0 = jnp.where(jnp.logical_or(a == 1, a == 2), d, 0).astype(jnp.int32)
            c0 = jnp.where(jnp.logical_or(a == 2, a == 3), d, 0).astype(jnp.int32)
            return lax.dynamic_slice(img, (jnp.int32(0), r0, c0), (C, S, S))

        rotated = jax.vmap(crop_one)(rotated, angle_idx)

    return rotated, angle_idx


def _ref_rotate(batch, angle_idx):
    """Pure-JAX reference: exact 90-degree (CCW) rotations per image."""
    def rot_one(img, k):
        return lax.switch(
            k,
            [
                lambda a: a,
                lambda a: jnp.rot90(a, 1, axes=(-2, -1)),
                lambda a: jnp.rot90(a, 2, axes=(-2, -1)),
                lambda a: jnp.rot90(a, 3, axes=(-2, -1)),
            ],
            img,
        )
    return jax.vmap(rot_one)(batch, angle_idx)


if __name__ == "__main__":
    key = jax.random.PRNGKey(0)
    k_data, k_rot = jax.random.split(key)

    # Case 1: default config (tile=256 here), module-faithful random angles.
    B, C, H, W = 4, 3, 256, 256
    x = jax.random.normal(k_data, (B, C, H, W), dtype=jnp.float32)
    rotated, angle_idx = random_rotation_90deg(x, k_rot)
    rotated = jax.block_until_ready(rotated)
    angle_idx = jax.block_until_ready(angle_idx)
    assert rotated.shape == x.shape and rotated.dtype == x.dtype
    assert angle_idx.shape == (B,)
    assert bool(jnp.array_equal(rotated, _ref_rotate(x, angle_idx)))

    # Case 2: all four angles forced + smaller tile so the data-dependent tile
    # routing (nt=2) and every intra-tile rotation path are exercised.
    forced = jnp.array([0, 1, 2, 3], dtype=jnp.int32)
    rot2, a2 = random_rotation_90deg(x, k_rot, max_tile=128, angle_idx=forced)
    rot2 = jax.block_until_ready(rot2)
    assert bool(jnp.array_equal(rot2, _ref_rotate(x, forced)))

    # Case 3: non-multiple-of-128 spatial size -> pad + per-image crop path.
    x3 = jax.random.normal(jax.random.PRNGKey(1), (4, 1, 96, 96), dtype=jnp.float32)
    rot3, a3 = random_rotation_90deg(x3, None, angle_idx=forced)
    rot3 = jax.block_until_ready(rot3)
    assert rot3.shape == x3.shape
    assert bool(jnp.array_equal(rot3, _ref_rotate(x3, forced)))

    print("KERNEL_OK")
</pallas_src>

<mosaic_0001>
module attributes {stable_mosaic.version = 11 : i64} {
  func.func @_rot90_kernel(%arg0: i32, %arg1: i32, %arg2: i32, %arg3: i32, %arg4: memref<4xi32, #tpu.memory_space<smem>>, %arg5: memref<1x1x256x256xf32, #tpu.memory_space<vmem>>, %arg6: memref<1x1x256x256xf32, #tpu.memory_space<vmem>>) attributes {dimension_semantics = [#tpu.dimension_semantics<parallel>, #tpu.dimension_semantics<parallel>, #tpu.dimension_semantics<parallel>, #tpu.dimension_semantics<parallel>], iteration_bounds = array<i64: 4, 3, 1, 1>, scalar_prefetch = 1 : i64, scratch_operands = 0 : i64, tpu.core_type = #tpu.core_type<tc>, window_params = [{transform_indices = @transform_0, window_bounds = array<i64: 1, 1, 256, 256>}, {transform_indices = @transform_1, window_bounds = array<i64: 1, 1, 256, 256>}]} {
    %0 = arith.index_cast %arg0 : i32 to index
    %1 = memref.load %arg4[%0] : memref<4xi32, #tpu.memory_space<smem>>
    %c1_i32 = arith.constant 1 : i32
    %2 = arith.cmpi eq, %1, %c1_i32 : i32
    %c2_i32 = arith.constant 2 : i32
    %3 = arith.cmpi eq, %1, %c2_i32 : i32
    %4 = arith.ori %2, %3 : i1
    %5 = arith.extui %4 : i1 to i32
    %c0_i32 = arith.constant 0 : i32
    %6 = arith.cmpi ne, %5, %c0_i32 : i32
    scf.if %6 {
      %c0 = arith.constant 0 : index
      %c0_7 = arith.constant 0 : index
      %c0_8 = arith.constant 0 : index
      %c0_9 = arith.constant 0 : index
      %21 = vector.load %arg5[%c0, %c0_7, %c0_8, %c0_9] : memref<1x1x256x256xf32, #tpu.memory_space<vmem>>, vector<1x1x256x256xf32>
      %22 = vector.shape_cast %21 : vector<1x1x256x256xf32> to vector<256x256xf32>
      %23 = tpu.transpose %22, [1, 0] : vector<256x256xf32> -> vector<256x256xf32>
      %c0_10 = arith.constant 0 : index
      %c0_11 = arith.constant 0 : index
      %c0_12 = arith.constant 0 : index
      %c0_13 = arith.constant 0 : index
      %24 = vector.load %arg6[%c0_10, %c0_11, %c0_12, %c0_13] : memref<1x1x256x256xf32, #tpu.memory_space<vmem>>, vector<1x1x256x256xf32>
      %25 = vector.shape_cast %24 : vector<1x1x256x256xf32> to vector<256x256xf32>
      %26 = vector.shape_cast %23 : vector<256x256xf32> to vector<1x1x256x256xf32>
      tpu.vector_store %arg6[%c0_10, %c0_11, %c0_12, %c0_13], %26 {strides = array<i32>} : memref<1x1x256x256xf32, #tpu.memory_space<vmem>>, vector<1x1x256x256xf32>,
    } else {
    }
    %true = arith.constant true
    %7 = arith.xori %4, %true : i1
    %8 = arith.extui %7 : i1 to i32
    %c0_i32_0 = arith.constant 0 : i32
    %9 = arith.cmpi ne, %8, %c0_i32_0 : i32
    scf.if %9 {
      %c0 = arith.constant 0 : index
      %c0_7 = arith.constant 0 : index
      %c0_8 = arith.constant 0 : index
      %c0_9 = arith.constant 0 : index
      %21 = vector.load %arg5[%c0, %c0_7, %c0_8, %c0_9] : memref<1x1x256x256xf32, #tpu.memory_space<vmem>>, vector<1x1x256x256xf32>
      %22 = vector.shape_cast %21 : vector<1x1x256x256xf32> to vector<256x256xf32>
      %c0_10 = arith.constant 0 : index
      %c0_11 = arith.constant 0 : index
      %c0_12 = arith.constant 0 : index
      %c0_13 = arith.constant 0 : index
      %23 = vector.load %arg6[%c0_10, %c0_11, %c0_12, %c0_13] : memref<1x1x256x256xf32, #tpu.memory_space<vmem>>, vector<1x1x256x256xf32>
      %24 = vector.shape_cast %23 : vector<1x1x256x256xf32> to vector<256x256xf32>
      %25 = vector.shape_cast %22 : vector<256x256xf32> to vector<1x1x256x256xf32>
      tpu.vector_store %arg6[%c0_10, %c0_11, %c0_12, %c0_13], %25 {strides = array<i32>} : memref<1x1x256x256xf32, #tpu.memory_space<vmem>>, vector<1x1x256x256xf32>,
    } else {
    }
    %c0_i32_1 = arith.constant 0 : i32
    %10 = arith.cmpi ne, %1, %c0_i32_1 : i32
    %11 = arith.extui %10 : i1 to i32
    %c0_i32_2 = arith.constant 0 : i32
    %12 = arith.cmpi ne, %11, %c0_i32_2 : i32
    scf.if %12 {
      %c0 = arith.constant 0 : index
      %c0_7 = arith.constant 0 : index
      %c0_8 = arith.constant 0 : index
      %c0_9 = arith.constant 0 : index
      %21 = vector.load %arg6[%c0, %c0_7, %c0_8, %c0_9] : memref<1x1x256x256xf32, #tpu.memory_space<vmem>>, vector<1x1x256x256xf32>
      %22 = vector.shape_cast %21 : vector<1x1x256x256xf32> to vector<256x256xf32>
      %23 = vector.extract_strided_slice %22 {offsets = [248, 0], sizes = [8, 256], strides = [1, 1]} : vector<256x256xf32> to vector<8x256xf32>
      %24 = vector.extract_strided_slice %22 {offsets = [240, 0], sizes = [8, 256], strides = [1, 1]} : vector<256x256xf32> to vector<8x256xf32>
      %25 = vector.extract_strided_slice %22 {offsets = [232, 0], sizes = [8, 256], strides = [1, 1]} : vector<256x256xf32> to vector<8x256xf32>
      %26 = vector.extract_strided_slice %22 {offsets = [224, 0], sizes = [8, 256], strides = [1, 1]} : vector<256x256xf32> to vector<8x256xf32>
      %27 = vector.extract_strided_slice %22 {offsets = [216, 0], sizes = [8, 256], strides = [1, 1]} : vector<256x256xf32> to vector<8x256xf32>
      %28 = vector.extract_strided_slice %22 {offsets = [208, 0], sizes = [8, 256], strides = [1, 1]} : vector<256x256xf32> to vector<8x256xf32>
      %29 = vector.extract_strided_slice %22 {offsets = [200, 0], sizes = [8, 256], strides = [1, 1]} : vector<256x256xf32> to vector<8x256xf32>
      %30 = vector.extract_strided_slice %22 {offsets = [192, 0], sizes = [8, 256], strides = [1, 1]} : vector<256x256xf32> to vector<8x256xf32>
      %31 = vector.extract_strided_slice %22 {offsets = [184, 0], sizes = [8, 256], strides = [1, 1]} : vector<256x256xf32> to vector<8x256xf32>
      %32 = vector.extract_strided_slice %22 {offsets = [176, 0], sizes = [8, 256], strides = [1, 1]} : vector<256x256xf32> to vector<8x256xf32>
      %33 = vector.extract_strided_slice %22 {offsets = [168, 0], sizes = [8, 256], strides = [1, 1]} : vector<256x256xf32> to vector<8x256xf32>
      %34 = vector.extract_strided_slice %22 {offsets = [160, 0], sizes = [8, 256], strides = [1, 1]} : vector<256x256xf32> to vector<8x256xf32>
      %35 = vector.extract_strided_slice %22 {offsets = [152, 0], sizes = [8, 256], strides = [1, 1]} : vector<256x256xf32> to vector<8x256xf32>
      %36 = vector.extract_strided_slice %22 {offsets = [144, 0], sizes = [8, 256], strides = [1, 1]} : vector<256x256xf32> to vector<8x256xf32>
      %37 = vector.extract_strided_slice %22 {offsets = [136, 0], sizes = [8, 256], strides = [1, 1]} : vector<256x256xf32> to vector<8x256xf32>
      %38 = vector.extract_strided_slice %22 {offsets = [128, 0], sizes = [8, 256], strides = [1, 1]} : vector<256x256xf32> to vector<8x256xf32>
      %39 = vector.extract_strided_slice %22 {offsets = [120, 0], sizes = [8, 256], strides = [1, 1]} : vector<256x256xf32> to vector<8x256xf32>
      %40 = vector.extract_strided_slice %22 {offsets = [112, 0], sizes = [8, 256], strides = [1, 1]} : vector<256x256xf32> to vector<8x256xf32>
      %41 = vector.extract_strided_slice %22 {offsets = [104, 0], sizes = [8, 256], strides = [1, 1]} : vector<256x256xf32> to vector<8x256xf32>
      %42 = vector.extract_strided_slice %22 {offsets = [96, 0], sizes = [8, 256], strides = [1, 1]} : vector<256x256xf32> to vector<8x256xf32>
      %43 = vector.extract_strided_slice %22 {offsets = [88, 0], sizes = [8, 256], strides = [1, 1]} : vector<256x256xf32> to vector<8x256xf32>
      %44 = vector.extract_strided_slice %22 {offsets = [80, 0], sizes = [8, 256], strides = [1, 1]} : vector<256x256xf32> to vector<8x256xf32>
      %45 = vector.extract_strided_slice %22 {offsets = [72, 0], sizes = [8, 256], strides = [1, 1]} : vector<256x256xf32> to vector<8x256xf32>
      %46 = vector.extract_strided_slice %22 {offsets = [64, 0], sizes = [8, 256], strides = [1, 1]} : vector<256x256xf32> to vector<8x256xf32>
      %47 = vector.extract_strided_slice %22 {offsets = [56, 0], sizes = [8, 256], strides = [1, 1]} : vector<256x256xf32> to vector<8x256xf32>
      %48 = vector.extract_strided_slice %22 {offsets = [48, 0], sizes = [8, 256], strides = [1, 1]} : vector<256x256xf32> to vector<8x256xf32>
      %49 = vector.extract_strided_slice %22 {offsets = [40, 0], sizes = [8, 256], strides = [1, 1]} : vector<256x256xf32> to vector<8x256xf32>
      %50 = vector.extract_strided_slice %22 {offsets = [32, 0], sizes = [8, 256], strides = [1, 1]} : vector<256x256xf32> to vector<8x256xf32>
      %51 = vector.extract_strided_slice %22 {offsets = [24, 0], sizes = [8, 256], strides = [1, 1]} : vector<256x256xf32> to vector<8x256xf32>
      %52 = vector.extract_strided_slice %22 {offsets = [16, 0], sizes = [8, 256], strides = [1, 1]} : vector<256x256xf32> to vector<8x256xf32>
      %53 = vector.extract_strided_slice %22 {offsets = [8, 0], sizes = [8, 256], strides = [1, 1]} : vector<256x256xf32> to vector<8x256xf32>
      %54 = vector.extract_strided_slice %22 {offsets = [0, 0], sizes = [8, 256], strides = [1, 1]} : vector<256x256xf32> to vector<8x256xf32>
      %55 = tpu.concatenate %23, %24, %25, %26, %27, %28, %29, %30, %31, %32, %33, %34, %35, %36, %37, %38 in 0 : vector<8x256xf32>, vector<8x256xf32>, vector<8x256xf32>, vector<8x256xf32>, vector<8x256xf32>, vector<8x256xf32>, vector<8x256xf32>, vector<8x256xf32>, vector<8x256xf32>, vector<8x256xf32>, vector<8x256xf32>, vector<8x256xf32>, vector<8x256xf32>, vector<8x256xf32>, vector<8x256xf32>, vector<8x256xf32> -> vector<128x256xf32>
      %56 = tpu.concatenate %39, %40, %41, %42, %43, %44, %45, %46, %47, %48, %49, %50, %51, %52, %53, %54 in 0 : vector<8x256xf32>, vector<8x256xf32>, vector<8x256xf32>, vector<8x256xf32>, vector<8x256xf32>, vector<8x256xf32>, vector<8x256xf32>, vector<8x256xf32>, vector<8x256xf32>, vector<8x256xf32>, vector<8x256xf32>, vector<8x256xf32>, vector<8x256xf32>, vector<8x256xf32>, vector<8x256xf32>, vector<8x256xf32> -> vector<128x256xf32>
      %57 = tpu.concatenate %55, %56 in 0 : vector<128x256xf32>, vector<128x256xf32> -> vector<256x256xf32>
      %58 = tpu.iota {dimensions = array<i32: 0>} : vector<256x256xi32>
      %c252_i32 = arith.constant 252 : i32
      %59 = tpu.dynamic_rotate %57 by %c252_i32 dim 0 : vector<256x256xf32>, i32 -> vector<256x256xf32>
      %c4_i32 = arith.constant 4 : i32
      %60 = tpu.dynamic_rotate %57 by %c4_i32 dim 0 : vector<256x256xf32>, i32 -> vector<256x256xf32>
      %c4_i32_10 = arith.constant 4 : i32
      %61 = vector.broadcast %c4_i32_10 : i32 to vector<256x256xi32>
      %62 = arith.andi %58, %61 : vector<256x256xi32>
      %c0_i32_11 = arith.constant 0 : i32
      %63 = vector.broadcast %c0_i32_11 : i32 to vector<256x256xi32>
      %64 = arith.cmpi eq, %62, %63 : vector<256x256xi32>
      %65 = arith.select %64, %59, %60 : vector<256x256xi1>, vector<256x256xf32>
      %c254_i32 = arith.constant 254 : i32
      %66 = tpu.dynamic_rotate %65 by %c254_i32 dim 0 : vector<256x256xf32>, i32 -> vector<256x256xf32>
      %c2_i32_12 = arith.constant 2 : i32
      %67 = tpu.dynamic_rotate %65 by %c2_i32_12 dim 0 : vector<256x256xf32>, i32 -> vector<256x256xf32>
      %c2_i32_13 = arith.constant 2 : i32
      %68 = vector.broadcast %c2_i32_13 : i32 to vector<256x256xi32>
      %69 = arith.andi %58, %68 : vector<256x256xi32>
      %c0_i32_14 = arith.constant 0 : i32
      %70 = vector.broadcast %c0_i32_14 : i32 to vector<256x256xi32>
      %71 = arith.cmpi eq, %69, %70 : vector<256x256xi32>
      %72 = arith.select %71, %66, %67 : vector<256x256xi1>, vector<256x256xf32>
      %c255_i32 = arith.constant 255 : i32
      %73 = tpu.dynamic_rotate %72 by %c255_i32 dim 0 : vector<256x256xf32>, i32 -> vector<256x256xf32>
      %c1_i32_15 = arith.constant 1 : i32
      %74 = tpu.dynamic_rotate %72 by %c1_i32_15 dim 0 : vector<256x256xf32>, i32 -> vector<256x256xf32>
      %c1_i32_16 = arith.constant 1 : i32
      %75 = vector.broadcast %c1_i32_16 : i32 to vector<256x256xi32>
      %76 = arith.andi %58, %75 : vector<256x256xi32>
      %c0_i32_17 = arith.constant 0 : i32
      %77 = vector.broadcast %c0_i32_17 : i32 to vector<256x256xi32>
      %78 = arith.cmpi eq, %76, %77 : vector<256x256xi32>
      %79 = arith.select %78, %73, %74 : vector<256x256xi1>, vector<256x256xf32>
      %c0_18 = arith.constant 0 : index
      %c0_19 = arith.constant 0 : index
      %c0_20 = arith.constant 0 : index
      %c0_21 = arith.constant 0 : index
      %80 = vector.load %arg6[%c0_18, %c0_19, %c0_20, %c0_21] : memref<1x1x256x256xf32, #tpu.memory_space<vmem>>, vector<1x1x256x256xf32>
      %81 = vector.shape_cast %80 : vector<1x1x256x256xf32> to vector<256x256xf32>
      %82 = vector.shape_cast %79 : vector<256x256xf32> to vector<1x1x256x256xf32>
      tpu.vector_store %arg6[%c0_18, %c0_19, %c0_20, %c0_21], %82 {strides = array<i32>} : memref<1x1x256x256xf32, #tpu.memory_space<vmem>>, vector<1x1x256x256xf32>,
    } else {
    }
    %c2_i32_3 = arith.constant 2 : i32
    %13 = arith.cmpi eq, %1, %c2_i32_3 : i32
    %c3_i32 = arith.constant 3 : i32
    %14 = arith.cmpi eq, %1, %c3_i32 : i32
    %15 = arith.ori %13, %14 : i1
    %16 = arith.extui %15 : i1 to i32
    %c0_i32_4 = arith.constant 0 : i32
    %17 = arith.cmpi ne, %16, %c0_i32_4 : i32
    scf.if %17 {
      %c0 = arith.constant 0 : index
      %c0_7 = arith.constant 0 : index
      %c0_8 = arith.constant 0 : index
      %c0_9 = arith.constant 0 : index
      %21 = vector.load %arg6[%c0, %c0_7, %c0_8, %c0_9] : memref<1x1x256x256xf32, #tpu.memory_space<vmem>>, vector<1x1x256x256xf32>
      %22 = vector.shape_cast %21 : vector<1x1x256x256xf32> to vector<256x256xf32>
      %23 = tpu.transpose %22, [1, 0] : vector<256x256xf32> -> vector<256x256xf32>
      %c0_10 = arith.constant 0 : index
      %c0_11 = arith.constant 0 : index
      %c0_12 = arith.constant 0 : index
      %c0_13 = arith.constant 0 : index
      %24 = vector.load %arg6[%c0_10, %c0_11, %c0_12, %c0_13] : memref<1x1x256x256xf32, #tpu.memory_space<vmem>>, vector<1x1x256x256xf32>
      %25 = vector.shape_cast %24 : vector<1x1x256x256xf32> to vector<256x256xf32>
      %26 = vector.shape_cast %23 : vector<256x256xf32> to vector<1x1x256x256xf32>
      tpu.vector_store %arg6[%c0_10, %c0_11, %c0_12, %c0_13], %26 {strides = array<i32>} : memref<1x1x256x256xf32, #tpu.memory_space<vmem>>, vector<1x1x256x256xf32>,
    } else {
    }
    %c2_i32_5 = arith.constant 2 : i32
    %18 = arith.cmpi eq, %1, %c2_i32_5 : i32
    %19 = arith.extui %18 : i1 to i32
    %c0_i32_6 = arith.constant 0 : i32
    %20 = arith.cmpi ne, %19, %c0_i32_6 : i32
    scf.if %20 {
      %c0 = arith.constant 0 : index
      %c0_7 = arith.constant 0 : index
      %c0_8 = arith.constant 0 : index
      %c0_9 = arith.constant 0 : index
      %21 = vector.load %arg6[%c0, %c0_7, %c0_8, %c0_9] : memref<1x1x256x256xf32, #tpu.memory_space<vmem>>, vector<1x1x256x256xf32>
      %22 = vector.shape_cast %21 : vector<1x1x256x256xf32> to vector<256x256xf32>
      %23 = vector.extract_strided_slice %22 {offsets = [248, 0], sizes = [8, 256], strides = [1, 1]} : vector<256x256xf32> to vector<8x256xf32>
      %24 = vector.extract_strided_slice %22 {offsets = [240, 0], sizes = [8, 256], strides = [1, 1]} : vector<256x256xf32> to vector<8x256xf32>
      %25 = vector.extract_strided_slice %22 {offsets = [232, 0], sizes = [8, 256], strides = [1, 1]} : vector<256x256xf32> to vector<8x256xf32>
      %26 = vector.extract_strided_slice %22 {offsets = [224, 0], sizes = [8, 256], strides = [1, 1]} : vector<256x256xf32> to vector<8x256xf32>
      %27 = vector.extract_strided_slice %22 {offsets = [216, 0], sizes = [8, 256], strides = [1, 1]} : vector<256x256xf32> to vector<8x256xf32>
      %28 = vector.extract_strided_slice %22 {offsets = [208, 0], sizes = [8, 256], strides = [1, 1]} : vector<256x256xf32> to vector<8x256xf32>
      %29 = vector.extract_strided_slice %22 {offsets = [200, 0], sizes = [8, 256], strides = [1, 1]} : vector<256x256xf32> to vector<8x256xf32>
      %30 = vector.extract_strided_slice %22 {offsets = [192, 0], sizes = [8, 256], strides = [1, 1]} : vector<256x256xf32> to vector<8x256xf32>
      %31 = vector.extract_strided_slice %22 {offsets = [184, 0], sizes = [8, 256], strides = [1, 1]} : vector<256x256xf32> to vector<8x256xf32>
      %32 = vector.extract_strided_slice %22 {offsets = [176, 0], sizes = [8, 256], strides = [1, 1]} : vector<256x256xf32> to vector<8x256xf32>
      %33 = vector.extract_strided_slice %22 {offsets = [168, 0], sizes = [8, 256], strides = [1, 1]} : vector<256x256xf32> to vector<8x256xf32>
      %34 = vector.extract_strided_slice %22 {offsets = [160, 0], sizes = [8, 256], strides = [1, 1]} : vector<256x256xf32> to vector<8x256xf32>
      %35 = vector.extract_strided_slice %22 {offsets = [152, 0], sizes = [8, 256], strides = [1, 1]} : vector<256x256xf32> to vector<8x256xf32>
      %36 = vector.extract_strided_slice %22 {offsets = [144, 0], sizes = [8, 256], strides = [1, 1]} : vector<256x256xf32> to vector<8x256xf32>
      %37 = vector.extract_strided_slice %22 {offsets = [136, 0], sizes = [8, 256], strides = [1, 1]} : vector<256x256xf32> to vector<8x256xf32>
      %38 = vector.extract_strided_slice %22 {offsets = [128, 0], sizes = [8, 256], strides = [1, 1]} : vector<256x256xf32> to vector<8x256xf32>
      %39 = vector.extract_strided_slice %22 {offsets = [120, 0], sizes = [8, 256], strides = [1, 1]} : vector<256x256xf32> to vector<8x256xf32>
      %40 = vector.extract_strided_slice %22 {offsets = [112, 0], sizes = [8, 256], strides = [1, 1]} : vector<256x256xf32> to vector<8x256xf32>
      %41 = vector.extract_strided_slice %22 {offsets = [104, 0], sizes = [8, 256], strides = [1, 1]} : vector<256x256xf32> to vector<8x256xf32>
      %42 = vector.extract_strided_slice %22 {offsets = [96, 0], sizes = [8, 256], strides = [1, 1]} : vector<256x256xf32> to vector<8x256xf32>
      %43 = vector.extract_strided_slice %22 {offsets = [88, 0], sizes = [8, 256], strides = [1, 1]} : vector<256x256xf32> to vector<8x256xf32>
      %44 = vector.extract_strided_slice %22 {offsets = [80, 0], sizes = [8, 256], strides = [1, 1]} : vector<256x256xf32> to vector<8x256xf32>
      %45 = vector.extract_strided_slice %22 {offsets = [72, 0], sizes = [8, 256], strides = [1, 1]} : vector<256x256xf32> to vector<8x256xf32>
      %46 = vector.extract_strided_slice %22 {offsets = [64, 0], sizes = [8, 256], strides = [1, 1]} : vector<256x256xf32> to vector<8x256xf32>
      %47 = vector.extract_strided_slice %22 {offsets = [56, 0], sizes = [8, 256], strides = [1, 1]} : vector<256x256xf32> to vector<8x256xf32>
      %48 = vector.extract_strided_slice %22 {offsets = [48, 0], sizes = [8, 256], strides = [1, 1]} : vector<256x256xf32> to vector<8x256xf32>
      %49 = vector.extract_strided_slice %22 {offsets = [40, 0], sizes = [8, 256], strides = [1, 1]} : vector<256x256xf32> to vector<8x256xf32>
      %50 = vector.extract_strided_slice %22 {offsets = [32, 0], sizes = [8, 256], strides = [1, 1]} : vector<256x256xf32> to vector<8x256xf32>
      %51 = vector.extract_strided_slice %22 {offsets = [24, 0], sizes = [8, 256], strides = [1, 1]} : vector<256x256xf32> to vector<8x256xf32>
      %52 = vector.extract_strided_slice %22 {offsets = [16, 0], sizes = [8, 256], strides = [1, 1]} : vector<256x256xf32> to vector<8x256xf32>
      %53 = vector.extract_strided_slice %22 {offsets = [8, 0], sizes = [8, 256], strides = [1, 1]} : vector<256x256xf32> to vector<8x256xf32>
      %54 = vector.extract_strided_slice %22 {offsets = [0, 0], sizes = [8, 256], strides = [1, 1]} : vector<256x256xf32> to vector<8x256xf32>
      %55 = tpu.concatenate %23, %24, %25, %26, %27, %28, %29, %30, %31, %32, %33, %34, %35, %36, %37, %38 in 0 : vector<8x256xf32>, vector<8x256xf32>, vector<8x256xf32>, vector<8x256xf32>, vector<8x256xf32>, vector<8x256xf32>, vector<8x256xf32>, vector<8x256xf32>, vector<8x256xf32>, vector<8x256xf32>, vector<8x256xf32>, vector<8x256xf32>, vector<8x256xf32>, vector<8x256xf32>, vector<8x256xf32>, vector<8x256xf32> -> vector<128x256xf32>
      %56 = tpu.concatenate %39, %40, %41, %42, %43, %44, %45, %46, %47, %48, %49, %50, %51, %52, %53, %54 in 0 : vector<8x256xf32>, vector<8x256xf32>, vector<8x256xf32>, vector<8x256xf32>, vector<8x256xf32>, vector<8x256xf32>, vector<8x256xf32>, vector<8x256xf32>, vector<8x256xf32>, vector<8x256xf32>, vector<8x256xf32>, vector<8x256xf32>, vector<8x256xf32>, vector<8x256xf32>, vector<8x256xf32>, vector<8x256xf32> -> vector<128x256xf32>
      %57 = tpu.concatenate %55, %56 in 0 : vector<128x256xf32>, vector<128x256xf32> -> vector<256x256xf32>
      %58 = tpu.iota {dimensions = array<i32: 0>} : vector<256x256xi32>
      %c252_i32 = arith.constant 252 : i32
      %59 = tpu.dynamic_rotate %57 by %c252_i32 dim 0 : vector<256x256xf32>, i32 -> vector<256x256xf32>
      %c4_i32 = arith.constant 4 : i32
      %60 = tpu.dynamic_rotate %57 by %c4_i32 dim 0 : vector<256x256xf32>, i32 -> vector<256x256xf32>
      %c4_i32_10 = arith.constant 4 : i32
      %61 = vector.broadcast %c4_i32_10 : i32 to vector<256x256xi32>
      %62 = arith.andi %58, %61 : vector<256x256xi32>
      %c0_i32_11 = arith.constant 0 : i32
      %63 = vector.broadcast %c0_i32_11 : i32 to vector<256x256xi32>
      %64 = arith.cmpi eq, %62, %63 : vector<256x256xi32>
      %65 = arith.select %64, %59, %60 : vector<256x256xi1>, vector<256x256xf32>
      %c254_i32 = arith.constant 254 : i32
      %66 = tpu.dynamic_rotate %65 by %c254_i32 dim 0 : vector<256x256xf32>, i32 -> vector<256x256xf32>
      %c2_i32_12 = arith.constant 2 : i32
      %67 = tpu.dynamic_rotate %65 by %c2_i32_12 dim 0 : vector<256x256xf32>, i32 -> vector<256x256xf32>
      %c2_i32_13 = arith.constant 2 : i32
      %68 = vector.broadcast %c2_i32_13 : i32 to vector<256x256xi32>
      %69 = arith.andi %58, %68 : vector<256x256xi32>
      %c0_i32_14 = arith.constant 0 : i32
      %70 = vector.broadcast %c0_i32_14 : i32 to vector<256x256xi32>
      %71 = arith.cmpi eq, %69, %70 : vector<256x256xi32>
      %72 = arith.select %71, %66, %67 : vector<256x256xi1>, vector<256x256xf32>
      %c255_i32 = arith.constant 255 : i32
      %73 = tpu.dynamic_rotate %72 by %c255_i32 dim 0 : vector<256x256xf32>, i32 -> vector<256x256xf32>
      %c1_i32_15 = arith.constant 1 : i32
      %74 = tpu.dynamic_rotate %72 by %c1_i32_15 dim 0 : vector<256x256xf32>, i32 -> vector<256x256xf32>
      %c1_i32_16 = arith.constant 1 : i32
      %75 = vector.broadcast %c1_i32_16 : i32 to vector<256x256xi32>
      %76 = arith.andi %58, %75 : vector<256x256xi32>
      %c0_i32_17 = arith.constant 0 : i32
      %77 = vector.broadcast %c0_i32_17 : i32 to vector<256x256xi32>
      %78 = arith.cmpi eq, %76, %77 : vector<256x256xi32>
      %79 = arith.select %78, %73, %74 : vector<256x256xi1>, vector<256x256xf32>
      %c0_18 = arith.constant 0 : index
      %c0_19 = arith.constant 0 : index
      %c0_20 = arith.constant 0 : index
      %c0_21 = arith.constant 0 : index
      %80 = vector.load %arg6[%c0_18, %c0_19, %c0_20, %c0_21] : memref<1x1x256x256xf32, #tpu.memory_space<vmem>>, vector<1x1x256x256xf32>
      %81 = vector.shape_cast %80 : vector<1x1x256x256xf32> to vector<256x256xf32>
      %82 = vector.shape_cast %79 : vector<256x256xf32> to vector<1x1x256x256xf32>
      tpu.vector_store %arg6[%c0_18, %c0_19, %c0_20, %c0_21], %82 {strides = array<i32>} : memref<1x1x256x256xf32, #tpu.memory_space<vmem>>, vector<1x1x256x256xf32>,
    } else {
    }
    return
  }
  func.func @transform_0(%arg0: i32, %arg1: i32, %arg2: i32, %arg3: i32, %arg4: memref<4xi32, #tpu.memory_space<smem>>) -> (i32, i32, i32, i32) {
    %0 = arith.index_cast %arg0 : i32 to index
    %1 = memref.load %arg4[%0] : memref<4xi32, #tpu.memory_space<smem>>
    %c0_i32 = arith.constant 0 : i32
    %2 = arith.subi %c0_i32, %arg2 : i32
    %c0_i32_0 = arith.constant 0 : i32
    %3 = arith.subi %c0_i32_0, %arg3 : i32
    %c0_i32_1 = arith.constant 0 : i32
    %4 = arith.cmpi eq, %1, %c0_i32_1 : i32
    %c1_i32 = arith.constant 1 : i32
    %5 = arith.cmpi eq, %1, %c1_i32 : i32
    %c2_i32 = arith.constant 2 : i32
    %6 = arith.cmpi eq, %1, %c2_i32 : i32
    %7 = arith.select %6, %2, %3 : i32
    %8 = arith.select %5, %arg3, %7 : i32
    %9 = arith.select %4, %arg2, %8 : i32
    %c0_i32_2 = arith.constant 0 : i32
    %10 = arith.cmpi eq, %1, %c0_i32_2 : i32
    %c1_i32_3 = arith.constant 1 : i32
    %11 = arith.cmpi eq, %1, %c1_i32_3 : i32
    %c2_i32_4 = arith.constant 2 : i32
    %12 = arith.cmpi eq, %1, %c2_i32_4 : i32
    %13 = arith.select %12, %3, %arg2 : i32
    %14 = arith.select %11, %2, %13 : i32
    %15 = arith.select %10, %arg3, %14 : i32
    %c0_i32_5 = arith.constant 0 : i32
    return %arg0, %arg1, %9, %15 : i32, i32, i32, i32
  }
  func.func @transform_1(%arg0: i32, %arg1: i32, %arg2: i32, %arg3: i32, %arg4: memref<4xi32, #tpu.memory_space<smem>>) -> (i32, i32, i32, i32) {
    %c0_i32 = arith.constant 0 : i32
    return %arg0, %arg1, %arg2, %arg3 : i32, i32, i32, i32
  }
}

</mosaic_0001>

<llo_original>
// kernel: tpu_custom_call.1
$region0: #{tpu_custom_call.1}
  #allocation0 [shape = 'u32[]', space=smem, size = 0x4, offset = 0x4, fixed_abs, tag = 'smem constant byte address 0x4 - core index']
  #allocation1 [shape = 'u32[144,128]{1,0:T(1,128)}', space=vmem, size = 0x12000, scoped, tag = 'internal scratch']
  #allocation2 [shape = 's32[1]{0}', space=sflag, size = 0x4, scoped, tag = 'scoped memory for tpu_custom_call.1']
  #allocation3 [shape = 'u8[512]{0}', space=smem, size = 0x200, scoped, tag = 'prefetched SMEM operand 0']
  %s0 = inlined_call_operand.hbm [shape: s32[4], index: 0, kind: input, shape index: {}]
  %s1 = inlined_call_operand.hbm [shape: f32[4,3,256,256], index: 1, kind: input, shape index: {}]
  %s2 = inlined_call_operand.hbm [shape: f32[4,3,256,256], index: 2, kind: output, shape index: {}]
  %s3 = sld [smem:[#allocation0]]
  $region61: #{tpu_custom_call.1} parent=0
    _
  %s5 = ssub.s32 1, %s3
  %s6 = scalar_select 0, %s5, %s3
  %8 = dma.hbm_to_smem %s0, 16, [#allocation3], [#allocation2]
  %9 = dma.done [#allocation2], 16
  %10 = sfence
  $region1: #{tpu_custom_call.1} parent=0
    #allocation4 [shape = 'u8[524288]{0}', space=vmem, size = 0x80000, scoped, tag = 'input window, operand 1']
    #allocation5 [shape = 's32[2]{0}', space=sflag, size = 0x8, scoped, tag = 'scoped memory for tpu_custom_call.1']
    #allocation6 [shape = 's32[2]{0}', space=sflag, size = 0x8, scoped, tag = 'scoped memory for tpu_custom_call.1']
    #allocation7 [shape = 'u8[524288]{0}', space=vmem, size = 0x80000, scoped, tag = 'output window, operand 0']
    %11 = vsyncpa [#allocation5], 0
    %s12 = scalar_lea.sflag [#allocation5], 1
    %13 = vsyncpa %s12, 0
    %14 = vsyncpa [#allocation6], 0
    %s15 = scalar_lea.sflag [#allocation6], 1
    %16 = vsyncpa %s15, 0
    loop: start=0, step=1, limit=14
    $region2: #{tpu_custom_call.1} parent=1 // loop_pre_header
      _
    $region3: #{tpu_custom_call.1} parent=1 // loop_header
      %s18 = sphi 0, %s22
      %p19 = scmp.ge.s32.totalorder %s18, 14
      %s25 = sphi 0, %s51
      %s26 = sphi 0, %s47
      %s27 = sphi 0, %s43
      %s28 = sphi 0, %s39
      %s29 = sphi 0, %s25
      %s30 = sphi 0, %s26
      %s31 = sphi 0, %s27
      %s32 = sphi 0, %s28
      %s33 = sphi 0, %s29
      %s34 = sphi 0, %s30
      %s35 = sphi 0, %s31
      %s36 = sphi 0, %s32
      %s84 = sphi 0, %s86
      %s87 = sphi 0, %s84
      %s88 = sphi 0, %s87
      %s104 = sphi 0, %s88
      %s116 = sphi 0, %s118
      %s119 = sphi 0, %s116
      %s120 = sphi 0, %s119
      %s136 = sphi 0, %s120
    $region4: #{tpu_custom_call.1} parent=1 // loop_header_branch
      %21 = sbr.rel (%p19) target = $region8
    $region5: #{tpu_custom_call.1} parent=1 // loop_body
      %s23 = ssub.s32 %s18, 1
      %s24 = ssub.s32 %s18, 2
      %s37 = sadd.s32 1, %s28
      %p38 = scmp.ge.s32.totalorder %s37, 1
      %s39 = scalar_select %p38, 0, %s37
      %s40 = sadd.s32 1, %s27
      %s41 = scalar_select %p38, %s40, %s27
      %p42 = scmp.ge.s32.totalorder %s41, 1
      %s43 = scalar_select %p42, 0, %s41
      %s44 = sadd.s32 1, %s26
      %s45 = scalar_select %p42, %s44, %s26
      %p46 = scmp.ge.s32.totalorder %s45, 3
      %s47 = scalar_select %p46, 0, %s45
      %s48 = sadd.s32 1, %s25
      %s49 = scalar_select %p46, %s48, %s25
      %p50 = scmp.ge.s32.totalorder %s49, 4
      %s51 = scalar_select %p50, 0, %s49
      %s52 = sld [smem:[#allocation3 + %s25]]
      %s53 = ssub.s32 0, %s27
      %s54 = ssub.s32 0, %s28
      %p55 = scmp.eq.s32.totalorder %s52, 0
      %p56 = scmp.eq.s32.totalorder %s52, 1
      %p57 = scmp.eq.s32.totalorder %s52, 2
      %s58 = scalar_select %p57, %s53, %s54
      %s59 = scalar_select %p56, %s28, %s58
      %s60 = scalar_select %p55, %s27, %s59
      %s61 = scalar_select %p57, %s54, %s27
      %s62 = scalar_select %p56, %s53, %s61
      %s63 = scalar_select %p55, %s28, %s62
      %s64 = sld [smem:[#allocation3 + %s51]]
      %s65 = ssub.s32 0, %s43
      %s66 = ssub.s32 0, %s39
      %p67 = scmp.eq.s32.totalorder %s64, 0
      %p68 = scmp.eq.s32.totalorder %s64, 1
      %p69 = scmp.eq.s32.totalorder %s64, 2
      %s70 = scalar_select %p69, %s65, %s66
      %s71 = scalar_select %p68, %s39, %s70
      %s72 = scalar_select %p67, %s43, %s71
      %s73 = scalar_select %p69, %s66, %s43
      %s74 = scalar_select %p68, %s65, %s73
      %s75 = scalar_select %p67, %s39, %s74
      %s76 = ssub.s32 %s25, %s51
      %s77 = ssub.s32 %s26, %s47
      %s78 = sor.u32 %s76, %s77
      %s79 = ssub.s32 %s60, %s72
      %s80 = sor.u32 %s78, %s79
      %s81 = ssub.s32 %s63, %s75
      %s82 = sor.u32 %s80, %s81
      %p83 = scmp.eq.s32.totalorder %s82, 0
      %s85 = sadd.s32 %s84, 1
      %s86 = scalar_select %p83, %s84, %s85
      %p89 = pneg %p83
      %p90 = scmp.eq.s32.totalorder %s18, 11
      %p91 = por %p89, %p90
      %p92 = scmp.ne.s32.totalorder %s84, %s87
      %p93 = scmp.eq.s32.totalorder %s18, 0
      %p94 = por %p92, %p93
      %p95 = scmp.ne.s32.totalorder %s84, %s87
      %p96 = scmp.eq.s32.totalorder %s23, 11
      %p97 = por %p95, %p96
      %p98 = scmp.ne.s32.totalorder %s87, %s88
      %p99 = scmp.eq.s32.totalorder %s23, 0
      %p100 = por %p98, %p99
      %p101 = scmp.ne.s32.totalorder %s87, %s88
      %p102 = scmp.eq.s32.totalorder %s24, 11
      %p103 = por %p101, %p102
      %p105 = scmp.ne.s32.totalorder %s88, %s104
      %p106 = scmp.eq.s32.totalorder %s24, 0
      %p107 = por %p105, %p106
      %s108 = ssub.s32 %s25, %s51
      %s109 = ssub.s32 %s26, %s47
      %s110 = sor.u32 %s108, %s109
      %s111 = ssub.s32 %s27, %s43
      %s112 = sor.u32 %s110, %s111
      %s113 = ssub.s32 %s28, %s39
      %s114 = sor.u32 %s112, %s113
      %p115 = scmp.eq.s32.totalorder %s114, 0
      %s117 = sadd.s32 %s116, 1
      %s118 = scalar_select %p115, %s116, %s117
      %p121 = pneg %p115
      %p122 = scmp.eq.s32.totalorder %s18, 11
      %p123 = por %p121, %p122
      %p124 = scmp.ne.s32.totalorder %s116, %s119
      %p125 = scmp.eq.s32.totalorder %s18, 0
      %p126 = por %p124, %p125
      %p127 = scmp.ne.s32.totalorder %s116, %s119
      %p128 = scmp.eq.s32.totalorder %s23, 11
      %p129 = por %p127, %p128
      %p130 = scmp.ne.s32.totalorder %s119, %s120
      %p131 = scmp.eq.s32.totalorder %s23, 0
      %p132 = por %p130, %p131
      %p133 = scmp.ne.s32.totalorder %s119, %s120
      %p134 = scmp.eq.s32.totalorder %s24, 11
      %p135 = por %p133, %p134
      %p137 = scmp.ne.s32.totalorder %s120, %s136
      %p138 = scmp.eq.s32.totalorder %s24, 0
      %p139 = por %p137, %p138
      %p140 = scmp.le.s32.totalorder 1, %s18
      %p141 = scmp.lt.s32.totalorder %s18, 13
      %p142 = pnand %p140, %p141
      %p143 = pneg %p142
      // Predicated region
      $region9: #{tpu_custom_call.1} parent=5 // pred_check
        _
      $region10: #{tpu_custom_call.1} parent=5 // pred_check_branch
        %145 = sbr.rel (%p142) target = $region12
      $region11: #{tpu_custom_call.1} parent=5 // pred_region
        %s146 = ssub.s32 %s18, 1
      $region12: #{tpu_custom_call.1} parent=5 // pred_fallthru
        _
      %p147 = scmp.lt.s32.totalorder %s18, 12
      // Predicated region
      $region13: #{tpu_custom_call.1} parent=5 // pred_check
        %p148 = pneg %p147
      $region14: #{tpu_custom_call.1} parent=5 // pred_check_branch
        %150 = sbr.rel (%p148) target = $region16
      $region15: #{tpu_custom_call.1} parent=5 // pred_region
        // Predicated region
        $region17: #{tpu_custom_call.1} parent=15 // pred_check
          %p151 = pneg %p94
        $region18: #{tpu_custom_call.1} parent=15 // pred_check_branch
          %153 = sbr.rel (%p151) target = $region20
        $region19: #{tpu_custom_call.1} parent=15 // pred_region
          %s154 = sand.u32 %s84, 1
          %s155 = scalar_lea.sflag [#allocation5], %s154
          %s156 = sand.u32 %s84, 1
          %s157 = smul.addr %s156, 512
          %s158 = scalar_lea.vmem [#allocation4], %s157
          %s159 = sld [smem:[#allocation3 + %s25]]
          %s160 = ssub.s32 0, %s27
          %s161 = ssub.s32 0, %s28
          %p162 = scmp.eq.s32.totalorder %s159, 0
          %p163 = scmp.eq.s32.totalorder %s159, 1
          %p164 = scmp.eq.s32.totalorder %s159, 2
          %s165 = scalar_select %p164, %s160, %s161
          %s166 = scalar_select %p163, %s28, %s165
          %s167 = scalar_select %p162, %s27, %s166
          %s168 = scalar_select %p164, %s161, %s27
          %s169 = scalar_select %p163, %s160, %s168
          %s170 = scalar_select %p162, %s28, %s169
          %s171 = smul.u32 32, %s167
          %s172 = smul.u32 2, %s170
          %s174 = ssub.s32 8192, 8192
          %175 = vsyncadd %s155, %s174
          %s176 = smul.addr %s171, 2
          %s177 = sadd.s32 %s172, %s176
          %s178 = smul.addr %s26, 64
          %s179 = sadd.s32 %s177, %s178
          %s180 = smul.addr %s25, 192
          %s181 = sadd.s32 %s179, %s180
          %s182 = smul.addr %s181, 128
          %s183 = scalar_lea.hbm %s1, %s182
          %s184 = sshll.u32 %s158, 4
          %s185 = int_to_ptr.vmem [resolvable:$true] %s184
          %190 = dma.hbm_to_vmem [thread:$0]  %s183, 8192, %s185, %s155, 256, 256, 16
        $region20: #{tpu_custom_call.1} parent=15 // pred_fallthru
          _
      $region16: #{tpu_custom_call.1} parent=5 // pred_fallthru
        _
      %p191 = scmp.le.s32.totalorder 1, %s18
      %p192 = scmp.lt.s32.totalorder %s18, 13
      %p193 = pnand %p191, %p192
      %p194 = pneg %p193
      // Predicated region
      $region21: #{tpu_custom_call.1} parent=5 // pred_check
        _
      $region22: #{tpu_custom_call.1} parent=5 // pred_check_branch
        %196 = sbr.rel (%p193) target = $region24
      $region23: #{tpu_custom_call.1} parent=5 // pred_region
        %s197 = ssub.s32 %s18, 1
        %s198 = sand.u32 %s87, 1
        %s199 = scalar_lea.sflag [#allocation5], %s198
        %s200 = sand.u32 %s87, 1
        %s201 = smul.addr %s200, 512
        %s202 = scalar_lea.vmem [#allocation4], %s201
        // Predicated region
        $region25: #{tpu_custom_call.1} parent=23 // pred_check
          %p203 = pneg %p100
        $region26: #{tpu_custom_call.1} parent=23 // pred_check_branch
          %205 = sbr.rel (%p203) target = $region28
        $region27: #{tpu_custom_call.1} parent=23 // pred_region
          %206 = dma.done %s199, 8192
        $region28: #{tpu_custom_call.1} parent=23 // pred_fallthru
          _
        %s207 = sand.u32 %s87, 1
        %s208 = scalar_lea.sflag [#allocation5], %s207
        %s209 = sand.u32 %s87, 1
        %s210 = smul.addr %s209, 512
        %s211 = scalar_lea.vmem [#allocation4], %s210
        %p212 = pneg %p100
        %p213 = pneg %p97
        %p214 = pneg %p132
        %p215 = pneg %p129
        %s216 = sand.u32 %s119, 1
        %s217 = scalar_lea.sflag [#allocation6], %s216
        %s218 = sand.u32 %s119, 1
        %s219 = smul.addr %s218, 512
        %s220 = scalar_lea.vmem [#allocation7], %s219
        %s221 = sld [smem:[#allocation3 + %s29]]
        %s222 = ssub.s32 0, %s31
        %s223 = ssub.s32 0, %s32
        %p224 = scmp.eq.s32.totalorder %s221, 0
        %p225 = scmp.eq.s32.totalorder %s221, 1
        %p226 = scmp.eq.s32.totalorder %s221, 2
        %s227 = scalar_select %p226, %s222, %s223
        %s228 = scalar_select %p225, %s32, %s227
        %s229 = scalar_select %p224, %s31, %s228
        %s230 = scalar_select %p226, %s223, %s31
        %s231 = scalar_select %p225, %s222, %s230
        %s232 = scalar_select %p224, %s32, %s231
        %s233 = smul.u32 32, %s229
        %s234 = smul.u32 2, %s232
        %s235 = smul.u32 32, %s31
        %s236 = smul.u32 2, %s32
        %s237 = sld [smem:[#allocation3 + %s29]]
        %p238 = scmp.eq.s32.totalorder %s237, 1
        %p239 = scmp.eq.s32.totalorder %s237, 2
        %p240 = por %p238, %p239
        // Predicated region
        $region29: #{tpu_custom_call.1} parent=23 // pred_check
          %p241 = pneg %p240
        $region30: #{tpu_custom_call.1} parent=23 // pred_check_branch
          %243 = sbr.rel (%p241) target = $region32
        $region31: #{tpu_custom_call.1} parent=23 // pred_region
          %v244 = vld [vmem:[%s202] sm:$0xff]
          %v245 = vld [vmem:[%s202 + $0x8] sm:$0xff]
          %v246 = vld [vmem:[%s202 + $0x10] sm:$0xff]
          %v247 = vld [vmem:[%s202 + $0x18] sm:$0xff]
          %v248 = vld [vmem:[%s202 + $0x20] sm:$0xff]
          %v249 = vld [vmem:[%s202 + $0x28] sm:$0xff]
          %v250 = vld [vmem:[%s202 + $0x30] sm:$0xff]
          %v251 = vld [vmem:[%s202 + $0x38] sm:$0xff]
          %v252 = vld [vmem:[%s202 + $0x40] sm:$0xff]
          %v253 = vld [vmem:[%s202 + $0x48] sm:$0xff]
          %v254 = vld [vmem:[%s202 + $0x50] sm:$0xff]
          %v255 = vld [vmem:[%s202 + $0x58] sm:$0xff]
          %v256 = vld [vmem:[%s202 + $0x60] sm:$0xff]
          %v257 = vld [vmem:[%s202 + $0x68] sm:$0xff]
          %v258 = vld [vmem:[%s202 + $0x70] sm:$0xff]
          %v259 = vld [vmem:[%s202 + $0x78] sm:$0xff]
          %v260 = vld [vmem:[%s202 + $0x80] sm:$0xff]
          %v261 = vld [vmem:[%s202 + $0x88] sm:$0xff]
          %v262 = vld [vmem:[%s202 + $0x90] sm:$0xff]
          %v263 = vld [vmem:[%s202 + $0x98] sm:$0xff]
          %v264 = vld [vmem:[%s202 + $0xa0] sm:$0xff]
          %v265 = vld [vmem:[%s202 + $0xa8] sm:$0xff]
          %v266 = vld [vmem:[%s202 + $0xb0] sm:$0xff]
          %v267 = vld [vmem:[%s202 + $0xb8] sm:$0xff]
          %v268 = vld [vmem:[%s202 + $0xc0] sm:$0xff]
          %v269 = vld [vmem:[%s202 + $0xc8] sm:$0xff]
          %v270 = vld [vmem:[%s202 + $0xd0] sm:$0xff]
          %v271 = vld [vmem:[%s202 + $0xd8] sm:$0xff]
          %v272 = vld [vmem:[%s202 + $0xe0] sm:$0xff]
          %v273 = vld [vmem:[%s202 + $0xe8] sm:$0xff]
          %v274 = vld [vmem:[%s202 + $0xf0] sm:$0xff]
          %v275 = vld [vmem:[%s202 + $0xf8] sm:$0xff]
          %v276 = vld [vmem:[%s202 + $0x100] sm:$0xff]
          %v277 = vld [vmem:[%s202 + $0x108] sm:$0xff]
          %v278 = vld [vmem:[%s202 + $0x110] sm:$0xff]
          %v279 = vld [vmem:[%s202 + $0x118] sm:$0xff]
          %v280 = vld [vmem:[%s202 + $0x120] sm:$0xff]
          %v281 = vld [vmem:[%s202 + $0x128] sm:$0xff]
          %v282 = vld [vmem:[%s202 + $0x130] sm:$0xff]
          %v283 = vld [vmem:[%s202 + $0x138] sm:$0xff]
          %v284 = vld [vmem:[%s202 + $0x140] sm:$0xff]
          %v285 = vld [vmem:[%s202 + $0x148] sm:$0xff]
          %v286 = vld [vmem:[%s202 + $0x150] sm:$0xff]
          %v287 = vld [vmem:[%s202 + $0x158] sm:$0xff]
          %v288 = vld [vmem:[%s202 + $0x160] sm:$0xff]
          %v289 = vld [vmem:[%s202 + $0x168] sm:$0xff]
          %v290 = vld [vmem:[%s202 + $0x170] sm:$0xff]
          %v291 = vld [vmem:[%s202 + $0x178] sm:$0xff]
          %v292 = vld [vmem:[%s202 + $0x180] sm:$0xff]
          %v293 = vld [vmem:[%s202 + $0x188] sm:$0xff]
          %v294 = vld [vmem:[%s202 + $0x190] sm:$0xff]
          %v295 = vld [vmem:[%s202 + $0x198] sm:$0xff]
          %v296 = vld [vmem:[%s202 + $0x1a0] sm:$0xff]
          %v297 = vld [vmem:[%s202 + $0x1a8] sm:$0xff]
          %v298 = vld [vmem:[%s202 + $0x1b0] sm:$0xff]
          %v299 = vld [vmem:[%s202 + $0x1b8] sm:$0xff]
          %v300 = vld [vmem:[%s202 + $0x1c0] sm:$0xff]
          %v301 = vld [vmem:[%s202 + $0x1c8] sm:$0xff]
          %v302 = vld [vmem:[%s202 + $0x1d0] sm:$0xff]
          %v303 = vld [vmem:[%s202 + $0x1d8] sm:$0xff]
          %v304 = vld [vmem:[%s202 + $0x1e0] sm:$0xff]
          %v305 = vld [vmem:[%s202 + $0x1e8] sm:$0xff]
          %v306 = vld [vmem:[%s202 + $0x1f0] sm:$0xff]
          %v307 = vld [vmem:[%s202 + $0x1f8] sm:$0xff]
          %308 = vxpose.xlu0.b32.start [1/16] %v244, 128
          %309 = vxpose.xlu0.b32.cont [2/16] %v246, 128
          %310 = vxpose.xlu0.b32.cont [3/16] %v248, 128
          %311 = vxpose.xlu0.b32.cont [4/16] %v250, 128
          %312 = vxpose.xlu0.b32.cont [5/16] %v252, 128
          %313 = vxpose.xlu0.b32.cont [6/16] %v254, 128
          %314 = vxpose.xlu0.b32.cont [7/16] %v256, 128
          %315 = vxpose.xlu0.b32.cont [8/16] %v258, 128
          %316 = vxpose.xlu0.b32.cont [9/16] %v260, 128
          %317 = vxpose.xlu0.b32.cont [10/16] %v262, 128
          %318 = vxpose.xlu0.b32.cont [11/16] %v264, 128
          %319 = vxpose.xlu0.b32.cont [12/16] %v266, 128
          %320 = vxpose.xlu0.b32.cont [13/16] %v268, 128
          %321 = vxpose.xlu0.b32.cont [14/16] %v270, 128
          %322 = vxpose.xlu0.b32.cont [15/16] %v272, 128
          %323 = vxpose.xlu0.b32.end [16/16] %v274, 128
          %v324 = vpop.trf.xlu0
          %v325 = vpop.trf.xlu0
          %v326 = vpop.trf.xlu0
          %v327 = vpop.trf.xlu0
          %v328 = vpop.trf.xlu0
          %v329 = vpop.trf.xlu0
          %v330 = vpop.trf.xlu0
          %v331 = vpop.trf.xlu0
          %v332 = vpop.trf.xlu0
          %v333 = vpop.trf.xlu0
          %v334 = vpop.trf.xlu0
          %v335 = vpop.trf.xlu0
          %v336 = vpop.trf.xlu0
          %v337 = vpop.trf.xlu0
          %v338 = vpop.trf.xlu0
          %v339 = vpop.trf.xlu0
          %340 = vxpose.xlu0.b32.start [1/16] %v245, 128
          %341 = vxpose.xlu0.b32.cont [2/16] %v247, 128
          %342 = vxpose.xlu0.b32.cont [3/16] %v249, 128
          %343 = vxpose.xlu0.b32.cont [4/16] %v251, 128
          %344 = vxpose.xlu0.b32.cont [5/16] %v253, 128
          %345 = vxpose.xlu0.b32.cont [6/16] %v255, 128
          %346 = vxpose.xlu0.b32.cont [7/16] %v257, 128
          %347 = vxpose.xlu0.b32.cont [8/16] %v259, 128
          %348 = vxpose.xlu0.b32.cont [9/16] %v261, 128
          %349 = vxpose.xlu0.b32.cont [10/16] %v263, 128
          %350 = vxpose.xlu0.b32.cont [11/16] %v265, 128
          %351 = vxpose.xlu0.b32.cont [12/16] %v267, 128
          %352 = vxpose.xlu0.b32.cont [13/16] %v269, 128
          %353 = vxpose.xlu0.b32.cont [14/16] %v271, 128
          %354 = vxpose.xlu0.b32.cont [15/16] %v273, 128
          %355 = vxpose.xlu0.b32.end [16/16] %v275, 128
          %v356 = vpop.trf.xlu0
          %v357 = vpop.trf.xlu0
          %v358 = vpop.trf.xlu0
          %v359 = vpop.trf.xlu0
          %v360 = vpop.trf.xlu0
          %v361 = vpop.trf.xlu0
          %v362 = vpop.trf.xlu0
          %v363 = vpop.trf.xlu0
          %v364 = vpop.trf.xlu0
          %v365 = vpop.trf.xlu0
          %v366 = vpop.trf.xlu0
          %v367 = vpop.trf.xlu0
          %v368 = vpop.trf.xlu0
          %v369 = vpop.trf.xlu0
          %v370 = vpop.trf.xlu0
          %v371 = vpop.trf.xlu0
          %372 = vxpose.xlu0.b32.start [1/16] %v276, 128
          %373 = vxpose.xlu0.b32.cont [2/16] %v278, 128
          %374 = vxpose.xlu0.b32.cont [3/16] %v280, 128
          %375 = vxpose.xlu0.b32.cont [4/16] %v282, 128
          %376 = vxpose.xlu0.b32.cont [5/16] %v284, 128
          %377 = vxpose.xlu0.b32.cont [6/16] %v286, 128
          %378 = vxpose.xlu0.b32.cont [7/16] %v288, 128
          %379 = vxpose.xlu0.b32.cont [8/16] %v290, 128
          %380 = vxpose.xlu0.b32.cont [9/16] %v292, 128
          %381 = vxpose.xlu0.b32.cont [10/16] %v294, 128
          %382 = vxpose.xlu0.b32.cont [11/16] %v296, 128
          %383 = vxpose.xlu0.b32.cont [12/16] %v298, 128
          %384 = vxpose.xlu0.b32.cont [13/16] %v300, 128
          %385 = vxpose.xlu0.b32.cont [14/16] %v302, 128
          %386 = vxpose.xlu0.b32.cont [15/16] %v304, 128
          %387 = vxpose.xlu0.b32.end [16/16] %v306, 128
          %v388 = vpop.trf.xlu0
          %v389 = vpop.trf.xlu0
          %v390 = vpop.trf.xlu0
          %v391 = vpop.trf.xlu0
          %v392 = vpop.trf.xlu0
          %v393 = vpop.trf.xlu0
          %v394 = vpop.trf.xlu0
          %v395 = vpop.trf.xlu0
          %v396 = vpop.trf.xlu0
          %v397 = vpop.trf.xlu0
          %v398 = vpop.trf.xlu0
          %v399 = vpop.trf.xlu0
          %v400 = vpop.trf.xlu0
          %v401 = vpop.trf.xlu0
          %v402 = vpop.trf.xlu0
          %v403 = vpop.trf.xlu0
          %404 = vxpose.xlu0.b32.start [1/16] %v277, 128
          %405 = vxpose.xlu0.b32.cont [2/16] %v279, 128
          %406 = vxpose.xlu0.b32.cont [3/16] %v281, 128
          %407 = vxpose.xlu0.b32.cont [4/16] %v283, 128
          %408 = vxpose.xlu0.b32.cont [5/16] %v285, 128
          %409 = vxpose.xlu0.b32.cont [6/16] %v287, 128
          %410 = vxpose.xlu0.b32.cont [7/16] %v289, 128
          %411 = vxpose.xlu0.b32.cont [8/16] %v291, 128
          %412 = vxpose.xlu0.b32.cont [9/16] %v293, 128
          %413 = vxpose.xlu0.b32.cont [10/16] %v295, 128
          %414 = vxpose.xlu0.b32.cont [11/16] %v297, 128
          %415 = vxpose.xlu0.b32.cont [12/16] %v299, 128
          %416 = vxpose.xlu0.b32.cont [13/16] %v301, 128
          %417 = vxpose.xlu0.b32.cont [14/16] %v303, 128
          %418 = vxpose.xlu0.b32.cont [15/16] %v305, 128
          %419 = vxpose.xlu0.b32.end [16/16] %v307, 128
          %v420 = vpop.trf.xlu0
          %v421 = vpop.trf.xlu0
          %v422 = vpop.trf.xlu0
          %v423 = vpop.trf.xlu0
          %v424 = vpop.trf.xlu0
          %v425 = vpop.trf.xlu0
          %v426 = vpop.trf.xlu0
          %v427 = vpop.trf.xlu0
          %v428 = vpop.trf.xlu0
          %v429 = vpop.trf.xlu0
          %v430 = vpop.trf.xlu0
          %v431 = vpop.trf.xlu0
          %v432 = vpop.trf.xlu0
          %v433 = vpop.trf.xlu0
          %v434 = vpop.trf.xlu0
          %v435 = vpop.trf.xlu0
          %436 = vst [vmem:[%s220] sm:$0xff] %v324
          %437 = vst [vmem:[%s220 + $0x8] sm:$0xff] %v388
          %438 = vst [vmem:[%s220 + $0x10] sm:$0xff] %v325
          %439 = vst [vmem:[%s220 + $0x18] sm:$0xff] %v389
          %440 = vst [vmem:[%s220 + $0x20] sm:$0xff] %v326
          %441 = vst [vmem:[%s220 + $0x28] sm:$0xff] %v390
          %442 = vst [vmem:[%s220 + $0x30] sm:$0xff] %v327
          %443 = vst [vmem:[%s220 + $0x38] sm:$0xff] %v391
          %444 = vst [vmem:[%s220 + $0x40] sm:$0xff] %v328
          %445 = vst [vmem:[%s220 + $0x48] sm:$0xff] %v392
          %446 = vst [vmem:[%s220 + $0x50] sm:$0xff] %v329
          %447 = vst [vmem:[%s220 + $0x58] sm:$0xff] %v393
          %448 = vst [vmem:[%s220 + $0x60] sm:$0xff] %v330
          %449 = vst [vmem:[%s220 + $0x68] sm:$0xff] %v394
          %450 = vst [vmem:[%s220 + $0x70] sm:$0xff] %v331
          %451 = vst [vmem:[%s220 + $0x78] sm:$0xff] %v395
          %452 = vst [vmem:[%s220 + $0x80] sm:$0xff] %v332
          %453 = vst [vmem:[%s220 + $0x88] sm:$0xff] %v396
          %454 = vst [vmem:[%s220 + $0x90] sm:$0xff] %v333
          %455 = vst [vmem:[%s220 + $0x98] sm:$0xff] %v397
          %456 = vst [vmem:[%s220 + $0xa0] sm:$0xff] %v334
          %457 = vst [vmem:[%s220 + $0xa8] sm:$0xff] %v398
          %458 = vst [vmem:[%s220 + $0xb0] sm:$0xff] %v335
          %459 = vst [vmem:[%s220 + $0xb8] sm:$0xff] %v399
          %460 = vst [vmem:[%s220 + $0xc0] sm:$0xff] %v336
          %461 = vst [vmem:[%s220 + $0xc8] sm:$0xff] %v400
          %462 = vst [vmem:[%s220 + $0xd0] sm:$0xff] %v337
          %463 = vst [vmem:[%s220 + $0xd8] sm:$0xff] %v401
          %464 = vst [vmem:[%s220 + $0xe0] sm:$0xff] %v338
          %465 = vst [vmem:[%s220 + $0xe8] sm:$0xff] %v402
          %466 = vst [vmem:[%s220 + $0xf0] sm:$0xff] %v339
          %467 = vst [vmem:[%s220 + $0xf8] sm:$0xff] %v403
          %468 = vst [vmem:[%s220 + $0x100] sm:$0xff] %v356
          %469 = vst [vmem:[%s220 + $0x108] sm:$0xff] %v420
          %470 = vst [vmem:[%s220 + $0x110] sm:$0xff] %v357
          %471 = vst [vmem:[%s220 + $0x118] sm:$0xff] %v421
          %472 = vst [vmem:[%s220 + $0x120] sm:$0xff] %v358
          %473 = vst [vmem:[%s220 + $0x128] sm:$0xff] %v422
          %474 = vst [vmem:[%s220 + $0x130] sm:$0xff] %v359
          %475 = vst [vmem:[%s220 + $0x138] sm:$0xff] %v423
          %476 = vst [vmem:[%s220 + $0x140] sm:$0xff] %v360
          %477 = vst [vmem:[%s220 + $0x148] sm:$0xff] %v424
          %478 = vst [vmem:[%s220 + $0x150] sm:$0xff] %v361
          %479 = vst [vmem:[%s220 + $0x158] sm:$0xff] %v425
          %480 = vst [vmem:[%s220 + $0x160] sm:$0xff] %v362
          %481 = vst [vmem:[%s220 + $0x168] sm:$0xff] %v426
          %482 = vst [vmem:[%s220 + $0x170] sm:$0xff] %v363
          %483 = vst [vmem:[%s220 + $0x178] sm:$0xff] %v427
          %484 = vst [vmem:[%s220 + $0x180] sm:$0xff] %v364
          %485 = vst [vmem:[%s220 + $0x188] sm:$0xff] %v428
          %486 = vst [vmem:[%s220 + $0x190] sm:$0xff] %v365
          %487 = vst [vmem:[%s220 + $0x198] sm:$0xff] %v429
          %488 = vst [vmem:[%s220 + $0x1a0] sm:$0xff] %v366
          %489 = vst [vmem:[%s220 + $0x1a8] sm:$0xff] %v430
          %490 = vst [vmem:[%s220 + $0x1b0] sm:$0xff] %v367
          %491 = vst [vmem:[%s220 + $0x1b8] sm:$0xff] %v431
          %492 = vst [vmem:[%s220 + $0x1c0] sm:$0xff] %v368
          %493 = vst [vmem:[%s220 + $0x1c8] sm:$0xff] %v432
          %494 = vst [vmem:[%s220 + $0x1d0] sm:$0xff] %v369
          %495 = vst [vmem:[%s220 + $0x1d8] sm:$0xff] %v433
          %496 = vst [vmem:[%s220 + $0x1e0] sm:$0xff] %v370
          %497 = vst [vmem:[%s220 + $0x1e8] sm:$0xff] %v434
          %498 = vst [vmem:[%s220 + $0x1f0] sm:$0xff] %v371
          %499 = vst [vmem:[%s220 + $0x1f8] sm:$0xff] %v435
        $region32: #{tpu_custom_call.1} parent=23 // pred_fallthru
          _
        %p500 = pneg %p240
        // Predicated region
        $region33: #{tpu_custom_call.1} parent=23 // pred_check
          _
        $region34: #{tpu_custom_call.1} parent=23 // pred_check_branch
          %502 = sbr.rel (%p240) target = $region36
        $region35: #{tpu_custom_call.1} parent=23 // pred_region
          %v503 = vld [vmem:[%s202] sm:$0xff]
          %v504 = vld [vmem:[%s202 + $0x8] sm:$0xff]
          %v505 = vld [vmem:[%s202 + $0x10] sm:$0xff]
          %v506 = vld [vmem:[%s202 + $0x18] sm:$0xff]
          %v507 = vld [vmem:[%s202 + $0x20] sm:$0xff]
          %v508 = vld [vmem:[%s202 + $0x28] sm:$0xff]
          %v509 = vld [vmem:[%s202 + $0x30] sm:$0xff]
          %v510 = vld [vmem:[%s202 + $0x38] sm:$0xff]
          %v511 = vld [vmem:[%s202 + $0x40] sm:$0xff]
          %v512 = vld [vmem:[%s202 + $0x48] sm:$0xff]
          %v513 = vld [vmem:[%s202 + $0x50] sm:$0xff]
          %v514 = vld [vmem:[%s202 + $0x58] sm:$0xff]
          %v515 = vld [vmem:[%s202 + $0x60] sm:$0xff]
          %v516 = vld [vmem:[%s202 + $0x68] sm:$0xff]
          %v517 = vld [vmem:[%s202 + $0x70] sm:$0xff]
          %v518 = vld [vmem:[%s202 + $0x78] sm:$0xff]
          %v519 = vld [vmem:[%s202 + $0x80] sm:$0xff]
          %v520 = vld [vmem:[%s202 + $0x88] sm:$0xff]
          %v521 = vld [vmem:[%s202 + $0x90] sm:$0xff]
          %v522 = vld [vmem:[%s202 + $0x98] sm:$0xff]
          %v523 = vld [vmem:[%s202 + $0xa0] sm:$0xff]
          %v524 = vld [vmem:[%s202 + $0xa8] sm:$0xff]
          %v525 = vld [vmem:[%s202 + $0xb0] sm:$0xff]
          %v526 = vld [vmem:[%s202 + $0xb8] sm:$0xff]
          %v527 = vld [vmem:[%s202 + $0xc0] sm:$0xff]
          %v528 = vld [vmem:[%s202 + $0xc8] sm:$0xff]
          %v529 = vld [vmem:[%s202 + $0xd0] sm:$0xff]
          %v530 = vld [vmem:[%s202 + $0xd8] sm:$0xff]
          %v531 = vld [vmem:[%s202 + $0xe0] sm:$0xff]
          %v532 = vld [vmem:[%s202 + $0xe8] sm:$0xff]
          %v533 = vld [vmem:[%s202 + $0xf0] sm:$0xff]
          %v534 = vld [vmem:[%s202 + $0xf8] sm:$0xff]
          %v535 = vld [vmem:[%s202 + $0x100] sm:$0xff]
          %v536 = vld [vmem:[%s202 + $0x108] sm:$0xff]
          %v537 = vld [vmem:[%s202 + $0x110] sm:$0xff]
          %v538 = vld [vmem:[%s202 + $0x118] sm:$0xff]
          %v539 = vld [vmem:[%s202 + $0x120] sm:$0xff]
          %v540 = vld [vmem:[%s202 + $0x128] sm:$0xff]
          %v541 = vld [vmem:[%s202 + $0x130] sm:$0xff]
          %v542 = vld [vmem:[%s202 + $0x138] sm:$0xff]
          %v543 = vld [vmem:[%s202 + $0x140] sm:$0xff]
          %v544 = vld [vmem:[%s202 + $0x148] sm:$0xff]
          %v545 = vld [vmem:[%s202 + $0x150] sm:$0xff]
          %v546 = vld [vmem:[%s202 + $0x158] sm:$0xff]
          %v547 = vld [vmem:[%s202 + $0x160] sm:$0xff]
          %v548 = vld [vmem:[%s202 + $0x168] sm:$0xff]
          %v549 = vld [vmem:[%s202 + $0x170] sm:$0xff]
          %v550 = vld [vmem:[%s202 + $0x178] sm:$0xff]
          %v551 = vld [vmem:[%s202 + $0x180] sm:$0xff]
          %v552 = vld [vmem:[%s202 + $0x188] sm:$0xff]
          %v553 = vld [vmem:[%s202 + $0x190] sm:$0xff]
          %v554 = vld [vmem:[%s202 + $0x198] sm:$0xff]
          %v555 = vld [vmem:[%s202 + $0x1a0] sm:$0xff]
          %v556 = vld [vmem:[%s202 + $0x1a8] sm:$0xff]
          %v557 = vld [vmem:[%s202 + $0x1b0] sm:$0xff]
          %v558 = vld [vmem:[%s202 + $0x1b8] sm:$0xff]
          %v559 = vld [vmem:[%s202 + $0x1c0] sm:$0xff]
          %v560 = vld [vmem:[%s202 + $0x1c8] sm:$0xff]
          %v561 = vld [vmem:[%s202 + $0x1d0] sm:$0xff]
          %v562 = vld [vmem:[%s202 + $0x1d8] sm:$0xff]
          %v563 = vld [vmem:[%s202 + $0x1e0] sm:$0xff]
          %v564 = vld [vmem:[%s202 + $0x1e8] sm:$0xff]
          %v565 = vld [vmem:[%s202 + $0x1f0] sm:$0xff]
          %v566 = vld [vmem:[%s202 + $0x1f8] sm:$0xff]
          %567 = vst [vmem:[%s220] sm:$0xff] %v503
          %568 = vst [vmem:[%s220 + $0x8] sm:$0xff] %v504
          %569 = vst [vmem:[%s220 + $0x10] sm:$0xff] %v505
          %570 = vst [vmem:[%s220 + $0x18] sm:$0xff] %v506
          %571 = vst [vmem:[%s220 + $0x20] sm:$0xff] %v507
          %572 = vst [vmem:[%s220 + $0x28] sm:$0xff] %v508
          %573 = vst [vmem:[%s220 + $0x30] sm:$0xff] %v509
          %574 = vst [vmem:[%s220 + $0x38] sm:$0xff] %v510
          %575 = vst [vmem:[%s220 + $0x40] sm:$0xff] %v511
          %576 = vst [vmem:[%s220 + $0x48] sm:$0xff] %v512
          %577 = vst [vmem:[%s220 + $0x50] sm:$0xff] %v513
          %578 = vst [vmem:[%s220 + $0x58] sm:$0xff] %v514
          %579 = vst [vmem:[%s220 + $0x60] sm:$0xff] %v515
          %580 = vst [vmem:[%s220 + $0x68] sm:$0xff] %v516
          %581 = vst [vmem:[%s220 + $0x70] sm:$0xff] %v517
          %582 = vst [vmem:[%s220 + $0x78] sm:$0xff] %v518
          %583 = vst [vmem:[%s220 + $0x80] sm:$0xff] %v519
          %584 = vst [vmem:[%s220 + $0x88] sm:$0xff] %v520
          %585 = vst [vmem:[%s220 + $0x90] sm:$0xff] %v521
          %586 = vst [vmem:[%s220 + $0x98] sm:$0xff] %v522
          %587 = vst [vmem:[%s220 + $0xa0] sm:$0xff] %v523
          %588 = vst [vmem:[%s220 + $0xa8] sm:$0xff] %v524
          %589 = vst [vmem:[%s220 + $0xb0] sm:$0xff] %v525
          %590 = vst [vmem:[%s220 + $0xb8] sm:$0xff] %v526
          %591 = vst [vmem:[%s220 + $0xc0] sm:$0xff] %v527
          %592 = vst [vmem:[%s220 + $0xc8] sm:$0xff] %v528
          %593 = vst [vmem:[%s220 + $0xd0] sm:$0xff] %v529
          %594 = vst [vmem:[%s220 + $0xd8] sm:$0xff] %v530
          %595 = vst [vmem:[%s220 + $0xe0] sm:$0xff] %v531
          %596 = vst [vmem:[%s220 + $0xe8] sm:$0xff] %v532
          %597 = vst [vmem:[%s220 + $0xf0] sm:$0xff] %v533
          %598 = vst [vmem:[%s220 + $0xf8] sm:$0xff] %v534
          %599 = vst [vmem:[%s220 + $0x100] sm:$0xff] %v535
          %600 = vst [vmem:[%s220 + $0x108] sm:$0xff] %v536
          %601 = vst [vmem:[%s220 + $0x110] sm:$0xff] %v537
          %602 = vst [vmem:[%s220 + $0x118] sm:$0xff] %v538
          %603 = vst [vmem:[%s220 + $0x120] sm:$0xff] %v539
          %604 = vst [vmem:[%s220 + $0x128] sm:$0xff] %v540
          %605 = vst [vmem:[%s220 + $0x130] sm:$0xff] %v541
          %606 = vst [vmem:[%s220 + $0x138] sm:$0xff] %v542
          %607 = vst [vmem:[%s220 + $0x140] sm:$0xff] %v543
          %608 = vst [vmem:[%s220 + $0x148] sm:$0xff] %v544
          %609 = vst [vmem:[%s220 + $0x150] sm:$0xff] %v545
          %610 = vst [vmem:[%s220 + $0x158] sm:$0xff] %v546
          %611 = vst [vmem:[%s220 + $0x160] sm:$0xff] %v547
          %612 = vst [vmem:[%s220 + $0x168] sm:$0xff] %v548
          %613 = vst [vmem:[%s220 + $0x170] sm:$0xff] %v549
          %614 = vst [vmem:[%s220 + $0x178] sm:$0xff] %v550
          %615 = vst [vmem:[%s220 + $0x180] sm:$0xff] %v551
          %616 = vst [vmem:[%s220 + $0x188] sm:$0xff] %v552
          %617 = vst [vmem:[%s220 + $0x190] sm:$0xff] %v553
          %618 = vst [vmem:[%s220 + $0x198] sm:$0xff] %v554
          %619 = vst [vmem:[%s220 + $0x1a0] sm:$0xff] %v555
          %620 = vst [vmem:[%s220 + $0x1a8] sm:$0xff] %v556
          %621 = vst [vmem:[%s220 + $0x1b0] sm:$0xff] %v557
          %622 = vst [vmem:[%s220 + $0x1b8] sm:$0xff] %v558
          %623 = vst [vmem:[%s220 + $0x1c0] sm:$0xff] %v559
          %624 = vst [vmem:[%s220 + $0x1c8] sm:$0xff] %v560
          %625 = vst [vmem:[%s220 + $0x1d0] sm:$0xff] %v561
          %626 = vst [vmem:[%s220 + $0x1d8] sm:$0xff] %v562
          %627 = vst [vmem:[%s220 + $0x1e0] sm:$0xff] %v563
          %628 = vst [vmem:[%s220 + $0x1e8] sm:$0xff] %v564
          %629 = vst [vmem:[%s220 + $0x1f0] sm:$0xff] %v565
          %630 = vst [vmem:[%s220 + $0x1f8] sm:$0xff] %v566
        $region36: #{tpu_custom_call.1} parent=23 // pred_fallthru
          _
        %p631 = scmp.ne.s32.totalorder %s237, 0
        // Predicated region
        $region37: #{tpu_custom_call.1} parent=23 // pred_check
          %p632 = pneg %p631
        $region38: #{tpu_custom_call.1} parent=23 // pred_check_branch
          %634 = sbr.rel (%p632) target = $region40
        $region39: #{tpu_custom_call.1} parent=23 // pred_region
          %v635 = vld [vmem:[%s220] sm:$0xff]
          %v636 = vld [vmem:[%s220 + $0x8] sm:$0xff]
          %v637 = vld [vmem:[%s220 + $0x10] sm:$0xff]
          %v638 = vld [vmem:[%s220 + $0x18] sm:$0xff]
          %v639 = vld [vmem:[%s220 + $0x20] sm:$0xff]
          %v640 = vld [vmem:[%s220 + $0x28] sm:$0xff]
          %v641 = vld [vmem:[%s220 + $0x30] sm:$0xff]
          %v642 = vld [vmem:[%s220 + $0x38] sm:$0xff]
          %v643 = vld [vmem:[%s220 + $0x40] sm:$0xff]
          %v644 = vld [vmem:[%s220 + $0x48] sm:$0xff]
          %v645 = vld [vmem:[%s220 + $0x50] sm:$0xff]
          %v646 = vld [vmem:[%s220 + $0x58] sm:$0xff]
          %v647 = vld [vmem:[%s220 + $0x60] sm:$0xff]
          %v648 = vld [vmem:[%s220 + $0x68] sm:$0xff]
          %v649 = vld [vmem:[%s220 + $0x70] sm:$0xff]
          %v650 = vld [vmem:[%s220 + $0x78] sm:$0xff]
          %v651 = vld [vmem:[%s220 + $0x80] sm:$0xff]
          %v652 = vld [vmem:[%s220 + $0x88] sm:$0xff]
          %v653 = vld [vmem:[%s220 + $0x90] sm:$0xff]
          %v654 = vld [vmem:[%s220 + $0x98] sm:$0xff]
          %v655 = vld [vmem:[%s220 + $0xa0] sm:$0xff]
          %v656 = vld [vmem:[%s220 + $0xa8] sm:$0xff]
          %v657 = vld [vmem:[%s220 + $0xb0] sm:$0xff]
          %v658 = vld [vmem:[%s220 + $0xb8] sm:$0xff]
          %v659 = vld [vmem:[%s220 + $0xc0] sm:$0xff]
          %v660 = vld [vmem:[%s220 + $0xc8] sm:$0xff]
          %v661 = vld [vmem:[%s220 + $0xd0] sm:$0xff]
          %v662 = vld [vmem:[%s220 + $0xd8] sm:$0xff]
          %v663 = vld [vmem:[%s220 + $0xe0] sm:$0xff]
          %v664 = vld [vmem:[%s220 + $0xe8] sm:$0xff]
          %v665 = vld [vmem:[%s220 + $0xf0] sm:$0xff]
          %v666 = vld [vmem:[%s220 + $0xf8] sm:$0xff]
          %v667 = vld [vmem:[%s220 + $0x100] sm:$0xff]
          %v668 = vld [vmem:[%s220 + $0x108] sm:$0xff]
          %v669 = vld [vmem:[%s220 + $0x110] sm:$0xff]
          %v670 = vld [vmem:[%s220 + $0x118] sm:$0xff]
          %v671 = vld [vmem:[%s220 + $0x120] sm:$0xff]
          %v672 = vld [vmem:[%s220 + $0x128] sm:$0xff]
          %v673 = vld [vmem:[%s220 + $0x130] sm:$0xff]
          %v674 = vld [vmem:[%s220 + $0x138] sm:$0xff]
          %v675 = vld [vmem:[%s220 + $0x140] sm:$0xff]
          %v676 = vld [vmem:[%s220 + $0x148] sm:$0xff]
          %v677 = vld [vmem:[%s220 + $0x150] sm:$0xff]
          %v678 = vld [vmem:[%s220 + $0x158] sm:$0xff]
          %v679 = vld [vmem:[%s220 + $0x160] sm:$0xff]
          %v680 = vld [vmem:[%s220 + $0x168] sm:$0xff]
          %v681 = vld [vmem:[%s220 + $0x170] sm:$0xff]
          %v682 = vld [vmem:[%s220 + $0x178] sm:$0xff]
          %v683 = vld [vmem:[%s220 + $0x180] sm:$0xff]
          %v684 = vld [vmem:[%s220 + $0x188] sm:$0xff]
          %v685 = vld [vmem:[%s220 + $0x190] sm:$0xff]
          %v686 = vld [vmem:[%s220 + $0x198] sm:$0xff]
          %v687 = vld [vmem:[%s220 + $0x1a0] sm:$0xff]
          %v688 = vld [vmem:[%s220 + $0x1a8] sm:$0xff]
          %v689 = vld [vmem:[%s220 + $0x1b0] sm:$0xff]
          %v690 = vld [vmem:[%s220 + $0x1b8] sm:$0xff]
          %v691 = vld [vmem:[%s220 + $0x1c0] sm:$0xff]
          %v692 = vld [vmem:[%s220 + $0x1c8] sm:$0xff]
          %v693 = vld [vmem:[%s220 + $0x1d0] sm:$0xff]
          %v694 = vld [vmem:[%s220 + $0x1d8] sm:$0xff]
          %v695 = vld [vmem:[%s220 + $0x1e0] sm:$0xff]
          %v696 = vld [vmem:[%s220 + $0x1e8] sm:$0xff]
          %v697 = vld [vmem:[%s220 + $0x1f0] sm:$0xff]
          %v698 = vld [vmem:[%s220 + $0x1f8] sm:$0xff]
          %v699 = vlaneseq
          %v700 = vshrl.u32 %v699, 7
          %v701 = vadd.s32 %v700, 8
          %v702 = vadd.s32 %v700, 16
          %v703 = vadd.s32 %v700, 24
          %v704 = vadd.s32 %v700, 32
          %v705 = vadd.s32 %v700, 40
          %v706 = vadd.s32 %v700, 48
          %v707 = vadd.s32 %v700, 56
          %v708 = vadd.s32 %v700, 64
          %v709 = vadd.s32 %v700, 72
          %v710 = vadd.s32 %v700, 80
          %v711 = vadd.s32 %v700, 88
          %v712 = vadd.s32 %v700, 96
          %v713 = vadd.s32 %v700, 104
          %v714 = vadd.s32 %v700, 112
          %v715 = vadd.s32 %v700, 120
          %v716 = vadd.s32 %v700, 128
          %v717 = vadd.s32 %v700, 136
          %v718 = vadd.s32 %v700, 144
          %v719 = vadd.s32 %v700, 152
          %v720 = vadd.s32 %v700, 160
          %v721 = vadd.s32 %v700, 168
          %v722 = vadd.s32 %v700, 176
          %v723 = vadd.s32 %v700, 184
          %v724 = vadd.s32 %v700, 192
          %v725 = vadd.s32 %v700, 200
          %v726 = vadd.s32 %v700, 208
          %v727 = vadd.s32 %v700, 216
          %v728 = vadd.s32 %v700, 224
          %v729 = vadd.s32 %v700, 232
          %v730 = vadd.s32 %v700, 240
          %v731 = vadd.s32 %v700, 248
          %v732 = vrot.slane %v697, 4
          %v733 = vrot.slane %v698, 4
          %v734 = vrot.slane %v695, 4
          %v735 = vrot.slane %v696, 4
          %v736 = vrot.slane %v693, 4
          %v737 = vrot.slane %v694, 4
          %v738 = vrot.slane %v691, 4
          %v739 = vrot.slane %v692, 4
          %v740 = vrot.slane %v689, 4
          %v741 = vrot.slane %v690, 4
          %v742 = vrot.slane %v687, 4
          %v743 = vrot.slane %v688, 4
          %v744 = vrot.slane %v685, 4
          %v745 = vrot.slane %v686, 4
          %v746 = vrot.slane %v683, 4
          %v747 = vrot.slane %v684, 4
          %v748 = vrot.slane %v681, 4
          %v749 = vrot.slane %v682, 4
          %v750 = vrot.slane %v679, 4
          %v751 = vrot.slane %v680, 4
          %v752 = vrot.slane %v677, 4
          %v753 = vrot.slane %v678, 4
          %v754 = vrot.slane %v675, 4
          %v755 = vrot.slane %v676, 4
          %v756 = vrot.slane %v673, 4
          %v757 = vrot.slane %v674, 4
          %v758 = vrot.slane %v671, 4
          %v759 = vrot.slane %v672, 4
          %v760 = vrot.slane %v669, 4
          %v761 = vrot.slane %v670, 4
          %v762 = vrot.slane %v667, 4
          %v763 = vrot.slane %v668, 4
          %v764 = vrot.slane %v665, 4
          %v765 = vrot.slane %v666, 4
          %v766 = vrot.slane %v663, 4
          %v767 = vrot.slane %v664, 4
          %v768 = vrot.slane %v661, 4
          %v769 = vrot.slane %v662, 4
          %v770 = vrot.slane %v659, 4
          %v771 = vrot.slane %v660, 4
          %v772 = vrot.slane %v657, 4
          %v773 = vrot.slane %v658, 4
          %v774 = vrot.slane %v655, 4
          %v775 = vrot.slane %v656, 4
          %v776 = vrot.slane %v653, 4
          %v777 = vrot.slane %v654, 4
          %v778 = vrot.slane %v651, 4
          %v779 = vrot.slane %v652, 4
          %v780 = vrot.slane %v649, 4
          %v781 = vrot.slane %v650, 4
          %v782 = vrot.slane %v647, 4
          %v783 = vrot.slane %v648, 4
          %v784 = vrot.slane %v645, 4
          %v785 = vrot.slane %v646, 4
          %v786 = vrot.slane %v643, 4
          %v787 = vrot.slane %v644, 4
          %v788 = vrot.slane %v641, 4
          %v789 = vrot.slane %v642, 4
          %v790 = vrot.slane %v639, 4
          %v791 = vrot.slane %v640, 4
          %v792 = vrot.slane %v637, 4
          %v793 = vrot.slane %v638, 4
          %v794 = vrot.slane %v635, 4
          %v795 = vrot.slane %v636, 4
          %vm796 = vcmp.lt.s32.totalorder %v700, 4
          %v797 = vsel %vm796, %v792, %v794
          %v798 = vsel %vm796, %v793, %v795
          %v799 = vsel %vm796, %v790, %v792
          %v800 = vsel %vm796, %v791, %v793
          %v801 = vsel %vm796, %v788, %v790
          %v802 = vsel %vm796, %v789, %v791
          %v803 = vsel %vm796, %v786, %v788
          %v804 = vsel %vm796, %v787, %v789
          %v805 = vsel %vm796, %v784, %v786
          %v806 = vsel %vm796, %v785, %v787
          %v807 = vsel %vm796, %v782, %v784
          %v808 = vsel %vm796, %v783, %v785
          %v809 = vsel %vm796, %v780, %v782
          %v810 = vsel %vm796, %v781, %v783
          %v811 = vsel %vm796, %v778, %v780
          %v812 = vsel %vm796, %v779, %v781
          %v813 = vsel %vm796, %v776, %v778
          %v814 = vsel %vm796, %v777, %v779
          %v815 = vsel %vm796, %v774, %v776
          %v816 = vsel %vm796, %v775, %v777
          %v817 = vsel %vm796, %v772, %v774
          %v818 = vsel %vm796, %v773, %v775
          %v819 = vsel %vm796, %v770, %v772
          %v820 = vsel %vm796, %v771, %v773
          %v821 = vsel %vm796, %v768, %v770
          %v822 = vsel %vm796, %v769, %v771
          %v823 = vsel %vm796, %v766, %v768
          %v824 = vsel %vm796, %v767, %v769
          %v825 = vsel %vm796, %v764, %v766
          %v826 = vsel %vm796, %v765, %v767
          %v827 = vsel %vm796, %v762, %v764
          %v828 = vsel %vm796, %v763, %v765
          %v829 = vsel %vm796, %v760, %v762
          %v830 = vsel %vm796, %v761, %v763
          %v831 = vsel %vm796, %v758, %v760
          %v832 = vsel %vm796, %v759, %v761
          %v833 = vsel %vm796, %v756, %v758
          %v834 = vsel %vm796, %v757, %v759
          %v835 = vsel %vm796, %v754, %v756
          %v836 = vsel %vm796, %v755, %v757
          %v837 = vsel %vm796, %v752, %v754
          %v838 = vsel %vm796, %v753, %v755
          %v839 = vsel %vm796, %v750, %v752
          %v840 = vsel %vm796, %v751, %v753
          %v841 = vsel %vm796, %v748, %v750
          %v842 = vsel %vm796, %v749, %v751
          %v843 = vsel %vm796, %v746, %v748
          %v844 = vsel %vm796, %v747, %v749
          %v845 = vsel %vm796, %v744, %v746
          %v846 = vsel %vm796, %v745, %v747
          %v847 = vsel %vm796, %v742, %v744
          %v848 = vsel %vm796, %v743, %v745
          %v849 = vsel %vm796, %v740, %v742
          %v850 = vsel %vm796, %v741, %v743
          %v851 = vsel %vm796, %v738, %v740
          %v852 = vsel %vm796, %v739, %v741
          %v853 = vsel %vm796, %v736, %v738
          %v854 = vsel %vm796, %v737, %v739
          %v855 = vsel %vm796, %v734, %v736
          %v856 = vsel %vm796, %v735, %v737
          %v857 = vsel %vm796, %v732, %v734
          %v858 = vsel %vm796, %v733, %v735
          %v859 = vsel %vm796, %v794, %v732
          %v860 = vsel %vm796, %v795, %v733
          %v861 = vand.u32 %v700, 4
          %v862 = vand.u32 %v701, 4
          %v863 = vand.u32 %v702, 4
          %v864 = vand.u32 %v703, 4
          %v865 = vand.u32 %v704, 4
          %v866 = vand.u32 %v705, 4
          %v867 = vand.u32 %v706, 4
          %v868 = vand.u32 %v707, 4
          %v869 = vand.u32 %v708, 4
          %v870 = vand.u32 %v709, 4
          %v871 = vand.u32 %v710, 4
          %v872 = vand.u32 %v711, 4
          %v873 = vand.u32 %v712, 4
          %v874 = vand.u32 %v713, 4
          %v875 = vand.u32 %v714, 4
          %v876 = vand.u32 %v715, 4
          %v877 = vand.u32 %v716, 4
          %v878 = vand.u32 %v717, 4
          %v879 = vand.u32 %v718, 4
          %v880 = vand.u32 %v719, 4
          %v881 = vand.u32 %v720, 4
          %v882 = vand.u32 %v721, 4
          %v883 = vand.u32 %v722, 4
          %v884 = vand.u32 %v723, 4
          %v885 = vand.u32 %v724, 4
          %v886 = vand.u32 %v725, 4
          %v887 = vand.u32 %v726, 4
          %v888 = vand.u32 %v727, 4
          %v889 = vand.u32 %v728, 4
          %v890 = vand.u32 %v729, 4
          %v891 = vand.u32 %v730, 4
          %v892 = vand.u32 %v731, 4
          %vm893 = vcmp.eq.s32.totalorder %v861, 0
          %vm894 = vcmp.eq.s32.totalorder %v862, 0
          %vm895 = vcmp.eq.s32.totalorder %v863, 0
          %vm896 = vcmp.eq.s32.totalorder %v864, 0
          %vm897 = vcmp.eq.s32.totalorder %v865, 0
          %vm898 = vcmp.eq.s32.totalorder %v866, 0
          %vm899 = vcmp.eq.s32.totalorder %v867, 0
          %vm900 = vcmp.eq.s32.totalorder %v868, 0
          %vm901 = vcmp.eq.s32.totalorder %v869, 0
          %vm902 = vcmp.eq.s32.totalorder %v870, 0
          %vm903 = vcmp.eq.s32.totalorder %v871, 0
          %vm904 = vcmp.eq.s32.totalorder %v872, 0
          %vm905 = vcmp.eq.s32.totalorder %v873, 0
          %vm906 = vcmp.eq.s32.totalorder %v874, 0
          %vm907 = vcmp.eq.s32.totalorder %v875, 0
          %vm908 = vcmp.eq.s32.totalorder %v876, 0
          %vm909 = vcmp.eq.s32.totalorder %v877, 0
          %vm910 = vcmp.eq.s32.totalorder %v878, 0
          %vm911 = vcmp.eq.s32.totalorder %v879, 0
          %vm912 = vcmp.eq.s32.totalorder %v880, 0
          %vm913 = vcmp.eq.s32.totalorder %v881, 0
          %vm914 = vcmp.eq.s32.totalorder %v882, 0
          %vm915 = vcmp.eq.s32.totalorder %v883, 0
          %vm916 = vcmp.eq.s32.totalorder %v884, 0
          %vm917 = vcmp.eq.s32.totalorder %v885, 0
          %vm918 = vcmp.eq.s32.totalorder %v886, 0
          %vm919 = vcmp.eq.s32.totalorder %v887, 0
          %vm920 = vcmp.eq.s32.totalorder %v888, 0
          %vm921 = vcmp.eq.s32.totalorder %v889, 0
          %vm922 = vcmp.eq.s32.totalorder %v890, 0
          %vm923 = vcmp.eq.s32.totalorder %v891, 0
          %vm924 = vcmp.eq.s32.totalorder %v892, 0
          %v925 = vsel %vm893, %v857, %v859
          %v926 = vsel %vm893, %v858, %v860
          %v927 = vsel %vm894, %v855, %v857
          %v928 = vsel %vm894, %v856, %v858
          %v929 = vsel %vm895, %v853, %v855
          %v930 = vsel %vm895, %v854, %v856
          %v931 = vsel %vm896, %v851, %v853
          %v932 = vsel %vm896, %v852, %v854
          %v933 = vsel %vm897, %v849, %v851
          %v934 = vsel %vm897, %v850, %v852
          %v935 = vsel %vm898, %v847, %v849
          %v936 = vsel %vm898, %v848, %v850
          %v937 = vsel %vm899, %v845, %v847
          %v938 = vsel %vm899, %v846, %v848
          %v939 = vsel %vm900, %v843, %v845
          %v940 = vsel %vm900, %v844, %v846
          %v941 = vsel %vm901, %v841, %v843
          %v942 = vsel %vm901, %v842, %v844
          %v943 = vsel %vm902, %v839, %v841
          %v944 = vsel %vm902, %v840, %v842
          %v945 = vsel %vm903, %v837, %v839
          %v946 = vsel %vm903, %v838, %v840
          %v947 = vsel %vm904, %v835, %v837
          %v948 = vsel %vm904, %v836, %v838
          %v949 = vsel %vm905, %v833, %v835
          %v950 = vsel %vm905, %v834, %v836
          %v951 = vsel %vm906, %v831, %v833
          %v952 = vsel %vm906, %v832, %v834
          %v953 = vsel %vm907, %v829, %v831
          %v954 = vsel %vm907, %v830, %v832
          %v955 = vsel %vm908, %v827, %v829
          %v956 = vsel %vm908, %v828, %v830
          %v957 = vsel %vm909, %v825, %v827
          %v958 = vsel %vm909, %v826, %v828
          %v959 = vsel %vm910, %v823, %v825
          %v960 = vsel %vm910, %v824, %v826
          %v961 = vsel %vm911, %v821, %v823
          %v962 = vsel %vm911, %v822, %v824
          %v963 = vsel %vm912, %v819, %v821
          %v964 = vsel %vm912, %v820, %v822
          %v965 = vsel %vm913, %v817, %v819
          %v966 = vsel %vm913, %v818, %v820
          %v967 = vsel %vm914, %v815, %v817
          %v968 = vsel %vm914, %v816, %v818
          %v969 = vsel %vm915, %v813, %v815
          %v970 = vsel %vm915, %v814, %v816
          %v971 = vsel %vm916, %v811, %v813
          %v972 = vsel %vm916, %v812, %v814
          %v973 = vsel %vm917, %v809, %v811
          %v974 = vsel %vm917, %v810, %v812
          %v975 = vsel %vm918, %v807, %v809
          %v976 = vsel %vm918, %v808, %v810
          %v977 = vsel %vm919, %v805, %v807
          %v978 = vsel %vm919, %v806, %v808
          %v979 = vsel %vm920, %v803, %v805
          %v980 = vsel %vm920, %v804, %v806
          %v981 = vsel %vm921, %v801, %v803
          %v982 = vsel %vm921, %v802, %v804
          %v983 = vsel %vm922, %v799, %v801
          %v984 = vsel %vm922, %v800, %v802
          %v985 = vsel %vm923, %v797, %v799
          %v986 = vsel %vm923, %v798, %v800
          %v987 = vsel %vm924, %v859, %v797
          %v988 = vsel %vm924, %v860, %v798
          %v989 = vrot.slane %v925, 2
          %v990 = vrot.slane %v926, 2
          %v991 = vrot.slane %v927, 2
          %v992 = vrot.slane %v928, 2
          %v993 = vrot.slane %v929, 2
          %v994 = vrot.slane %v930, 2
          %v995 = vrot.slane %v931, 2
          %v996 = vrot.slane %v932, 2
          %v997 = vrot.slane %v933, 2
          %v998 = vrot.slane %v934, 2
          %v999 = vrot.slane %v935, 2
          %v1000 = vrot.slane %v936, 2
          %v1001 = vrot.slane %v937, 2
          %v1002 = vrot.slane %v938, 2
          %v1003 = vrot.slane %v939, 2
          %v1004 = vrot.slane %v940, 2
          %v1005 = vrot.slane %v941, 2
          %v1006 = vrot.slane %v942, 2
          %v1007 = vrot.slane %v943, 2
          %v1008 = vrot.slane %v944, 2
          %v1009 = vrot.slane %v945, 2
          %v1010 = vrot.slane %v946, 2
          %v1011 = vrot.slane %v947, 2
          %v1012 = vrot.slane %v948, 2
          %v1013 = vrot.slane %v949, 2
          %v1014 = vrot.slane %v950, 2
          %v1015 = vrot.slane %v951, 2
          %v1016 = vrot.slane %v952, 2
          %v1017 = vrot.slane %v953, 2
          %v1018 = vrot.slane %v954, 2
          %v1019 = vrot.slane %v955, 2
          %v1020 = vrot.slane %v956, 2
          %v1021 = vrot.slane %v957, 2
          %v1022 = vrot.slane %v958, 2
          %v1023 = vrot.slane %v959, 2
          %v1024 = vrot.slane %v960, 2
          %v1025 = vrot.slane %v961, 2
          %v1026 = vrot.slane %v962, 2
          %v1027 = vrot.slane %v963, 2
          %v1028 = vrot.slane %v964, 2
          %v1029 = vrot.slane %v965, 2
          %v1030 = vrot.slane %v966, 2
          %v1031 = vrot.slane %v967, 2
          %v1032 = vrot.slane %v968, 2
          %v1033 = vrot.slane %v969, 2
          %v1034 = vrot.slane %v970, 2
          %v1035 = vrot.slane %v971, 2
          %v1036 = vrot.slane %v972, 2
          %v1037 = vrot.slane %v973, 2
          %v1038 = vrot.slane %v974, 2
          %v1039 = vrot.slane %v975, 2
          %v1040 = vrot.slane %v976, 2
          %v1041 = vrot.slane %v977, 2
          %v1042 = vrot.slane %v978, 2
          %v1043 = vrot.slane %v979, 2
          %v1044 = vrot.slane %v980, 2
          %v1045 = vrot.slane %v981, 2
          %v1046 = vrot.slane %v982, 2
          %v1047 = vrot.slane %v983, 2
          %v1048 = vrot.slane %v984, 2
          %v1049 = vrot.slane %v985, 2
          %v1050 = vrot.slane %v986, 2
          %v1051 = vrot.slane %v987, 2
          %v1052 = vrot.slane %v988, 2
          %vm1053 = vcmp.lt.s32.totalorder %v700, 6
          %v1054 = vsel %vm1053, %v1049, %v1051
          %v1055 = vsel %vm1053, %v1050, %v1052
          %v1056 = vsel %vm1053, %v1047, %v1049
          %v1057 = vsel %vm1053, %v1048, %v1050
          %v1058 = vsel %vm1053, %v1045, %v1047
          %v1059 = vsel %vm1053, %v1046, %v1048
          %v1060 = vsel %vm1053, %v1043, %v1045
          %v1061 = vsel %vm1053, %v1044, %v1046
          %v1062 = vsel %vm1053, %v1041, %v1043
          %v1063 = vsel %vm1053, %v1042, %v1044
          %v1064 = vsel %vm1053, %v1039, %v1041
          %v1065 = vsel %vm1053, %v1040, %v1042
          %v1066 = vsel %vm1053, %v1037, %v1039
          %v1067 = vsel %vm1053, %v1038, %v1040
          %v1068 = vsel %vm1053, %v1035, %v1037
          %v1069 = vsel %vm1053, %v1036, %v1038
          %v1070 = vsel %vm1053, %v1033, %v1035
          %v1071 = vsel %vm1053, %v1034, %v1036
          %v1072 = vsel %vm1053, %v1031, %v1033
          %v1073 = vsel %vm1053, %v1032, %v1034
          %v1074 = vsel %vm1053, %v1029, %v1031
          %v1075 = vsel %vm1053, %v1030, %v1032
          %v1076 = vsel %vm1053, %v1027, %v1029
          %v1077 = vsel %vm1053, %v1028, %v1030
          %v1078 = vsel %vm1053, %v1025, %v1027
          %v1079 = vsel %vm1053, %v1026, %v1028
          %v1080 = vsel %vm1053, %v1023, %v1025
          %v1081 = vsel %vm1053, %v1024, %v1026
          %v1082 = vsel %vm1053, %v1021, %v1023
          %v1083 = vsel %vm1053, %v1022, %v1024
          %v1084 = vsel %vm1053, %v1019, %v1021
          %v1085 = vsel %vm1053, %v1020, %v1022
          %v1086 = vsel %vm1053, %v1017, %v1019
          %v1087 = vsel %vm1053, %v1018, %v1020
          %v1088 = vsel %vm1053, %v1015, %v1017
          %v1089 = vsel %vm1053, %v1016, %v1018
          %v1090 = vsel %vm1053, %v1013, %v1015
          %v1091 = vsel %vm1053, %v1014, %v1016
          %v1092 = vsel %vm1053, %v1011, %v1013
          %v1093 = vsel %vm1053, %v1012, %v1014
          %v1094 = vsel %vm1053, %v1009, %v1011
          %v1095 = vsel %vm1053, %v1010, %v1012
          %v1096 = vsel %vm1053, %v1007, %v1009
          %v1097 = vsel %vm1053, %v1008, %v1010
          %v1098 = vsel %vm1053, %v1005, %v1007
          %v1099 = vsel %vm1053, %v1006, %v1008
          %v1100 = vsel %vm1053, %v1003, %v1005
          %v1101 = vsel %vm1053, %v1004, %v1006
          %v1102 = vsel %vm1053, %v1001, %v1003
          %v1103 = vsel %vm1053, %v1002, %v1004
          %v1104 = vsel %vm1053, %v999, %v1001
          %v1105 = vsel %vm1053, %v1000, %v1002
          %v1106 = vsel %vm1053, %v997, %v999
          %v1107 = vsel %vm1053, %v998, %v1000
          %v1108 = vsel %vm1053, %v995, %v997
          %v1109 = vsel %vm1053, %v996, %v998
          %v1110 = vsel %vm1053, %v993, %v995
          %v1111 = vsel %vm1053, %v994, %v996
          %v1112 = vsel %vm1053, %v991, %v993
          %v1113 = vsel %vm1053, %v992, %v994
          %v1114 = vsel %vm1053, %v989, %v991
          %v1115 = vsel %vm1053, %v990, %v992
          %v1116 = vsel %vm1053, %v1051, %v989
          %v1117 = vsel %vm1053, %v1052, %v990
          %v1118 = vrot.slane %v925, 6
          %v1119 = vrot.slane %v926, 6
          %v1120 = vrot.slane %v927, 6
          %v1121 = vrot.slane %v928, 6
          %v1122 = vrot.slane %v929, 6
          %v1123 = vrot.slane %v930, 6
          %v1124 = vrot.slane %v931, 6
          %v1125 = vrot.slane %v932, 6
          %v1126 = vrot.slane %v933, 6
          %v1127 = vrot.slane %v934, 6
          %v1128 = vrot.slane %v935, 6
          %v1129 = vrot.slane %v936, 6
          %v1130 = vrot.slane %v937, 6
          %v1131 = vrot.slane %v938, 6
          %v1132 = vrot.slane %v939, 6
          %v1133 = vrot.slane %v940, 6
          %v1134 = vrot.slane %v941, 6
          %v1135 = vrot.slane %v942, 6
          %v1136 = vrot.slane %v943, 6
          %v1137 = vrot.slane %v944, 6
          %v1138 = vrot.slane %v945, 6
          %v1139 = vrot.slane %v946, 6
          %v1140 = vrot.slane %v947, 6
          %v1141 = vrot.slane %v948, 6
          %v1142 = vrot.slane %v949, 6
          %v1143 = vrot.slane %v950, 6
          %v1144 = vrot.slane %v951, 6
          %v1145 = vrot.slane %v952, 6
          %v1146 = vrot.slane %v953, 6
          %v1147 = vrot.slane %v954, 6
          %v1148 = vrot.slane %v955, 6
          %v1149 = vrot.slane %v956, 6
          %v1150 = vrot.slane %v957, 6
          %v1151 = vrot.slane %v958, 6
          %v1152 = vrot.slane %v959, 6
          %v1153 = vrot.slane %v960, 6
          %v1154 = vrot.slane %v961, 6
          %v1155 = vrot.slane %v962, 6
          %v1156 = vrot.slane %v963, 6
          %v1157 = vrot.slane %v964, 6
          %v1158 = vrot.slane %v965, 6
          %v1159 = vrot.slane %v966, 6
          %v1160 = vrot.slane %v967, 6
          %v1161 = vrot.slane %v968, 6
          %v1162 = vrot.slane %v969, 6
          %v1163 = vrot.slane %v970, 6
          %v1164 = vrot.slane %v971, 6
          %v1165 = vrot.slane %v972, 6
          %v1166 = vrot.slane %v973, 6
          %v1167 = vrot.slane %v974, 6
          %v1168 = vrot.slane %v975, 6
          %v1169 = vrot.slane %v976, 6
          %v1170 = vrot.slane %v977, 6
          %v1171 = vrot.slane %v978, 6
          %v1172 = vrot.slane %v979, 6
          %v1173 = vrot.slane %v980, 6
          %v1174 = vrot.slane %v981, 6
          %v1175 = vrot.slane %v982, 6
          %v1176 = vrot.slane %v983, 6
          %v1177 = vrot.slane %v984, 6
          %v1178 = vrot.slane %v985, 6
          %v1179 = vrot.slane %v986, 6
          %v1180 = vrot.slane %v987, 6
          %v1181 = vrot.slane %v988, 6
          %vm1182 = vcmp.lt.s32.totalorder %v700, 2
          %v1183 = vsel %vm1182, %v1178, %v1180
          %v1184 = vsel %vm1182, %v1179, %v1181
          %v1185 = vsel %vm1182, %v1176, %v1178
          %v1186 = vsel %vm1182, %v1177, %v1179
          %v1187 = vsel %vm1182, %v1174, %v1176
          %v1188 = vsel %vm1182, %v1175, %v1177
          %v1189 = vsel %vm1182, %v1172, %v1174
          %v1190 = vsel %vm1182, %v1173, %v1175
          %v1191 = vsel %vm1182, %v1170, %v1172
          %v1192 = vsel %vm1182, %v1171, %v1173
          %v1193 = vsel %vm1182, %v1168, %v1170
          %v1194 = vsel %vm1182, %v1169, %v1171
          %v1195 = vsel %vm1182, %v1166, %v1168
          %v1196 = vsel %vm1182, %v1167, %v1169
          %v1197 = vsel %vm1182, %v1164, %v1166
          %v1198 = vsel %vm1182, %v1165, %v1167
          %v1199 = vsel %vm1182, %v1162, %v1164
          %v1200 = vsel %vm1182, %v1163, %v1165
          %v1201 = vsel %vm1182, %v1160, %v1162
          %v1202 = vsel %vm1182, %v1161, %v1163
          %v1203 = vsel %vm1182, %v1158, %v1160
          %v1204 = vsel %vm1182, %v1159, %v1161
          %v1205 = vsel %vm1182, %v1156, %v1158
          %v1206 = vsel %vm1182, %v1157, %v1159
          %v1207 = vsel %vm1182, %v1154, %v1156
          %v1208 = vsel %vm1182, %v1155, %v1157
          %v1209 = vsel %vm1182, %v1152, %v1154
          %v1210 = vsel %vm1182, %v1153, %v1155
          %v1211 = vsel %vm1182, %v1150, %v1152
          %v1212 = vsel %vm1182, %v1151, %v1153
          %v1213 = vsel %vm1182, %v1148, %v1150
          %v1214 = vsel %vm1182, %v1149, %v1151
          %v1215 = vsel %vm1182, %v1146, %v1148
          %v1216 = vsel %vm1182, %v1147, %v1149
          %v1217 = vsel %vm1182, %v1144, %v1146
          %v1218 = vsel %vm1182, %v1145, %v1147
          %v1219 = vsel %vm1182, %v1142, %v1144
          %v1220 = vsel %vm1182, %v1143, %v1145
          %v1221 = vsel %vm1182, %v1140, %v1142
          %v1222 = vsel %vm1182, %v1141, %v1143
          %v1223 = vsel %vm1182, %v1138, %v1140
          %v1224 = vsel %vm1182, %v1139, %v1141
          %v1225 = vsel %vm1182, %v1136, %v1138
          %v1226 = vsel %vm1182, %v1137, %v1139
          %v1227 = vsel %vm1182, %v1134, %v1136
          %v1228 = vsel %vm1182, %v1135, %v1137
          %v1229 = vsel %vm1182, %v1132, %v1134
          %v1230 = vsel %vm1182, %v1133, %v1135
          %v1231 = vsel %vm1182, %v1130, %v1132
          %v1232 = vsel %vm1182, %v1131, %v1133
          %v1233 = vsel %vm1182, %v1128, %v1130
          %v1234 = vsel %vm1182, %v1129, %v1131
          %v1235 = vsel %vm1182, %v1126, %v1128
          %v1236 = vsel %vm1182, %v1127, %v1129
          %v1237 = vsel %vm1182, %v1124, %v1126
          %v1238 = vsel %vm1182, %v1125, %v1127
          %v1239 = vsel %vm1182, %v1122, %v1124
          %v1240 = vsel %vm1182, %v1123, %v1125
          %v1241 = vsel %vm1182, %v1120, %v1122
          %v1242 = vsel %vm1182, %v1121, %v1123
          %v1243 = vsel %vm1182, %v1118, %v1120
          %v1244 = vsel %vm1182, %v1119, %v1121
          %v1245 = vsel %vm1182, %v1180, %v1118
          %v1246 = vsel %vm1182, %v1181, %v1119
          %v1247 = vand.u32 %v700, 2
          %v1248 = vand.u32 %v701, 2
          %v1249 = vand.u32 %v702, 2
          %v1250 = vand.u32 %v703, 2
          %v1251 = vand.u32 %v704, 2
          %v1252 = vand.u32 %v705, 2
          %v1253 = vand.u32 %v706, 2
          %v1254 = vand.u32 %v707, 2
          %v1255 = vand.u32 %v708, 2
          %v1256 = vand.u32 %v709, 2
          %v1257 = vand.u32 %v710, 2
          %v1258 = vand.u32 %v711, 2
          %v1259 = vand.u32 %v712, 2
          %v1260 = vand.u32 %v713, 2
          %v1261 = vand.u32 %v714, 2
          %v1262 = vand.u32 %v715, 2
          %v1263 = vand.u32 %v716, 2
          %v1264 = vand.u32 %v717, 2
          %v1265 = vand.u32 %v718, 2
          %v1266 = vand.u32 %v719, 2
          %v1267 = vand.u32 %v720, 2
          %v1268 = vand.u32 %v721, 2
          %v1269 = vand.u32 %v722, 2
          %v1270 = vand.u32 %v723, 2
          %v1271 = vand.u32 %v724, 2
          %v1272 = vand.u32 %v725, 2
          %v1273 = vand.u32 %v726, 2
          %v1274 = vand.u32 %v727, 2
          %v1275 = vand.u32 %v728, 2
          %v1276 = vand.u32 %v729, 2
          %v1277 = vand.u32 %v730, 2
          %v1278 = vand.u32 %v731, 2
          %vm1279 = vcmp.eq.s32.totalorder %v1247, 0
          %vm1280 = vcmp.eq.s32.totalorder %v1248, 0
          %vm1281 = vcmp.eq.s32.totalorder %v1249, 0
          %vm1282 = vcmp.eq.s32.totalorder %v1250, 0
          %vm1283 = vcmp.eq.s32.totalorder %v1251, 0
          %vm1284 = vcmp.eq.s32.totalorder %v1252, 0
          %vm1285 = vcmp.eq.s32.totalorder %v1253, 0
          %vm1286 = vcmp.eq.s32.totalorder %v1254, 0
          %vm1287 = vcmp.eq.s32.totalorder %v1255, 0
          %vm1288 = vcmp.eq.s32.totalorder %v1256, 0
          %vm1289 = vcmp.eq.s32.totalorder %v1257, 0
          %vm1290 = vcmp.eq.s32.totalorder %v1258, 0
          %vm1291 = vcmp.eq.s32.totalorder %v1259, 0
          %vm1292 = vcmp.eq.s32.totalorder %v1260, 0
          %vm1293 = vcmp.eq.s32.totalorder %v1261, 0
          %vm1294 = vcmp.eq.s32.totalorder %v1262, 0
          %vm1295 = vcmp.eq.s32.totalorder %v1263, 0
          %vm1296 = vcmp.eq.s32.totalorder %v1264, 0
          %vm1297 = vcmp.eq.s32.totalorder %v1265, 0
          %vm1298 = vcmp.eq.s32.totalorder %v1266, 0
          %vm1299 = vcmp.eq.s32.totalorder %v1267, 0
          %vm1300 = vcmp.eq.s32.totalorder %v1268, 0
          %vm1301 = vcmp.eq.s32.totalorder %v1269, 0
          %vm1302 = vcmp.eq.s32.totalorder %v1270, 0
          %vm1303 = vcmp.eq.s32.totalorder %v1271, 0
          %vm1304 = vcmp.eq.s32.totalorder %v1272, 0
          %vm1305 = vcmp.eq.s32.totalorder %v1273, 0
          %vm1306 = vcmp.eq.s32.totalorder %v1274, 0
          %vm1307 = vcmp.eq.s32.totalorder %v1275, 0
          %vm1308 = vcmp.eq.s32.totalorder %v1276, 0
          %vm1309 = vcmp.eq.s32.totalorder %v1277, 0
          %vm1310 = vcmp.eq.s32.totalorder %v1278, 0
          %v1311 = vsel %vm1279, %v1114, %v1245
          %v1312 = vsel %vm1279, %v1115, %v1246
          %v1313 = vsel %vm1280, %v1112, %v1243
          %v1314 = vsel %vm1280, %v1113, %v1244
          %v1315 = vsel %vm1281, %v1110, %v1241
          %v1316 = vsel %vm1281, %v1111, %v1242
          %v1317 = vsel %vm1282, %v1108, %v1239
          %v1318 = vsel %vm1282, %v1109, %v1240
          %v1319 = vsel %vm1283, %v1106, %v1237
          %v1320 = vsel %vm1283, %v1107, %v1238
          %v1321 = vsel %vm1284, %v1104, %v1235
          %v1322 = vsel %vm1284, %v1105, %v1236
          %v1323 = vsel %vm1285, %v1102, %v1233
          %v1324 = vsel %vm1285, %v1103, %v1234
          %v1325 = vsel %vm1286, %v1100, %v1231
          %v1326 = vsel %vm1286, %v1101, %v1232
          %v1327 = vsel %vm1287, %v1098, %v1229
          %v1328 = vsel %vm1287, %v1099, %v1230
          %v1329 = vsel %vm1288, %v1096, %v1227
          %v1330 = vsel %vm1288, %v1097, %v1228
          %v1331 = vsel %vm1289, %v1094, %v1225
          %v1332 = vsel %vm1289, %v1095, %v1226
          %v1333 = vsel %vm1290, %v1092, %v1223
          %v1334 = vsel %vm1290, %v1093, %v1224
          %v1335 = vsel %vm1291, %v1090, %v1221
          %v1336 = vsel %vm1291, %v1091, %v1222
          %v1337 = vsel %vm1292, %v1088, %v1219
          %v1338 = vsel %vm1292, %v1089, %v1220
          %v1339 = vsel %vm1293, %v1086, %v1217
          %v1340 = vsel %vm1293, %v1087, %v1218
          %v1341 = vsel %vm1294, %v1084, %v1215
          %v1342 = vsel %vm1294, %v1085, %v1216
          %v1343 = vsel %vm1295, %v1082, %v1213
          %v1344 = vsel %vm1295, %v1083, %v1214
          %v1345 = vsel %vm1296, %v1080, %v1211
          %v1346 = vsel %vm1296, %v1081, %v1212
          %v1347 = vsel %vm1297, %v1078, %v1209
          %v1348 = vsel %vm1297, %v1079, %v1210
          %v1349 = vsel %vm1298, %v1076, %v1207
          %v1350 = vsel %vm1298, %v1077, %v1208
          %v1351 = vsel %vm1299, %v1074, %v1205
          %v1352 = vsel %vm1299, %v1075, %v1206
          %v1353 = vsel %vm1300, %v1072, %v1203
          %v1354 = vsel %vm1300, %v1073, %v1204
          %v1355 = vsel %vm1301, %v1070, %v1201
          %v1356 = vsel %vm1301, %v1071, %v1202
          %v1357 = vsel %vm1302, %v1068, %v1199
          %v1358 = vsel %vm1302, %v1069, %v1200
          %v1359 = vsel %vm1303, %v1066, %v1197
          %v1360 = vsel %vm1303, %v1067, %v1198
          %v1361 = vsel %vm1304, %v1064, %v1195
          %v1362 = vsel %vm1304, %v1065, %v1196
          %v1363 = vsel %vm1305, %v1062, %v1193
          %v1364 = vsel %vm1305, %v1063, %v1194
          %v1365 = vsel %vm1306, %v1060, %v1191
          %v1366 = vsel %vm1306, %v1061, %v1192
          %v1367 = vsel %vm1307, %v1058, %v1189
          %v1368 = vsel %vm1307, %v1059, %v1190
          %v1369 = vsel %vm1308, %v1056, %v1187
          %v1370 = vsel %vm1308, %v1057, %v1188
          %v1371 = vsel %vm1309, %v1054, %v1185
          %v1372 = vsel %vm1309, %v1055, %v1186
          %v1373 = vsel %vm1310, %v1116, %v1183
          %v1374 = vsel %vm1310, %v1117, %v1184
          %v1375 = vrot.slane %v1311, 1
          %v1376 = vrot.slane %v1312, 1
          %v1377 = vrot.slane %v1313, 1
          %v1378 = vrot.slane %v1314, 1
          %v1379 = vrot.slane %v1315, 1
          %v1380 = vrot.slane %v1316, 1
          %v1381 = vrot.slane %v1317, 1
          %v1382 = vrot.slane %v1318, 1
          %v1383 = vrot.slane %v1319, 1
          %v1384 = vrot.slane %v1320, 1
          %v1385 = vrot.slane %v1321, 1
          %v1386 = vrot.slane %v1322, 1
          %v1387 = vrot.slane %v1323, 1
          %v1388 = vrot.slane %v1324, 1
          %v1389 = vrot.slane %v1325, 1
          %v1390 = vrot.slane %v1326, 1
          %v1391 = vrot.slane %v1327, 1
          %v1392 = vrot.slane %v1328, 1
          %v1393 = vrot.slane %v1329, 1
          %v1394 = vrot.slane %v1330, 1
          %v1395 = vrot.slane %v1331, 1
          %v1396 = vrot.slane %v1332, 1
          %v1397 = vrot.slane %v1333, 1
          %v1398 = vrot.slane %v1334, 1
          %v1399 = vrot.slane %v1335, 1
          %v1400 = vrot.slane %v1336, 1
          %v1401 = vrot.slane %v1337, 1
          %v1402 = vrot.slane %v1338, 1
          %v1403 = vrot.slane %v1339, 1
          %v1404 = vrot.slane %v1340, 1
          %v1405 = vrot.slane %v1341, 1
          %v1406 = vrot.slane %v1342, 1
          %v1407 = vrot.slane %v1343, 1
          %v1408 = vrot.slane %v1344, 1
          %v1409 = vrot.slane %v1345, 1
          %v1410 = vrot.slane %v1346, 1
          %v1411 = vrot.slane %v1347, 1
          %v1412 = vrot.slane %v1348, 1
          %v1413 = vrot.slane %v1349, 1
          %v1414 = vrot.slane %v1350, 1
          %v1415 = vrot.slane %v1351, 1
          %v1416 = vrot.slane %v1352, 1
          %v1417 = vrot.slane %v1353, 1
          %v1418 = vrot.slane %v1354, 1
          %v1419 = vrot.slane %v1355, 1
          %v1420 = vrot.slane %v1356, 1
          %v1421 = vrot.slane %v1357, 1
          %v1422 = vrot.slane %v1358, 1
          %v1423 = vrot.slane %v1359, 1
          %v1424 = vrot.slane %v1360, 1
          %v1425 = vrot.slane %v1361, 1
          %v1426 = vrot.slane %v1362, 1
          %v1427 = vrot.slane %v1363, 1
          %v1428 = vrot.slane %v1364, 1
          %v1429 = vrot.slane %v1365, 1
          %v1430 = vrot.slane %v1366, 1
          %v1431 = vrot.slane %v1367, 1
          %v1432 = vrot.slane %v1368, 1
          %v1433 = vrot.slane %v1369, 1
          %v1434 = vrot.slane %v1370, 1
          %v1435 = vrot.slane %v1371, 1
          %v1436 = vrot.slane %v1372, 1
          %v1437 = vrot.slane %v1373, 1
          %v1438 = vrot.slane %v1374, 1
          %vm1439 = vcmp.lt.s32.totalorder %v700, 7
          %v1440 = vsel %vm1439, %v1435, %v1437
          %v1441 = vsel %vm1439, %v1436, %v1438
          %v1442 = vsel %vm1439, %v1433, %v1435
          %v1443 = vsel %vm1439, %v1434, %v1436
          %v1444 = vsel %vm1439, %v1431, %v1433
          %v1445 = vsel %vm1439, %v1432, %v1434
          %v1446 = vsel %vm1439, %v1429, %v1431
          %v1447 = vsel %vm1439, %v1430, %v1432
          %v1448 = vsel %vm1439, %v1427, %v1429
          %v1449 = vsel %vm1439, %v1428, %v1430
          %v1450 = vsel %vm1439, %v1425, %v1427
          %v1451 = vsel %vm1439, %v1426, %v1428
          %v1452 = vsel %vm1439, %v1423, %v1425
          %v1453 = vsel %vm1439, %v1424, %v1426
          %v1454 = vsel %vm1439, %v1421, %v1423
          %v1455 = vsel %vm1439, %v1422, %v1424
          %v1456 = vsel %vm1439, %v1419, %v1421
          %v1457 = vsel %vm1439, %v1420, %v1422
          %v1458 = vsel %vm1439, %v1417, %v1419
          %v1459 = vsel %vm1439, %v1418, %v1420
          %v1460 = vsel %vm1439, %v1415, %v1417
          %v1461 = vsel %vm1439, %v1416, %v1418
          %v1462 = vsel %vm1439, %v1413, %v1415
          %v1463 = vsel %vm1439, %v1414, %v1416
          %v1464 = vsel %vm1439, %v1411, %v1413
          %v1465 = vsel %vm1439, %v1412, %v1414
          %v1466 = vsel %vm1439, %v1409, %v1411
          %v1467 = vsel %vm1439, %v1410, %v1412
          %v1468 = vsel %vm1439, %v1407, %v1409
          %v1469 = vsel %vm1439, %v1408, %v1410
          %v1470 = vsel %vm1439, %v1405, %v1407
          %v1471 = vsel %vm1439, %v1406, %v1408
          %v1472 = vsel %vm1439, %v1403, %v1405
          %v1473 = vsel %vm1439, %v1404, %v1406
          %v1474 = vsel %vm1439, %v1401, %v1403
          %v1475 = vsel %vm1439, %v1402, %v1404
          %v1476 = vsel %vm1439, %v1399, %v1401
          %v1477 = vsel %vm1439, %v1400, %v1402
          %v1478 = vsel %vm1439, %v1397, %v1399
          %v1479 = vsel %vm1439, %v1398, %v1400
          %v1480 = vsel %vm1439, %v1395, %v1397
          %v1481 = vsel %vm1439, %v1396, %v1398
          %v1482 = vsel %vm1439, %v1393, %v1395
          %v1483 = vsel %vm1439, %v1394, %v1396
          %v1484 = vsel %vm1439, %v1391, %v1393
          %v1485 = vsel %vm1439, %v1392, %v1394
          %v1486 = vsel %vm1439, %v1389, %v1391
          %v1487 = vsel %vm1439, %v1390, %v1392
          %v1488 = vsel %vm1439, %v1387, %v1389
          %v1489 = vsel %vm1439, %v1388, %v1390
          %v1490 = vsel %vm1439, %v1385, %v1387
          %v1491 = vsel %vm1439, %v1386, %v1388
          %v1492 = vsel %vm1439, %v1383, %v1385
          %v1493 = vsel %vm1439, %v1384, %v1386
          %v1494 = vsel %vm1439, %v1381, %v1383
          %v1495 = vsel %vm1439, %v1382, %v1384
          %v1496 = vsel %vm1439, %v1379, %v1381
          %v1497 = vsel %vm1439, %v1380, %v1382
          %v1498 = vsel %vm1439, %v1377, %v1379
          %v1499 = vsel %vm1439, %v1378, %v1380
          %v1500 = vsel %vm1439, %v1375, %v1377
          %v1501 = vsel %vm1439, %v1376, %v1378
          %v1502 = vsel %vm1439, %v1437, %v1375
          %v1503 = vsel %vm1439, %v1438, %v1376
          %v1504 = vrot.slane %v1311, 7
          %v1505 = vrot.slane %v1312, 7
          %v1506 = vrot.slane %v1313, 7
          %v1507 = vrot.slane %v1314, 7
          %v1508 = vrot.slane %v1315, 7
          %v1509 = vrot.slane %v1316, 7
          %v1510 = vrot.slane %v1317, 7
          %v1511 = vrot.slane %v1318, 7
          %v1512 = vrot.slane %v1319, 7
          %v1513 = vrot.slane %v1320, 7
          %v1514 = vrot.slane %v1321, 7
          %v1515 = vrot.slane %v1322, 7
          %v1516 = vrot.slane %v1323, 7
          %v1517 = vrot.slane %v1324, 7
          %v1518 = vrot.slane %v1325, 7
          %v1519 = vrot.slane %v1326, 7
          %v1520 = vrot.slane %v1327, 7
          %v1521 = vrot.slane %v1328, 7
          %v1522 = vrot.slane %v1329, 7
          %v1523 = vrot.slane %v1330, 7
          %v1524 = vrot.slane %v1331, 7
          %v1525 = vrot.slane %v1332, 7
          %v1526 = vrot.slane %v1333, 7
          %v1527 = vrot.slane %v1334, 7
          %v1528 = vrot.slane %v1335, 7
          %v1529 = vrot.slane %v1336, 7
          %v1530 = vrot.slane %v1337, 7
          %v1531 = vrot.slane %v1338, 7
          %v1532 = vrot.slane %v1339, 7
          %v1533 = vrot.slane %v1340, 7
          %v1534 = vrot.slane %v1341, 7
          %v1535 = vrot.slane %v1342, 7
          %v1536 = vrot.slane %v1343, 7
          %v1537 = vrot.slane %v1344, 7
          %v1538 = vrot.slane %v1345, 7
          %v1539 = vrot.slane %v1346, 7
          %v1540 = vrot.slane %v1347, 7
          %v1541 = vrot.slane %v1348, 7
          %v1542 = vrot.slane %v1349, 7
          %v1543 = vrot.slane %v1350, 7
          %v1544 = vrot.slane %v1351, 7
          %v1545 = vrot.slane %v1352, 7
          %v1546 = vrot.slane %v1353, 7
          %v1547 = vrot.slane %v1354, 7
          %v1548 = vrot.slane %v1355, 7
          %v1549 = vrot.slane %v1356, 7
          %v1550 = vrot.slane %v1357, 7
          %v1551 = vrot.slane %v1358, 7
          %v1552 = vrot.slane %v1359, 7
          %v1553 = vrot.slane %v1360, 7
          %v1554 = vrot.slane %v1361, 7
          %v1555 = vrot.slane %v1362, 7
          %v1556 = vrot.slane %v1363, 7
          %v1557 = vrot.slane %v1364, 7
          %v1558 = vrot.slane %v1365, 7
          %v1559 = vrot.slane %v1366, 7
          %v1560 = vrot.slane %v1367, 7
          %v1561 = vrot.slane %v1368, 7
          %v1562 = vrot.slane %v1369, 7
          %v1563 = vrot.slane %v1370, 7
          %v1564 = vrot.slane %v1371, 7
          %v1565 = vrot.slane %v1372, 7
          %v1566 = vrot.slane %v1373, 7
          %v1567 = vrot.slane %v1374, 7
          %vm1568 = vcmp.lt.s32.totalorder %v700, 1
          %v1569 = vsel %vm1568, %v1564, %v1566
          %v1570 = vsel %vm1568, %v1565, %v1567
          %v1571 = vsel %vm1568, %v1562, %v1564
          %v1572 = vsel %vm1568, %v1563, %v1565
          %v1573 = vsel %vm1568, %v1560, %v1562
          %v1574 = vsel %vm1568, %v1561, %v1563
          %v1575 = vsel %vm1568, %v1558, %v1560
          %v1576 = vsel %vm1568, %v1559, %v1561
          %v1577 = vsel %vm1568, %v1556, %v1558
          %v1578 = vsel %vm1568, %v1557, %v1559
          %v1579 = vsel %vm1568, %v1554, %v1556
          %v1580 = vsel %vm1568, %v1555, %v1557
          %v1581 = vsel %vm1568, %v1552, %v1554
          %v1582 = vsel %vm1568, %v1553, %v1555
          %v1583 = vsel %vm1568, %v1550, %v1552
          %v1584 = vsel %vm1568, %v1551, %v1553
          %v1585 = vsel %vm1568, %v1548, %v1550
          %v1586 = vsel %vm1568, %v1549, %v1551
          %v1587 = vsel %vm1568, %v1546, %v1548
          %v1588 = vsel %vm1568, %v1547, %v1549
          %v1589 = vsel %vm1568, %v1544, %v1546
          %v1590 = vsel %vm1568, %v1545, %v1547
          %v1591 = vsel %vm1568, %v1542, %v1544
          %v1592 = vsel %vm1568, %v1543, %v1545
          %v1593 = vsel %vm1568, %v1540, %v1542
          %v1594 = vsel %vm1568, %v1541, %v1543
          %v1595 = vsel %vm1568, %v1538, %v1540
          %v1596 = vsel %vm1568, %v1539, %v1541
          %v1597 = vsel %vm1568, %v1536, %v1538
          %v1598 = vsel %vm1568, %v1537, %v1539
          %v1599 = vsel %vm1568, %v1534, %v1536
          %v1600 = vsel %vm1568, %v1535, %v1537
          %v1601 = vsel %vm1568, %v1532, %v1534
          %v1602 = vsel %vm1568, %v1533, %v1535
          %v1603 = vsel %vm1568, %v1530, %v1532
          %v1604 = vsel %vm1568, %v1531, %v1533
          %v1605 = vsel %vm1568, %v1528, %v1530
          %v1606 = vsel %vm1568, %v1529, %v1531
          %v1607 = vsel %vm1568, %v1526, %v1528
          %v1608 = vsel %vm1568, %v1527, %v1529
          %v1609 = vsel %vm1568, %v1524, %v1526
          %v1610 = vsel %vm1568, %v1525, %v1527
          %v1611 = vsel %vm1568, %v1522, %v1524
          %v1612 = vsel %vm1568, %v1523, %v1525
          %v1613 = vsel %vm1568, %v1520, %v1522
          %v1614 = vsel %vm1568, %v1521, %v1523
          %v1615 = vsel %vm1568, %v1518, %v1520
          %v1616 = vsel %vm1568, %v1519, %v1521
          %v1617 = vsel %vm1568, %v1516, %v1518
          %v1618 = vsel %vm1568, %v1517, %v1519
          %v1619 = vsel %vm1568, %v1514, %v1516
          %v1620 = vsel %vm1568, %v1515, %v1517
          %v1621 = vsel %vm1568, %v1512, %v1514
          %v1622 = vsel %vm1568, %v1513, %v1515
          %v1623 = vsel %vm1568, %v1510, %v1512
          %v1624 = vsel %vm1568, %v1511, %v1513
          %v1625 = vsel %vm1568, %v1508, %v1510
          %v1626 = vsel %vm1568, %v1509, %v1511
          %v1627 = vsel %vm1568, %v1506, %v1508
          %v1628 = vsel %vm1568, %v1507, %v1509
          %v1629 = vsel %vm1568, %v1504, %v1506
          %v1630 = vsel %vm1568, %v1505, %v1507
          %v1631 = vsel %vm1568, %v1566, %v1504
          %v1632 = vsel %vm1568, %v1567, %v1505
          %v1633 = vand.u32 %v700, 1
          %v1634 = vand.u32 %v701, 1
          %v1635 = vand.u32 %v702, 1
          %v1636 = vand.u32 %v703, 1
          %v1637 = vand.u32 %v704, 1
          %v1638 = vand.u32 %v705, 1
          %v1639 = vand.u32 %v706, 1
          %v1640 = vand.u32 %v707, 1
          %v1641 = vand.u32 %v708, 1
          %v1642 = vand.u32 %v709, 1
          %v1643 = vand.u32 %v710, 1
          %v1644 = vand.u32 %v711, 1
          %v1645 = vand.u32 %v712, 1
          %v1646 = vand.u32 %v713, 1
          %v1647 = vand.u32 %v714, 1
          %v1648 = vand.u32 %v715, 1
          %v1649 = vand.u32 %v716, 1
          %v1650 = vand.u32 %v717, 1
          %v1651 = vand.u32 %v718, 1
          %v1652 = vand.u32 %v719, 1
          %v1653 = vand.u32 %v720, 1
          %v1654 = vand.u32 %v721, 1
          %v1655 = vand.u32 %v722, 1
          %v1656 = vand.u32 %v723, 1
          %v1657 = vand.u32 %v724, 1
          %v1658 = vand.u32 %v725, 1
          %v1659 = vand.u32 %v726, 1
          %v1660 = vand.u32 %v727, 1
          %v1661 = vand.u32 %v728, 1
          %v1662 = vand.u32 %v729, 1
          %v1663 = vand.u32 %v730, 1
          %v1664 = vand.u32 %v731, 1
          %vm1665 = vcmp.eq.s32.totalorder %v1633, 0
          %vm1666 = vcmp.eq.s32.totalorder %v1634, 0
          %vm1667 = vcmp.eq.s32.totalorder %v1635, 0
          %vm1668 = vcmp.eq.s32.totalorder %v1636, 0
          %vm1669 = vcmp.eq.s32.totalorder %v1637, 0
          %vm1670 = vcmp.eq.s32.totalorder %v1638, 0
          %vm1671 = vcmp.eq.s32.totalorder %v1639, 0
          %vm1672 = vcmp.eq.s32.totalorder %v1640, 0
          %vm1673 = vcmp.eq.s32.totalorder %v1641, 0
          %vm1674 = vcmp.eq.s32.totalorder %v1642, 0
          %vm1675 = vcmp.eq.s32.totalorder %v1643, 0
          %vm1676 = vcmp.eq.s32.totalorder %v1644, 0
          %vm1677 = vcmp.eq.s32.totalorder %v1645, 0
          %vm1678 = vcmp.eq.s32.totalorder %v1646, 0
          %vm1679 = vcmp.eq.s32.totalorder %v1647, 0
          %vm1680 = vcmp.eq.s32.totalorder %v1648, 0
          %vm1681 = vcmp.eq.s32.totalorder %v1649, 0
          %vm1682 = vcmp.eq.s32.totalorder %v1650, 0
          %vm1683 = vcmp.eq.s32.totalorder %v1651, 0
          %vm1684 = vcmp.eq.s32.totalorder %v1652, 0
          %vm1685 = vcmp.eq.s32.totalorder %v1653, 0
          %vm1686 = vcmp.eq.s32.totalorder %v1654, 0
          %vm1687 = vcmp.eq.s32.totalorder %v1655, 0
          %vm1688 = vcmp.eq.s32.totalorder %v1656, 0
          %vm1689 = vcmp.eq.s32.totalorder %v1657, 0
          %vm1690 = vcmp.eq.s32.totalorder %v1658, 0
          %vm1691 = vcmp.eq.s32.totalorder %v1659, 0
          %vm1692 = vcmp.eq.s32.totalorder %v1660, 0
          %vm1693 = vcmp.eq.s32.totalorder %v1661, 0
          %vm1694 = vcmp.eq.s32.totalorder %v1662, 0
          %vm1695 = vcmp.eq.s32.totalorder %v1663, 0
          %vm1696 = vcmp.eq.s32.totalorder %v1664, 0
          %v1697 = vsel %vm1665, %v1500, %v1631
          %v1698 = vsel %vm1665, %v1501, %v1632
          %v1699 = vsel %vm1666, %v1498, %v1629
          %v1700 = vsel %vm1666, %v1499, %v1630
          %v1701 = vsel %vm1667, %v1496, %v1627
          %v1702 = vsel %vm1667, %v1497, %v1628
          %v1703 = vsel %vm1668, %v1494, %v1625
          %v1704 = vsel %vm1668, %v1495, %v1626
          %v1705 = vsel %vm1669, %v1492, %v1623
          %v1706 = vsel %vm1669, %v1493, %v1624
          %v1707 = vsel %vm1670, %v1490, %v1621
          %v1708 = vsel %vm1670, %v1491, %v1622
          %v1709 = vsel %vm1671, %v1488, %v1619
          %v1710 = vsel %vm1671, %v1489, %v1620
          %v1711 = vsel %vm1672, %v1486, %v1617
          %v1712 = vsel %vm1672, %v1487, %v1618
          %v1713 = vsel %vm1673, %v1484, %v1615
          %v1714 = vsel %vm1673, %v1485, %v1616
          %v1715 = vsel %vm1674, %v1482, %v1613
          %v1716 = vsel %vm1674, %v1483, %v1614
          %v1717 = vsel %vm1675, %v1480, %v1611
          %v1718 = vsel %vm1675, %v1481, %v1612
          %v1719 = vsel %vm1676, %v1478, %v1609
          %v1720 = vsel %vm1676, %v1479, %v1610
          %v1721 = vsel %vm1677, %v1476, %v1607
          %v1722 = vsel %vm1677, %v1477, %v1608
          %v1723 = vsel %vm1678, %v1474, %v1605
          %v1724 = vsel %vm1678, %v1475, %v1606
          %v1725 = vsel %vm1679, %v1472, %v1603
          %v1726 = vsel %vm1679, %v1473, %v1604
          %v1727 = vsel %vm1680, %v1470, %v1601
          %v1728 = vsel %vm1680, %v1471, %v1602
          %v1729 = vsel %vm1681, %v1468, %v1599
          %v1730 = vsel %vm1681, %v1469, %v1600
          %v1731 = vsel %vm1682, %v1466, %v1597
          %v1732 = vsel %vm1682, %v1467, %v1598
          %v1733 = vsel %vm1683, %v1464, %v1595
          %v1734 = vsel %vm1683, %v1465, %v1596
          %v1735 = vsel %vm1684, %v1462, %v1593
          %v1736 = vsel %vm1684, %v1463, %v1594
          %v1737 = vsel %vm1685, %v1460, %v1591
          %v1738 = vsel %vm1685, %v1461, %v1592
          %v1739 = vsel %vm1686, %v1458, %v1589
          %v1740 = vsel %vm1686, %v1459, %v1590
          %v1741 = vsel %vm1687, %v1456, %v1587
          %v1742 = vsel %vm1687, %v1457, %v1588
          %v1743 = vsel %vm1688, %v1454, %v1585
          %v1744 = vsel %vm1688, %v1455, %v1586
          %v1745 = vsel %vm1689, %v1452, %v1583
          %v1746 = vsel %vm1689, %v1453, %v1584
          %v1747 = vsel %vm1690, %v1450, %v1581
          %v1748 = vsel %vm1690, %v1451, %v1582
          %v1749 = vsel %vm1691, %v1448, %v1579
          %v1750 = vsel %vm1691, %v1449, %v1580
          %v1751 = vsel %vm1692, %v1446, %v1577
          %v1752 = vsel %vm1692, %v1447, %v1578
          %v1753 = vsel %vm1693, %v1444, %v1575
          %v1754 = vsel %vm1693, %v1445, %v1576
          %v1755 = vsel %vm1694, %v1442, %v1573
          %v1756 = vsel %vm1694, %v1443, %v1574
          %v1757 = vsel %vm1695, %v1440, %v1571
          %v1758 = vsel %vm1695, %v1441, %v1572
          %v1759 = vsel %vm1696, %v1502, %v1569
          %v1760 = vsel %vm1696, %v1503, %v1570
          %1761 = vst [vmem:[%s220] sm:$0xff] %v1697
          %1762 = vst [vmem:[%s220 + $0x8] sm:$0xff] %v1698
          %1763 = vst [vmem:[%s220 + $0x10] sm:$0xff] %v1699
          %1764 = vst [vmem:[%s220 + $0x18] sm:$0xff] %v1700
          %1765 = vst [vmem:[%s220 + $0x20] sm:$0xff] %v1701
          %1766 = vst [vmem:[%s220 + $0x28] sm:$0xff] %v1702
          %1767 = vst [vmem:[%s220 + $0x30] sm:$0xff] %v1703
          %1768 = vst [vmem:[%s220 + $0x38] sm:$0xff] %v1704
          %1769 = vst [vmem:[%s220 + $0x40] sm:$0xff] %v1705
          %1770 = vst [vmem:[%s220 + $0x48] sm:$0xff] %v1706
          %1771 = vst [vmem:[%s220 + $0x50] sm:$0xff] %v1707
          %1772 = vst [vmem:[%s220 + $0x58] sm:$0xff] %v1708
          %1773 = vst [vmem:[%s220 + $0x60] sm:$0xff] %v1709
          %1774 = vst [vmem:[%s220 + $0x68] sm:$0xff] %v1710
          %1775 = vst [vmem:[%s220 + $0x70] sm:$0xff] %v1711
          %1776 = vst [vmem:[%s220 + $0x78] sm:$0xff] %v1712
          %1777 = vst [vmem:[%s220 + $0x80] sm:$0xff] %v1713
          %1778 = vst [vmem:[%s220 + $0x88] sm:$0xff] %v1714
          %1779 = vst [vmem:[%s220 + $0x90] sm:$0xff] %v1715
          %1780 = vst [vmem:[%s220 + $0x98] sm:$0xff] %v1716
          %1781 = vst [vmem:[%s220 + $0xa0] sm:$0xff] %v1717
          %1782 = vst [vmem:[%s220 + $0xa8] sm:$0xff] %v1718
          %1783 = vst [vmem:[%s220 + $0xb0] sm:$0xff] %v1719
          %1784 = vst [vmem:[%s220 + $0xb8] sm:$0xff] %v1720
          %1785 = vst [vmem:[%s220 + $0xc0] sm:$0xff] %v1721
          %1786 = vst [vmem:[%s220 + $0xc8] sm:$0xff] %v1722
          %1787 = vst [vmem:[%s220 + $0xd0] sm:$0xff] %v1723
          %1788 = vst [vmem:[%s220 + $0xd8] sm:$0xff] %v1724
          %1789 = vst [vmem:[%s220 + $0xe0] sm:$0xff] %v1725
          %1790 = vst [vmem:[%s220 + $0xe8] sm:$0xff] %v1726
          %1791 = vst [vmem:[%s220 + $0xf0] sm:$0xff] %v1727
          %1792 = vst [vmem:[%s220 + $0xf8] sm:$0xff] %v1728
          %1793 = vst [vmem:[%s220 + $0x100] sm:$0xff] %v1729
          %1794 = vst [vmem:[%s220 + $0x108] sm:$0xff] %v1730
          %1795 = vst [vmem:[%s220 + $0x110] sm:$0xff] %v1731
          %1796 = vst [vmem:[%s220 + $0x118] sm:$0xff] %v1732
          %1797 = vst [vmem:[%s220 + $0x120] sm:$0xff] %v1733
          %1798 = vst [vmem:[%s220 + $0x128] sm:$0xff] %v1734
          %1799 = vst [vmem:[%s220 + $0x130] sm:$0xff] %v1735
          %1800 = vst [vmem:[%s220 + $0x138] sm:$0xff] %v1736
          %1801 = vst [vmem:[%s220 + $0x140] sm:$0xff] %v1737
          %1802 = vst [vmem:[%s220 + $0x148] sm:$0xff] %v1738
          %1803 = vst [vmem:[%s220 + $0x150] sm:$0xff] %v1739
          %1804 = vst [vmem:[%s220 + $0x158] sm:$0xff] %v1740
          %1805 = vst [vmem:[%s220 + $0x160] sm:$0xff] %v1741
          %1806 = vst [vmem:[%s220 + $0x168] sm:$0xff] %v1742
          %1807 = vst [vmem:[%s220 + $0x170] sm:$0xff] %v1743
          %1808 = vst [vmem:[%s220 + $0x178] sm:$0xff] %v1744
          %1809 = vst [vmem:[%s220 + $0x180] sm:$0xff] %v1745
          %1810 = vst [vmem:[%s220 + $0x188] sm:$0xff] %v1746
          %1811 = vst [vmem:[%s220 + $0x190] sm:$0xff] %v1747
          %1812 = vst [vmem:[%s220 + $0x198] sm:$0xff] %v1748
          %1813 = vst [vmem:[%s220 + $0x1a0] sm:$0xff] %v1749
          %1814 = vst [vmem:[%s220 + $0x1a8] sm:$0xff] %v1750
          %1815 = vst [vmem:[%s220 + $0x1b0] sm:$0xff] %v1751
          %1816 = vst [vmem:[%s220 + $0x1b8] sm:$0xff] %v1752
          %1817 = vst [vmem:[%s220 + $0x1c0] sm:$0xff] %v1753
          %1818 = vst [vmem:[%s220 + $0x1c8] sm:$0xff] %v1754
          %1819 = vst [vmem:[%s220 + $0x1d0] sm:$0xff] %v1755
          %1820 = vst [vmem:[%s220 + $0x1d8] sm:$0xff] %v1756
          %1821 = vst [vmem:[%s220 + $0x1e0] sm:$0xff] %v1757
          %1822 = vst [vmem:[%s220 + $0x1e8] sm:$0xff] %v1758
          %1823 = vst [vmem:[%s220 + $0x1f0] sm:$0xff] %v1759
          %1824 = vst [vmem:[%s220 + $0x1f8] sm:$0xff] %v1760
        $region40: #{tpu_custom_call.1} parent=23 // pred_fallthru
          _
        %p1825 = scmp.eq.s32.totalorder %s237, 3
        %p1826 = por %p239, %p1825
        // Predicated region
        $region41: #{tpu_custom_call.1} parent=23 // pred_check
          %p1827 = pneg %p1826
        $region42: #{tpu_custom_call.1} parent=23 // pred_check_branch
          %1829 = sbr.rel (%p1827) target = $region44
        $region43: #{tpu_custom_call.1} parent=23 // pred_region
          %v1830 = vld [vmem:[%s220] sm:$0xff]
          %v1831 = vld [vmem:[%s220 + $0x8] sm:$0xff]
          %v1832 = vld [vmem:[%s220 + $0x10] sm:$0xff]
          %v1833 = vld [vmem:[%s220 + $0x18] sm:$0xff]
          %v1834 = vld [vmem:[%s220 + $0x20] sm:$0xff]
          %v1835 = vld [vmem:[%s220 + $0x28] sm:$0xff]
          %v1836 = vld [vmem:[%s220 + $0x30] sm:$0xff]
          %v1837 = vld [vmem:[%s220 + $0x38] sm:$0xff]
          %v1838 = vld [vmem:[%s220 + $0x40] sm:$0xff]
          %v1839 = vld [vmem:[%s220 + $0x48] sm:$0xff]
          %v1840 = vld [vmem:[%s220 + $0x50] sm:$0xff]
          %v1841 = vld [vmem:[%s220 + $0x58] sm:$0xff]
          %v1842 = vld [vmem:[%s220 + $0x60] sm:$0xff]
          %v1843 = vld [vmem:[%s220 + $0x68] sm:$0xff]
          %v1844 = vld [vmem:[%s220 + $0x70] sm:$0xff]
          %v1845 = vld [vmem:[%s220 + $0x78] sm:$0xff]
          %v1846 = vld [vmem:[%s220 + $0x80] sm:$0xff]
          %v1847 = vld [vmem:[%s220 + $0x88] sm:$0xff]
          %v1848 = vld [vmem:[%s220 + $0x90] sm:$0xff]
          %v1849 = vld [vmem:[%s220 + $0x98] sm:$0xff]
          %v1850 = vld [vmem:[%s220 + $0xa0] sm:$0xff]
          %v1851 = vld [vmem:[%s220 + $0xa8] sm:$0xff]
          %v1852 = vld [vmem:[%s220 + $0xb0] sm:$0xff]
          %v1853 = vld [vmem:[%s220 + $0xb8] sm:$0xff]
          %v1854 = vld [vmem:[%s220 + $0xc0] sm:$0xff]
          %v1855 = vld [vmem:[%s220 + $0xc8] sm:$0xff]
          %v1856 = vld [vmem:[%s220 + $0xd0] sm:$0xff]
          %v1857 = vld [vmem:[%s220 + $0xd8] sm:$0xff]
          %v1858 = vld [vmem:[%s220 + $0xe0] sm:$0xff]
          %v1859 = vld [vmem:[%s220 + $0xe8] sm:$0xff]
          %v1860 = vld [vmem:[%s220 + $0xf0] sm:$0xff]
          %v1861 = vld [vmem:[%s220 + $0xf8] sm:$0xff]
          %v1862 = vld [vmem:[%s220 + $0x100] sm:$0xff]
          %v1863 = vld [vmem:[%s220 + $0x108] sm:$0xff]
          %v1864 = vld [vmem:[%s220 + $0x110] sm:$0xff]
          %v1865 = vld [vmem:[%s220 + $0x118] sm:$0xff]
          %v1866 = vld [vmem:[%s220 + $0x120] sm:$0xff]
          %v1867 = vld [vmem:[%s220 + $0x128] sm:$0xff]
          %v1868 = vld [vmem:[%s220 + $0x130] sm:$0xff]
          %v1869 = vld [vmem:[%s220 + $0x138] sm:$0xff]
          %v1870 = vld [vmem:[%s220 + $0x140] sm:$0xff]
          %v1871 = vld [vmem:[%s220 + $0x148] sm:$0xff]
          %v1872 = vld [vmem:[%s220 + $0x150] sm:$0xff]
          %v1873 = vld [vmem:[%s220 + $0x158] sm:$0xff]
          %v1874 = vld [vmem:[%s220 + $0x160] sm:$0xff]
          %v1875 = vld [vmem:[%s220 + $0x168] sm:$0xff]
          %v1876 = vld [vmem:[%s220 + $0x170] sm:$0xff]
          %v1877 = vld [vmem:[%s220 + $0x178] sm:$0xff]
          %v1878 = vld [vmem:[%s220 + $0x180] sm:$0xff]
          %v1879 = vld [vmem:[%s220 + $0x188] sm:$0xff]
          %v1880 = vld [vmem:[%s220 + $0x190] sm:$0xff]
          %v1881 = vld [vmem:[%s220 + $0x198] sm:$0xff]
          %v1882 = vld [vmem:[%s220 + $0x1a0] sm:$0xff]
          %v1883 = vld [vmem:[%s220 + $0x1a8] sm:$0xff]
          %v1884 = vld [vmem:[%s220 + $0x1b0] sm:$0xff]
          %v1885 = vld [vmem:[%s220 + $0x1b8] sm:$0xff]
          %v1886 = vld [vmem:[%s220 + $0x1c0] sm:$0xff]
          %v1887 = vld [vmem:[%s220 + $0x1c8] sm:$0xff]
          %v1888 = vld [vmem:[%s220 + $0x1d0] sm:$0xff]
          %v1889 = vld [vmem:[%s220 + $0x1d8] sm:$0xff]
          %v1890 = vld [vmem:[%s220 + $0x1e0] sm:$0xff]
          %v1891 = vld [vmem:[%s220 + $0x1e8] sm:$0xff]
          %v1892 = vld [vmem:[%s220 + $0x1f0] sm:$0xff]
          %v1893 = vld [vmem:[%s220 + $0x1f8] sm:$0xff]
          %1894 = vxpose.xlu0.b32.start [1/16] %v1830, 128
          %1895 = vxpose.xlu0.b32.cont [2/16] %v1832, 128
          %1896 = vxpose.xlu0.b32.cont [3/16] %v1834, 128
          %1897 = vxpose.xlu0.b32.cont [4/16] %v1836, 128
          %1898 = vxpose.xlu0.b32.cont [5/16] %v1838, 128
          %1899 = vxpose.xlu0.b32.cont [6/16] %v1840, 128
          %1900 = vxpose.xlu0.b32.cont [7/16] %v1842, 128
          %1901 = vxpose.xlu0.b32.cont [8/16] %v1844, 128
          %1902 = vxpose.xlu0.b32.cont [9/16] %v1846, 128
          %1903 = vxpose.xlu0.b32.cont [10/16] %v1848, 128
          %1904 = vxpose.xlu0.b32.cont [11/16] %v1850, 128
          %1905 = vxpose.xlu0.b32.cont [12/16] %v1852, 128
          %1906 = vxpose.xlu0.b32.cont [13/16] %v1854, 128
          %1907 = vxpose.xlu0.b32.cont [14/16] %v1856, 128
          %1908 = vxpose.xlu0.b32.cont [15/16] %v1858, 128
          %1909 = vxpose.xlu0.b32.end [16/16] %v1860, 128
          %v1910 = vpop.trf.xlu0
          %v1911 = vpop.trf.xlu0
          %v1912 = vpop.trf.xlu0
          %v1913 = vpop.trf.xlu0
          %v1914 = vpop.trf.xlu0
          %v1915 = vpop.trf.xlu0
          %v1916 = vpop.trf.xlu0
          %v1917 = vpop.trf.xlu0
          %v1918 = vpop.trf.xlu0
          %v1919 = vpop.trf.xlu0
          %v1920 = vpop.trf.xlu0
          %v1921 = vpop.trf.xlu0
          %v1922 = vpop.trf.xlu0
          %v1923 = vpop.trf.xlu0
          %v1924 = vpop.trf.xlu0
          %v1925 = vpop.trf.xlu0
          %1926 = vxpose.xlu0.b32.start [1/16] %v1831, 128
          %1927 = vxpose.xlu0.b32.cont [2/16] %v1833, 128
          %1928 = vxpose.xlu0.b32.cont [3/16] %v1835, 128
          %1929 = vxpose.xlu0.b32.cont [4/16] %v1837, 128
          %1930 = vxpose.xlu0.b32.cont [5/16] %v1839, 128
          %1931 = vxpose.xlu0.b32.cont [6/16] %v1841, 128
          %1932 = vxpose.xlu0.b32.cont [7/16] %v1843, 128
          %1933 = vxpose.xlu0.b32.cont [8/16] %v1845, 128
          %1934 = vxpose.xlu0.b32.cont [9/16] %v1847, 128
          %1935 = vxpose.xlu0.b32.cont [10/16] %v1849, 128
          %1936 = vxpose.xlu0.b32.cont [11/16] %v1851, 128
          %1937 = vxpose.xlu0.b32.cont [12/16] %v1853, 128
          %1938 = vxpose.xlu0.b32.cont [13/16] %v1855, 128
          %1939 = vxpose.xlu0.b32.cont [14/16] %v1857, 128
          %1940 = vxpose.xlu0.b32.cont [15/16] %v1859, 128
          %1941 = vxpose.xlu0.b32.end [16/16] %v1861, 128
          %v1942 = vpop.trf.xlu0
          %v1943 = vpop.trf.xlu0
          %v1944 = vpop.trf.xlu0
          %v1945 = vpop.trf.xlu0
          %v1946 = vpop.trf.xlu0
          %v1947 = vpop.trf.xlu0
          %v1948 = vpop.trf.xlu0
          %v1949 = vpop.trf.xlu0
          %v1950 = vpop.trf.xlu0
          %v1951 = vpop.trf.xlu0
          %v1952 = vpop.trf.xlu0
          %v1953 = vpop.trf.xlu0
          %v1954 = vpop.trf.xlu0
          %v1955 = vpop.trf.xlu0
          %v1956 = vpop.trf.xlu0
          %v1957 = vpop.trf.xlu0
          %1958 = vxpose.xlu0.b32.start [1/16] %v1862, 128
          %1959 = vxpose.xlu0.b32.cont [2/16] %v1864, 128
          %1960 = vxpose.xlu0.b32.cont [3/16] %v1866, 128
          %1961 = vxpose.xlu0.b32.cont [4/16] %v1868, 128
          %1962 = vxpose.xlu0.b32.cont [5/16] %v1870, 128
          %1963 = vxpose.xlu0.b32.cont [6/16] %v1872, 128
          %1964 = vxpose.xlu0.b32.cont [7/16] %v1874, 128
          %1965 = vxpose.xlu0.b32.cont [8/16] %v1876, 128
          %1966 = vxpose.xlu0.b32.cont [9/16] %v1878, 128
          %1967 = vxpose.xlu0.b32.cont [10/16] %v1880, 128
          %1968 = vxpose.xlu0.b32.cont [11/16] %v1882, 128
          %1969 = vxpose.xlu0.b32.cont [12/16] %v1884, 128
          %1970 = vxpose.xlu0.b32.cont [13/16] %v1886, 128
          %1971 = vxpose.xlu0.b32.cont [14/16] %v1888, 128
          %1972 = vxpose.xlu0.b32.cont [15/16] %v1890, 128
          %1973 = vxpose.xlu0.b32.end [16/16] %v1892, 128
          %v1974 = vpop.trf.xlu0
          %v1975 = vpop.trf.xlu0
          %v1976 = vpop.trf.xlu0
          %v1977 = vpop.trf.xlu0
          %v1978 = vpop.trf.xlu0
          %v1979 = vpop.trf.xlu0
          %v1980 = vpop.trf.xlu0
          %v1981 = vpop.trf.xlu0
          %v1982 = vpop.trf.xlu0
          %v1983 = vpop.trf.xlu0
          %v1984 = vpop.trf.xlu0
          %v1985 = vpop.trf.xlu0
          %v1986 = vpop.trf.xlu0
          %v1987 = vpop.trf.xlu0
          %v1988 = vpop.trf.xlu0
          %v1989 = vpop.trf.xlu0
          %1990 = vxpose.xlu0.b32.start [1/16] %v1863, 128
          %1991 = vxpose.xlu0.b32.cont [2/16] %v1865, 128
          %1992 = vxpose.xlu0.b32.cont [3/16] %v1867, 128
          %1993 = vxpose.xlu0.b32.cont [4/16] %v1869, 128
          %1994 = vxpose.xlu0.b32.cont [5/16] %v1871, 128
          %1995 = vxpose.xlu0.b32.cont [6/16] %v1873, 128
          %1996 = vxpose.xlu0.b32.cont [7/16] %v1875, 128
          %1997 = vxpose.xlu0.b32.cont [8/16] %v1877, 128
          %1998 = vxpose.xlu0.b32.cont [9/16] %v1879, 128
          %1999 = vxpose.xlu0.b32.cont [10/16] %v1881, 128
          %2000 = vxpose.xlu0.b32.cont [11/16] %v1883, 128
          %2001 = vxpose.xlu0.b32.cont [12/16] %v1885, 128
          %2002 = vxpose.xlu0.b32.cont [13/16] %v1887, 128
          %2003 = vxpose.xlu0.b32.cont [14/16] %v1889, 128
          %2004 = vxpose.xlu0.b32.cont [15/16] %v1891, 128
          %2005 = vxpose.xlu0.b32.end [16/16] %v1893, 128
          %v2006 = vpop.trf.xlu0
          %v2007 = vpop.trf.xlu0
          %v2008 = vpop.trf.xlu0
          %v2009 = vpop.trf.xlu0
          %v2010 = vpop.trf.xlu0
          %v2011 = vpop.trf.xlu0
          %v2012 = vpop.trf.xlu0
          %v2013 = vpop.trf.xlu0
          %v2014 = vpop.trf.xlu0
          %v2015 = vpop.trf.xlu0
          %v2016 = vpop.trf.xlu0
          %v2017 = vpop.trf.xlu0
          %v2018 = vpop.trf.xlu0
          %v2019 = vpop.trf.xlu0
          %v2020 = vpop.trf.xlu0
          %v2021 = vpop.trf.xlu0
          %2022 = vst [vmem:[%s220] sm:$0xff] %v1910
          %2023 = vst [vmem:[%s220 + $0x8] sm:$0xff] %v1974
          %2024 = vst [vmem:[%s220 + $0x10] sm:$0xff] %v1911
          %2025 = vst [vmem:[%s220 + $0x18] sm:$0xff] %v1975
          %2026 = vst [vmem:[%s220 + $0x20] sm:$0xff] %v1912
          %2027 = vst [vmem:[%s220 + $0x28] sm:$0xff] %v1976
          %2028 = vst [vmem:[%s220 + $0x30] sm:$0xff] %v1913
          %2029 = vst [vmem:[%s220 + $0x38] sm:$0xff] %v1977
          %2030 = vst [vmem:[%s220 + $0x40] sm:$0xff] %v1914
          %2031 = vst [vmem:[%s220 + $0x48] sm:$0xff] %v1978
          %2032 = vst [vmem:[%s220 + $0x50] sm:$0xff] %v1915
          %2033 = vst [vmem:[%s220 + $0x58] sm:$0xff] %v1979
          %2034 = vst [vmem:[%s220 + $0x60] sm:$0xff] %v1916
          %2035 = vst [vmem:[%s220 + $0x68] sm:$0xff] %v1980
          %2036 = vst [vmem:[%s220 + $0x70] sm:$0xff] %v1917
          %2037 = vst [vmem:[%s220 + $0x78] sm:$0xff] %v1981
          %2038 = vst [vmem:[%s220 + $0x80] sm:$0xff] %v1918
          %2039 = vst [vmem:[%s220 + $0x88] sm:$0xff] %v1982
          %2040 = vst [vmem:[%s220 + $0x90] sm:$0xff] %v1919
          %2041 = vst [vmem:[%s220 + $0x98] sm:$0xff] %v1983
          %2042 = vst [vmem:[%s220 + $0xa0] sm:$0xff] %v1920
          %2043 = vst [vmem:[%s220 + $0xa8] sm:$0xff] %v1984
          %2044 = vst [vmem:[%s220 + $0xb0] sm:$0xff] %v1921
          %2045 = vst [vmem:[%s220 + $0xb8] sm:$0xff] %v1985
          %2046 = vst [vmem:[%s220 + $0xc0] sm:$0xff] %v1922
          %2047 = vst [vmem:[%s220 + $0xc8] sm:$0xff] %v1986
          %2048 = vst [vmem:[%s220 + $0xd0] sm:$0xff] %v1923
          %2049 = vst [vmem:[%s220 + $0xd8] sm:$0xff] %v1987
          %2050 = vst [vmem:[%s220 + $0xe0] sm:$0xff] %v1924
          %2051 = vst [vmem:[%s220 + $0xe8] sm:$0xff] %v1988
          %2052 = vst [vmem:[%s220 + $0xf0] sm:$0xff] %v1925
          %2053 = vst [vmem:[%s220 + $0xf8] sm:$0xff] %v1989
          %2054 = vst [vmem:[%s220 + $0x100] sm:$0xff] %v1942
          %2055 = vst [vmem:[%s220 + $0x108] sm:$0xff] %v2006
          %2056 = vst [vmem:[%s220 + $0x110] sm:$0xff] %v1943
          %2057 = vst [vmem:[%s220 + $0x118] sm:$0xff] %v2007
          %2058 = vst [vmem:[%s220 + $0x120] sm:$0xff] %v1944
          %2059 = vst [vmem:[%s220 + $0x128] sm:$0xff] %v2008
          %2060 = vst [vmem:[%s220 + $0x130] sm:$0xff] %v1945
          %2061 = vst [vmem:[%s220 + $0x138] sm:$0xff] %v2009
          %2062 = vst [vmem:[%s220 + $0x140] sm:$0xff] %v1946
          %2063 = vst [vmem:[%s220 + $0x148] sm:$0xff] %v2010
          %2064 = vst [vmem:[%s220 + $0x150] sm:$0xff] %v1947
          %2065 = vst [vmem:[%s220 + $0x158] sm:$0xff] %v2011
          %2066 = vst [vmem:[%s220 + $0x160] sm:$0xff] %v1948
          %2067 = vst [vmem:[%s220 + $0x168] sm:$0xff] %v2012
          %2068 = vst [vmem:[%s220 + $0x170] sm:$0xff] %v1949
          %2069 = vst [vmem:[%s220 + $0x178] sm:$0xff] %v2013
          %2070 = vst [vmem:[%s220 + $0x180] sm:$0xff] %v1950
          %2071 = vst [vmem:[%s220 + $0x188] sm:$0xff] %v2014
          %2072 = vst [vmem:[%s220 + $0x190] sm:$0xff] %v1951
          %2073 = vst [vmem:[%s220 + $0x198] sm:$0xff] %v2015
          %2074 = vst [vmem:[%s220 + $0x1a0] sm:$0xff] %v1952
          %2075 = vst [vmem:[%s220 + $0x1a8] sm:$0xff] %v2016
          %2076 = vst [vmem:[%s220 + $0x1b0] sm:$0xff] %v1953
          %2077 = vst [vmem:[%s220 + $0x1b8] sm:$0xff] %v2017
          %2078 = vst [vmem:[%s220 + $0x1c0] sm:$0xff] %v1954
          %2079 = vst [vmem:[%s220 + $0x1c8] sm:$0xff] %v2018
          %2080 = vst [vmem:[%s220 + $0x1d0] sm:$0xff] %v1955
          %2081 = vst [vmem:[%s220 + $0x1d8] sm:$0xff] %v2019
          %2082 = vst [vmem:[%s220 + $0x1e0] sm:$0xff] %v1956
          %2083 = vst [vmem:[%s220 + $0x1e8] sm:$0xff] %v2020
          %2084 = vst [vmem:[%s220 + $0x1f0] sm:$0xff] %v1957
          %2085 = vst [vmem:[%s220 + $0x1f8] sm:$0xff] %v2021
        $region44: #{tpu_custom_call.1} parent=23 // pred_fallthru
          _
        // Predicated region
        $region45: #{tpu_custom_call.1} parent=23 // pred_check
          %p2086 = pneg %p239
        $region46: #{tpu_custom_call.1} parent=23 // pred_check_branch
          %2088 = sbr.rel (%p2086) target = $region48
        $region47: #{tpu_custom_call.1} parent=23 // pred_region
          %v2089 = vld [vmem:[%s220] sm:$0xff]
          %v2090 = vld [vmem:[%s220 + $0x8] sm:$0xff]
          %v2091 = vld [vmem:[%s220 + $0x10] sm:$0xff]
          %v2092 = vld [vmem:[%s220 + $0x18] sm:$0xff]
          %v2093 = vld [vmem:[%s220 + $0x20] sm:$0xff]
          %v2094 = vld [vmem:[%s220 + $0x28] sm:$0xff]
          %v2095 = vld [vmem:[%s220 + $0x30] sm:$0xff]
          %v2096 = vld [vmem:[%s220 + $0x38] sm:$0xff]
          %v2097 = vld [vmem:[%s220 + $0x40] sm:$0xff]
          %v2098 = vld [vmem:[%s220 + $0x48] sm:$0xff]
          %v2099 = vld [vmem:[%s220 + $0x50] sm:$0xff]
          %v2100 = vld [vmem:[%s220 + $0x58] sm:$0xff]
          %v2101 = vld [vmem:[%s220 + $0x60] sm:$0xff]
          %v2102 = vld [vmem:[%s220 + $0x68] sm:$0xff]
          %v2103 = vld [vmem:[%s220 + $0x70] sm:$0xff]
          %v2104 = vld [vmem:[%s220 + $0x78] sm:$0xff]
          %v2105 = vld [vmem:[%s220 + $0x80] sm:$0xff]
          %v2106 = vld [vmem:[%s220 + $0x88] sm:$0xff]
          %v2107 = vld [vmem:[%s220 + $0x90] sm:$0xff]
          %v2108 = vld [vmem:[%s220 + $0x98] sm:$0xff]
          %v2109 = vld [vmem:[%s220 + $0xa0] sm:$0xff]
          %v2110 = vld [vmem:[%s220 + $0xa8] sm:$0xff]
          %v2111 = vld [vmem:[%s220 + $0xb0] sm:$0xff]
          %v2112 = vld [vmem:[%s220 + $0xb8] sm:$0xff]
          %v2113 = vld [vmem:[%s220 + $0xc0] sm:$0xff]
          %v2114 = vld [vmem:[%s220 + $0xc8] sm:$0xff]
          %v2115 = vld [vmem:[%s220 + $0xd0] sm:$0xff]
          %v2116 = vld [vmem:[%s220 + $0xd8] sm:$0xff]
          %v2117 = vld [vmem:[%s220 + $0xe0] sm:$0xff]
          %v2118 = vld [vmem:[%s220 + $0xe8] sm:$0xff]
          %v2119 = vld [vmem:[%s220 + $0xf0] sm:$0xff]
          %v2120 = vld [vmem:[%s220 + $0xf8] sm:$0xff]
          %v2121 = vld [vmem:[%s220 + $0x100] sm:$0xff]
          %v2122 = vld [vmem:[%s220 + $0x108] sm:$0xff]
          %v2123 = vld [vmem:[%s220 + $0x110] sm:$0xff]
          %v2124 = vld [vmem:[%s220 + $0x118] sm:$0xff]
          %v2125 = vld [vmem:[%s220 + $0x120] sm:$0xff]
          %v2126 = vld [vmem:[%s220 + $0x128] sm:$0xff]
          %v2127 = vld [vmem:[%s220 + $0x130] sm:$0xff]
          %v2128 = vld [vmem:[%s220 + $0x138] sm:$0xff]
          %v2129 = vld [vmem:[%s220 + $0x140] sm:$0xff]
          %v2130 = vld [vmem:[%s220 + $0x148] sm:$0xff]
          %v2131 = vld [vmem:[%s220 + $0x150] sm:$0xff]
          %v2132 = vld [vmem:[%s220 + $0x158] sm:$0xff]
          %v2133 = vld [vmem:[%s220 + $0x160] sm:$0xff]
          %v2134 = vld [vmem:[%s220 + $0x168] sm:$0xff]
          %v2135 = vld [vmem:[%s220 + $0x170] sm:$0xff]
          %v2136 = vld [vmem:[%s220 + $0x178] sm:$0xff]
          %v2137 = vld [vmem:[%s220 + $0x180] sm:$0xff]
          %v2138 = vld [vmem:[%s220 + $0x188] sm:$0xff]
          %v2139 = vld [vmem:[%s220 + $0x190] sm:$0xff]
          %v2140 = vld [vmem:[%s220 + $0x198] sm:$0xff]
          %v2141 = vld [vmem:[%s220 + $0x1a0] sm:$0xff]
          %v2142 = vld [vmem:[%s220 + $0x1a8] sm:$0xff]
          %v2143 = vld [vmem:[%s220 + $0x1b0] sm:$0xff]
          %v2144 = vld [vmem:[%s220 + $0x1b8] sm:$0xff]
          %v2145 = vld [vmem:[%s220 + $0x1c0] sm:$0xff]
          %v2146 = vld [vmem:[%s220 + $0x1c8] sm:$0xff]
          %v2147 = vld [vmem:[%s220 + $0x1d0] sm:$0xff]
          %v2148 = vld [vmem:[%s220 + $0x1d8] sm:$0xff]
          %v2149 = vld [vmem:[%s220 + $0x1e0] sm:$0xff]
          %v2150 = vld [vmem:[%s220 + $0x1e8] sm:$0xff]
          %v2151 = vld [vmem:[%s220 + $0x1f0] sm:$0xff]
          %v2152 = vld [vmem:[%s220 + $0x1f8] sm:$0xff]
          %v2153 = vlaneseq
          %v2154 = vshrl.u32 %v2153, 7
          %v2155 = vadd.s32 %v2154, 8
          %v2156 = vadd.s32 %v2154, 16
          %v2157 = vadd.s32 %v2154, 24
          %v2158 = vadd.s32 %v2154, 32
          %v2159 = vadd.s32 %v2154, 40
          %v2160 = vadd.s32 %v2154, 48
          %v2161 = vadd.s32 %v2154, 56
          %v2162 = vadd.s32 %v2154, 64
          %v2163 = vadd.s32 %v2154, 72
          %v2164 = vadd.s32 %v2154, 80
          %v2165 = vadd.s32 %v2154, 88
          %v2166 = vadd.s32 %v2154, 96
          %v2167 = vadd.s32 %v2154, 104
          %v2168 = vadd.s32 %v2154, 112
          %v2169 = vadd.s32 %v2154, 120
          %v2170 = vadd.s32 %v2154, 128
          %v2171 = vadd.s32 %v2154, 136
          %v2172 = vadd.s32 %v2154, 144
          %v2173 = vadd.s32 %v2154, 152
          %v2174 = vadd.s32 %v2154, 160
          %v2175 = vadd.s32 %v2154, 168
          %v2176 = vadd.s32 %v2154, 176
          %v2177 = vadd.s32 %v2154, 184
          %v2178 = vadd.s32 %v2154, 192
          %v2179 = vadd.s32 %v2154, 200
          %v2180 = vadd.s32 %v2154, 208
          %v2181 = vadd.s32 %v2154, 216
          %v2182 = vadd.s32 %v2154, 224
          %v2183 = vadd.s32 %v2154, 232
          %v2184 = vadd.s32 %v2154, 240
          %v2185 = vadd.s32 %v2154, 248
          %v2186 = vrot.slane %v2151, 4
          %v2187 = vrot.slane %v2152, 4
          %v2188 = vrot.slane %v2149, 4
          %v2189 = vrot.slane %v2150, 4
          %v2190 = vrot.slane %v2147, 4
          %v2191 = vrot.slane %v2148, 4
          %v2192 = vrot.slane %v2145, 4
          %v2193 = vrot.slane %v2146, 4
          %v2194 = vrot.slane %v2143, 4
          %v2195 = vrot.slane %v2144, 4
          %v2196 = vrot.slane %v2141, 4
          %v2197 = vrot.slane %v2142, 4
          %v2198 = vrot.slane %v2139, 4
          %v2199 = vrot.slane %v2140, 4
          %v2200 = vrot.slane %v2137, 4
          %v2201 = vrot.slane %v2138, 4
          %v2202 = vrot.slane %v2135, 4
          %v2203 = vrot.slane %v2136, 4
          %v2204 = vrot.slane %v2133, 4
          %v2205 = vrot.slane %v2134, 4
          %v2206 = vrot.slane %v2131, 4
          %v2207 = vrot.slane %v2132, 4
          %v2208 = vrot.slane %v2129, 4
          %v2209 = vrot.slane %v2130, 4
          %v2210 = vrot.slane %v2127, 4
          %v2211 = vrot.slane %v2128, 4
          %v2212 = vrot.slane %v2125, 4
          %v2213 = vrot.slane %v2126, 4
          %v2214 = vrot.slane %v2123, 4
          %v2215 = vrot.slane %v2124, 4
          %v2216 = vrot.slane %v2121, 4
          %v2217 = vrot.slane %v2122, 4
          %v2218 = vrot.slane %v2119, 4
          %v2219 = vrot.slane %v2120, 4
          %v2220 = vrot.slane %v2117, 4
          %v2221 = vrot.slane %v2118, 4
          %v2222 = vrot.slane %v2115, 4
          %v2223 = vrot.slane %v2116, 4
          %v2224 = vrot.slane %v2113, 4
          %v2225 = vrot.slane %v2114, 4
          %v2226 = vrot.slane %v2111, 4
          %v2227 = vrot.slane %v2112, 4
          %v2228 = vrot.slane %v2109, 4
          %v2229 = vrot.slane %v2110, 4
          %v2230 = vrot.slane %v2107, 4
          %v2231 = vrot.slane %v2108, 4
          %v2232 = vrot.slane %v2105, 4
          %v2233 = vrot.slane %v2106, 4
          %v2234 = vrot.slane %v2103, 4
          %v2235 = vrot.slane %v2104, 4
          %v2236 = vrot.slane %v2101, 4
          %v2237 = vrot.slane %v2102, 4
          %v2238 = vrot.slane %v2099, 4
          %v2239 = vrot.slane %v2100, 4
          %v2240 = vrot.slane %v2097, 4
          %v2241 = vrot.slane %v2098, 4
          %v2242 = vrot.slane %v2095, 4
          %v2243 = vrot.slane %v2096, 4
          %v2244 = vrot.slane %v2093, 4
          %v2245 = vrot.slane %v2094, 4
          %v2246 = vrot.slane %v2091, 4
          %v2247 = vrot.slane %v2092, 4
          %v2248 = vrot.slane %v2089, 4
          %v2249 = vrot.slane %v2090, 4
          %vm2250 = vcmp.lt.s32.totalorder %v2154, 4
          %v2251 = vsel %vm2250, %v2246, %v2248
          %v2252 = vsel %vm2250, %v2247, %v2249
          %v2253 = vsel %vm2250, %v2244, %v2246
          %v2254 = vsel %vm2250, %v2245, %v2247
          %v2255 = vsel %vm2250, %v2242, %v2244
          %v2256 = vsel %vm2250, %v2243, %v2245
          %v2257 = vsel %vm2250, %v2240, %v2242
          %v2258 = vsel %vm2250, %v2241, %v2243
          %v2259 = vsel %vm2250, %v2238, %v2240
          %v2260 = vsel %vm2250, %v2239, %v2241
          %v2261 = vsel %vm2250, %v2236, %v2238
          %v2262 = vsel %vm2250, %v2237, %v2239
          %v2263 = vsel %vm2250, %v2234, %v2236
          %v2264 = vsel %vm2250, %v2235, %v2237
          %v2265 = vsel %vm2250, %v2232, %v2234
          %v2266 = vsel %vm2250, %v2233, %v2235
          %v2267 = vsel %vm2250, %v2230, %v2232
          %v2268 = vsel %vm2250, %v2231, %v2233
          %v2269 = vsel %vm2250, %v2228, %v2230
          %v2270 = vsel %vm2250, %v2229, %v2231
          %v2271 = vsel %vm2250, %v2226, %v2228
          %v2272 = vsel %vm2250, %v2227, %v2229
          %v2273 = vsel %vm2250, %v2224, %v2226
          %v2274 = vsel %vm2250, %v2225, %v2227
          %v2275 = vsel %vm2250, %v2222, %v2224
          %v2276 = vsel %vm2250, %v2223, %v2225
          %v2277 = vsel %vm2250, %v2220, %v2222
          %v2278 = vsel %vm2250, %v2221, %v2223
          %v2279 = vsel %vm2250, %v2218, %v2220
          %v2280 = vsel %vm2250, %v2219, %v2221
          %v2281 = vsel %vm2250, %v2216, %v2218
          %v2282 = vsel %vm2250, %v2217, %v2219
          %v2283 = vsel %vm2250, %v2214, %v2216
          %v2284 = vsel %vm2250, %v2215, %v2217
          %v2285 = vsel %vm2250, %v2212, %v2214
          %v2286 = vsel %vm2250, %v2213, %v2215
          %v2287 = vsel %vm2250, %v2210, %v2212
          %v2288 = vsel %vm2250, %v2211, %v2213
          %v2289 = vsel %vm2250, %v2208, %v2210
          %v2290 = vsel %vm2250, %v2209, %v2211
          %v2291 = vsel %vm2250, %v2206, %v2208
          %v2292 = vsel %vm2250, %v2207, %v2209
          %v2293 = vsel %vm2250, %v2204, %v2206
          %v2294 = vsel %vm2250, %v2205, %v2207
          %v2295 = vsel %vm2250, %v2202, %v2204
          %v2296 = vsel %vm2250, %v2203, %v2205
          %v2297 = vsel %vm2250, %v2200, %v2202
          %v2298 = vsel %vm2250, %v2201, %v2203
          %v2299 = vsel %vm2250, %v2198, %v2200
          %v2300 = vsel %vm2250, %v2199, %v2201
          %v2301 = vsel %vm2250, %v2196, %v2198
          %v2302 = vsel %vm2250, %v2197, %v2199
          %v2303 = vsel %vm2250, %v2194, %v2196
          %v2304 = vsel %vm2250, %v2195, %v2197
          %v2305 = vsel %vm2250, %v2192, %v2194
          %v2306 = vsel %vm2250, %v2193, %v2195
          %v2307 = vsel %vm2250, %v2190, %v2192
          %v2308 = vsel %vm2250, %v2191, %v2193
          %v2309 = vsel %vm2250, %v2188, %v2190
          %v2310 = vsel %vm2250, %v2189, %v2191
          %v2311 = vsel %vm2250, %v2186, %v2188
          %v2312 = vsel %vm2250, %v2187, %v2189
          %v2313 = vsel %vm2250, %v2248, %v2186
          %v2314 = vsel %vm2250, %v2249, %v2187
          %v2315 = vand.u32 %v2154, 4
          %v2316 = vand.u32 %v2155, 4
          %v2317 = vand.u32 %v2156, 4
          %v2318 = vand.u32 %v2157, 4
          %v2319 = vand.u32 %v2158, 4
          %v2320 = vand.u32 %v2159, 4
          %v2321 = vand.u32 %v2160, 4
          %v2322 = vand.u32 %v2161, 4
          %v2323 = vand.u32 %v2162, 4
          %v2324 = vand.u32 %v2163, 4
          %v2325 = vand.u32 %v2164, 4
          %v2326 = vand.u32 %v2165, 4
          %v2327 = vand.u32 %v2166, 4
          %v2328 = vand.u32 %v2167, 4
          %v2329 = vand.u32 %v2168, 4
          %v2330 = vand.u32 %v2169, 4
          %v2331 = vand.u32 %v2170, 4
          %v2332 = vand.u32 %v2171, 4
          %v2333 = vand.u32 %v2172, 4
          %v2334 = vand.u32 %v2173, 4
          %v2335 = vand.u32 %v2174, 4
          %v2336 = vand.u32 %v2175, 4
          %v2337 = vand.u32 %v2176, 4
          %v2338 = vand.u32 %v2177, 4
          %v2339 = vand.u32 %v2178, 4
          %v2340 = vand.u32 %v2179, 4
          %v2341 = vand.u32 %v2180, 4
          %v2342 = vand.u32 %v2181, 4
          %v2343 = vand.u32 %v2182, 4
          %v2344 = vand.u32 %v2183, 4
          %v2345 = vand.u32 %v2184, 4
          %v2346 = vand.u32 %v2185, 4
          %vm2347 = vcmp.eq.s32.totalorder %v2315, 0
          %vm2348 = vcmp.eq.s32.totalorder %v2316, 0
          %vm2349 = vcmp.eq.s32.totalorder %v2317, 0
          %vm2350 = vcmp.eq.s32.totalorder %v2318, 0
          %vm2351 = vcmp.eq.s32.totalorder %v2319, 0
          %vm2352 = vcmp.eq.s32.totalorder %v2320, 0
          %vm2353 = vcmp.eq.s32.totalorder %v2321, 0
          %vm2354 = vcmp.eq.s32.totalorder %v2322, 0
          %vm2355 = vcmp.eq.s32.totalorder %v2323, 0
          %vm2356 = vcmp.eq.s32.totalorder %v2324, 0
          %vm2357 = vcmp.eq.s32.totalorder %v2325, 0
          %vm2358 = vcmp.eq.s32.totalorder %v2326, 0
          %vm2359 = vcmp.eq.s32.totalorder %v2327, 0
          %vm2360 = vcmp.eq.s32.totalorder %v2328, 0
          %vm2361 = vcmp.eq.s32.totalorder %v2329, 0
          %vm2362 = vcmp.eq.s32.totalorder %v2330, 0
          %vm2363 = vcmp.eq.s32.totalorder %v2331, 0
          %vm2364 = vcmp.eq.s32.totalorder %v2332, 0
          %vm2365 = vcmp.eq.s32.totalorder %v2333, 0
          %vm2366 = vcmp.eq.s32.totalorder %v2334, 0
          %vm2367 = vcmp.eq.s32.totalorder %v2335, 0
          %vm2368 = vcmp.eq.s32.totalorder %v2336, 0
          %vm2369 = vcmp.eq.s32.totalorder %v2337, 0
          %vm2370 = vcmp.eq.s32.totalorder %v2338, 0
          %vm2371 = vcmp.eq.s32.totalorder %v2339, 0
          %vm2372 = vcmp.eq.s32.totalorder %v2340, 0
          %vm2373 = vcmp.eq.s32.totalorder %v2341, 0
          %vm2374 = vcmp.eq.s32.totalorder %v2342, 0
          %vm2375 = vcmp.eq.s32.totalorder %v2343, 0
          %vm2376 = vcmp.eq.s32.totalorder %v2344, 0
          %vm2377 = vcmp.eq.s32.totalorder %v2345, 0
          %vm2378 = vcmp.eq.s32.totalorder %v2346, 0
          %v2379 = vsel %vm2347, %v2311, %v2313
          %v2380 = vsel %vm2347, %v2312, %v2314
          %v2381 = vsel %vm2348, %v2309, %v2311
          %v2382 = vsel %vm2348, %v2310, %v2312
          %v2383 = vsel %vm2349, %v2307, %v2309
          %v2384 = vsel %vm2349, %v2308, %v2310
          %v2385 = vsel %vm2350, %v2305, %v2307
          %v2386 = vsel %vm2350, %v2306, %v2308
          %v2387 = vsel %vm2351, %v2303, %v2305
          %v2388 = vsel %vm2351, %v2304, %v2306
          %v2389 = vsel %vm2352, %v2301, %v2303
          %v2390 = vsel %vm2352, %v2302, %v2304
          %v2391 = vsel %vm2353, %v2299, %v2301
          %v2392 = vsel %vm2353, %v2300, %v2302
          %v2393 = vsel %vm2354, %v2297, %v2299
          %v2394 = vsel %vm2354, %v2298, %v2300
          %v2395 = vsel %vm2355, %v2295, %v2297
          %v2396 = vsel %vm2355, %v2296, %v2298
          %v2397 = vsel %vm2356, %v2293, %v2295
          %v2398 = vsel %vm2356, %v2294, %v2296
          %v2399 = vsel %vm2357, %v2291, %v2293
          %v2400 = vsel %vm2357, %v2292, %v2294
          %v2401 = vsel %vm2358, %v2289, %v2291
          %v2402 = vsel %vm2358, %v2290, %v2292
          %v2403 = vsel %vm2359, %v2287, %v2289
          %v2404 = vsel %vm2359, %v2288, %v2290
          %v2405 = vsel %vm2360, %v2285, %v2287
          %v2406 = vsel %vm2360, %v2286, %v2288
          %v2407 = vsel %vm2361, %v2283, %v2285
          %v2408 = vsel %vm2361, %v2284, %v2286
          %v2409 = vsel %vm2362, %v2281, %v2283
          %v2410 = vsel %vm2362, %v2282, %v2284
          %v2411 = vsel %vm2363, %v2279, %v2281
          %v2412 = vsel %vm2363, %v2280, %v2282
          %v2413 = vsel %vm2364, %v2277, %v2279
          %v2414 = vsel %vm2364, %v2278, %v2280
          %v2415 = vsel %vm2365, %v2275, %v2277
          %v2416 = vsel %vm2365, %v2276, %v2278
          %v2417 = vsel %vm2366, %v2273, %v2275
          %v2418 = vsel %vm2366, %v2274, %v2276
          %v2419 = vsel %vm2367, %v2271, %v2273
          %v2420 = vsel %vm2367, %v2272, %v2274
          %v2421 = vsel %vm2368, %v2269, %v2271
          %v2422 = vsel %vm2368, %v2270, %v2272
          %v2423 = vsel %vm2369, %v2267, %v2269
          %v2424 = vsel %vm2369, %v2268, %v2270
          %v2425 = vsel %vm2370, %v2265, %v2267
          %v2426 = vsel %vm2370, %v2266, %v2268
          %v2427 = vsel %vm2371, %v2263, %v2265
          %v2428 = vsel %vm2371, %v2264, %v2266
          %v2429 = vsel %vm2372, %v2261, %v2263
          %v2430 = vsel %vm2372, %v2262, %v2264
          %v2431 = vsel %vm2373, %v2259, %v2261
          %v2432 = vsel %vm2373, %v2260, %v2262
          %v2433 = vsel %vm2374, %v2257, %v2259
          %v2434 = vsel %vm2374, %v2258, %v2260
          %v2435 = vsel %vm2375, %v2255, %v2257
          %v2436 = vsel %vm2375, %v2256, %v2258
          %v2437 = vsel %vm2376, %v2253, %v2255
          %v2438 = vsel %vm2376, %v2254, %v2256
          %v2439 = vsel %vm2377, %v2251, %v2253
          %v2440 = vsel %vm2377, %v2252, %v2254
          %v2441 = vsel %vm2378, %v2313, %v2251
          %v2442 = vsel %vm2378, %v2314, %v2252
          %v2443 = vrot.slane %v2379, 2
          %v2444 = vrot.slane %v2380, 2
          %v2445 = vrot.slane %v2381, 2
          %v2446 = vrot.slane %v2382, 2
          %v2447 = vrot.slane %v2383, 2
          %v2448 = vrot.slane %v2384, 2
          %v2449 = vrot.slane %v2385, 2
          %v2450 = vrot.slane %v2386, 2
          %v2451 = vrot.slane %v2387, 2
          %v2452 = vrot.slane %v2388, 2
          %v2453 = vrot.slane %v2389, 2
          %v2454 = vrot.slane %v2390, 2
          %v2455 = vrot.slane %v2391, 2
          %v2456 = vrot.slane %v2392, 2
          %v2457 = vrot.slane %v2393, 2
          %v2458 = vrot.slane %v2394, 2
          %v2459 = vrot.slane %v2395, 2
          %v2460 = vrot.slane %v2396, 2
          %v2461 = vrot.slane %v2397, 2
          %v2462 = vrot.slane %v2398, 2
          %v2463 = vrot.slane %v2399, 2
          %v2464 = vrot.slane %v2400, 2
          %v2465 = vrot.slane %v2401, 2
          %v2466 = vrot.slane %v2402, 2
          %v2467 = vrot.slane %v2403, 2
          %v2468 = vrot.slane %v2404, 2
          %v2469 = vrot.slane %v2405, 2
          %v2470 = vrot.slane %v2406, 2
          %v2471 = vrot.slane %v2407, 2
          %v2472 = vrot.slane %v2408, 2
          %v2473 = vrot.slane %v2409, 2
          %v2474 = vrot.slane %v2410, 2
          %v2475 = vrot.slane %v2411, 2
          %v2476 = vrot.slane %v2412, 2
          %v2477 = vrot.slane %v2413, 2
          %v2478 = vrot.slane %v2414, 2
          %v2479 = vrot.slane %v2415, 2
          %v2480 = vrot.slane %v2416, 2
          %v2481 = vrot.slane %v2417, 2
          %v2482 = vrot.slane %v2418, 2
          %v2483 = vrot.slane %v2419, 2
          %v2484 = vrot.slane %v2420, 2
          %v2485 = vrot.slane %v2421, 2
          %v2486 = vrot.slane %v2422, 2
          %v2487 = vrot.slane %v2423, 2
          %v2488 = vrot.slane %v2424, 2
          %v2489 = vrot.slane %v2425, 2
          %v2490 = vrot.slane %v2426, 2
          %v2491 = vrot.slane %v2427, 2
          %v2492 = vrot.slane %v2428, 2
          %v2493 = vrot.slane %v2429, 2
          %v2494 = vrot.slane %v2430, 2
          %v2495 = vrot.slane %v2431, 2
          %v2496 = vrot.slane %v2432, 2
          %v2497 = vrot.slane %v2433, 2
          %v2498 = vrot.slane %v2434, 2
          %v2499 = vrot.slane %v2435, 2
          %v2500 = vrot.slane %v2436, 2
          %v2501 = vrot.slane %v2437, 2
          %v2502 = vrot.slane %v2438, 2
          %v2503 = vrot.slane %v2439, 2
          %v2504 = vrot.slane %v2440, 2
          %v2505 = vrot.slane %v2441, 2
          %v2506 = vrot.slane %v2442, 2
          %vm2507 = vcmp.lt.s32.totalorder %v2154, 6
          %v2508 = vsel %vm2507, %v2503, %v2505
          %v2509 = vsel %vm2507, %v2504, %v2506
          %v2510 = vsel %vm2507, %v2501, %v2503
          %v2511 = vsel %vm2507, %v2502, %v2504
          %v2512 = vsel %vm2507, %v2499, %v2501
          %v2513 = vsel %vm2507, %v2500, %v2502
          %v2514 = vsel %vm2507, %v2497, %v2499
          %v2515 = vsel %vm2507, %v2498, %v2500
          %v2516 = vsel %vm2507, %v2495, %v2497
          %v2517 = vsel %vm2507, %v2496, %v2498
          %v2518 = vsel %vm2507, %v2493, %v2495
          %v2519 = vsel %vm2507, %v2494, %v2496
          %v2520 = vsel %vm2507, %v2491, %v2493
          %v2521 = vsel %vm2507, %v2492, %v2494
          %v2522 = vsel %vm2507, %v2489, %v2491
          %v2523 = vsel %vm2507, %v2490, %v2492
          %v2524 = vsel %vm2507, %v2487, %v2489
          %v2525 = vsel %vm2507, %v2488, %v2490
          %v2526 = vsel %vm2507, %v2485, %v2487
          %v2527 = vsel %vm2507, %v2486, %v2488
          %v2528 = vsel %vm2507, %v2483, %v2485
          %v2529 = vsel %vm2507, %v2484, %v2486
          %v2530 = vsel %vm2507, %v2481, %v2483
          %v2531 = vsel %vm2507, %v2482, %v2484
          %v2532 = vsel %vm2507, %v2479, %v2481
          %v2533 = vsel %vm2507, %v2480, %v2482
          %v2534 = vsel %vm2507, %v2477, %v2479
          %v2535 = vsel %vm2507, %v2478, %v2480
          %v2536 = vsel %vm2507, %v2475, %v2477
          %v2537 = vsel %vm2507, %v2476, %v2478
          %v2538 = vsel %vm2507, %v2473, %v2475
          %v2539 = vsel %vm2507, %v2474, %v2476
          %v2540 = vsel %vm2507, %v2471, %v2473
          %v2541 = vsel %vm2507, %v2472, %v2474
          %v2542 = vsel %vm2507, %v2469, %v2471
          %v2543 = vsel %vm2507, %v2470, %v2472
          %v2544 = vsel %vm2507, %v2467, %v2469
          %v2545 = vsel %vm2507, %v2468, %v2470
          %v2546 = vsel %vm2507, %v2465, %v2467
          %v2547 = vsel %vm2507, %v2466, %v2468
          %v2548 = vsel %vm2507, %v2463, %v2465
          %v2549 = vsel %vm2507, %v2464, %v2466
          %v2550 = vsel %vm2507, %v2461, %v2463
          %v2551 = vsel %vm2507, %v2462, %v2464
          %v2552 = vsel %vm2507, %v2459, %v2461
          %v2553 = vsel %vm2507, %v2460, %v2462
          %v2554 = vsel %vm2507, %v2457, %v2459
          %v2555 = vsel %vm2507, %v2458, %v2460
          %v2556 = vsel %vm2507, %v2455, %v2457
          %v2557 = vsel %vm2507, %v2456, %v2458
          %v2558 = vsel %vm2507, %v2453, %v2455
          %v2559 = vsel %vm2507, %v2454, %v2456
          %v2560 = vsel %vm2507, %v2451, %v2453
          %v2561 = vsel %vm2507, %v2452, %v2454
          %v2562 = vsel %vm2507, %v2449, %v2451
          %v2563 = vsel %vm2507, %v2450, %v2452
          %v2564 = vsel %vm2507, %v2447, %v2449
          %v2565 = vsel %vm2507, %v2448, %v2450
          %v2566 = vsel %vm2507, %v2445, %v2447
          %v2567 = vsel %vm2507, %v2446, %v2448
          %v2568 = vsel %vm2507, %v2443, %v2445
          %v2569 = vsel %vm2507, %v2444, %v2446
          %v2570 = vsel %vm2507, %v2505, %v2443
          %v2571 = vsel %vm2507, %v2506, %v2444
          %v2572 = vrot.slane %v2379, 6
          %v2573 = vrot.slane %v2380, 6
          %v2574 = vrot.slane %v2381, 6
          %v2575 = vrot.slane %v2382, 6
          %v2576 = vrot.slane %v2383, 6
          %v2577 = vrot.slane %v2384, 6
          %v2578 = vrot.slane %v2385, 6
          %v2579 = vrot.slane %v2386, 6
          %v2580 = vrot.slane %v2387, 6
          %v2581 = vrot.slane %v2388, 6
          %v2582 = vrot.slane %v2389, 6
          %v2583 = vrot.slane %v2390, 6
          %v2584 = vrot.slane %v2391, 6
          %v2585 = vrot.slane %v2392, 6
          %v2586 = vrot.slane %v2393, 6
          %v2587 = vrot.slane %v2394, 6
          %v2588 = vrot.slane %v2395, 6
          %v2589 = vrot.slane %v2396, 6
          %v2590 = vrot.slane %v2397, 6
          %v2591 = vrot.slane %v2398, 6
          %v2592 = vrot.slane %v2399, 6
          %v2593 = vrot.slane %v2400, 6
          %v2594 = vrot.slane %v2401, 6
          %v2595 = vrot.slane %v2402, 6
          %v2596 = vrot.slane %v2403, 6
          %v2597 = vrot.slane %v2404, 6
          %v2598 = vrot.slane %v2405, 6
          %v2599 = vrot.slane %v2406, 6
          %v2600 = vrot.slane %v2407, 6
          %v2601 = vrot.slane %v2408, 6
          %v2602 = vrot.slane %v2409, 6
          %v2603 = vrot.slane %v2410, 6
          %v2604 = vrot.slane %v2411, 6
          %v2605 = vrot.slane %v2412, 6
          %v2606 = vrot.slane %v2413, 6
          %v2607 = vrot.slane %v2414, 6
          %v2608 = vrot.slane %v2415, 6
          %v2609 = vrot.slane %v2416, 6
          %v2610 = vrot.slane %v2417, 6
          %v2611 = vrot.slane %v2418, 6
          %v2612 = vrot.slane %v2419, 6
          %v2613 = vrot.slane %v2420, 6
          %v2614 = vrot.slane %v2421, 6
          %v2615 = vrot.slane %v2422, 6
          %v2616 = vrot.slane %v2423, 6
          %v2617 = vrot.slane %v2424, 6
          %v2618 = vrot.slane %v2425, 6
          %v2619 = vrot.slane %v2426, 6
          %v2620 = vrot.slane %v2427, 6
          %v2621 = vrot.slane %v2428, 6
          %v2622 = vrot.slane %v2429, 6
          %v2623 = vrot.slane %v2430, 6
          %v2624 = vrot.slane %v2431, 6
          %v2625 = vrot.slane %v2432, 6
          %v2626 = vrot.slane %v2433, 6
          %v2627 = vrot.slane %v2434, 6
          %v2628 = vrot.slane %v2435, 6
          %v2629 = vrot.slane %v2436, 6
          %v2630 = vrot.slane %v2437, 6
          %v2631 = vrot.slane %v2438, 6
          %v2632 = vrot.slane %v2439, 6
          %v2633 = vrot.slane %v2440, 6
          %v2634 = vrot.slane %v2441, 6
          %v2635 = vrot.slane %v2442, 6
          %vm2636 = vcmp.lt.s32.totalorder %v2154, 2
          %v2637 = vsel %vm2636, %v2632, %v2634
          %v2638 = vsel %vm2636, %v2633, %v2635
          %v2639 = vsel %vm2636, %v2630, %v2632
          %v2640 = vsel %vm2636, %v2631, %v2633
          %v2641 = vsel %vm2636, %v2628, %v2630
          %v2642 = vsel %vm2636, %v2629, %v2631
          %v2643 = vsel %vm2636, %v2626, %v2628
          %v2644 = vsel %vm2636, %v2627, %v2629
          %v2645 = vsel %vm2636, %v2624, %v2626
          %v2646 = vsel %vm2636, %v2625, %v2627
          %v2647 = vsel %vm2636, %v2622, %v2624
          %v2648 = vsel %vm2636, %v2623, %v2625
          %v2649 = vsel %vm2636, %v2620, %v2622
          %v2650 = vsel %vm2636, %v2621, %v2623
          %v2651 = vsel %vm2636, %v2618, %v2620
          %v2652 = vsel %vm2636, %v2619, %v2621
          %v2653 = vsel %vm2636, %v2616, %v2618
          %v2654 = vsel %vm2636, %v2617, %v2619
          %v2655 = vsel %vm2636, %v2614, %v2616
          %v2656 = vsel %vm2636, %v2615, %v2617
          %v2657 = vsel %vm2636, %v2612, %v2614
          %v2658 = vsel %vm2636, %v2613, %v2615
          %v2659 = vsel %vm2636, %v2610, %v2612
          %v2660 = vsel %vm2636, %v2611, %v2613
          %v2661 = vsel %vm2636, %v2608, %v2610
          %v2662 = vsel %vm2636, %v2609, %v2611
          %v2663 = vsel %vm2636, %v2606, %v2608
          %v2664 = vsel %vm2636, %v2607, %v2609
          %v2665 = vsel %vm2636, %v2604, %v2606
          %v2666 = vsel %vm2636, %v2605, %v2607
          %v2667 = vsel %vm2636, %v2602, %v2604
          %v2668 = vsel %vm2636, %v2603, %v2605
          %v2669 = vsel %vm2636, %v2600, %v2602
          %v2670 = vsel %vm2636, %v2601, %v2603
          %v2671 = vsel %vm2636, %v2598, %v2600
          %v2672 = vsel %vm2636, %v2599, %v2601
          %v2673 = vsel %vm2636, %v2596, %v2598
          %v2674 = vsel %vm2636, %v2597, %v2599
          %v2675 = vsel %vm2636, %v2594, %v2596
          %v2676 = vsel %vm2636, %v2595, %v2597
          %v2677 = vsel %vm2636, %v2592, %v2594
          %v2678 = vsel %vm2636, %v2593, %v2595
          %v2679 = vsel %vm2636, %v2590, %v2592
          %v2680 = vsel %vm2636, %v2591, %v2593
          %v2681 = vsel %vm2636, %v2588, %v2590
          %v2682 = vsel %vm2636, %v2589, %v2591
          %v2683 = vsel %vm2636, %v2586, %v2588
          %v2684 = vsel %vm2636, %v2587, %v2589
          %v2685 = vsel %vm2636, %v2584, %v2586
          %v2686 = vsel %vm2636, %v2585, %v2587
          %v2687 = vsel %vm2636, %v2582, %v2584
          %v2688 = vsel %vm2636, %v2583, %v2585
          %v2689 = vsel %vm2636, %v2580, %v2582
          %v2690 = vsel %vm2636, %v2581, %v2583
          %v2691 = vsel %vm2636, %v2578, %v2580
          %v2692 = vsel %vm2636, %v2579, %v2581
          %v2693 = vsel %vm2636, %v2576, %v2578
          %v2694 = vsel %vm2636, %v2577, %v2579
          %v2695 = vsel %vm2636, %v2574, %v2576
          %v2696 = vsel %vm2636, %v2575, %v2577
          %v2697 = vsel %vm2636, %v2572, %v2574
          %v2698 = vsel %vm2636, %v2573, %v2575
          %v2699 = vsel %vm2636, %v2634, %v2572
          %v2700 = vsel %vm2636, %v2635, %v2573
          %v2701 = vand.u32 %v2154, 2
          %v2702 = vand.u32 %v2155, 2
          %v2703 = vand.u32 %v2156, 2
          %v2704 = vand.u32 %v2157, 2
          %v2705 = vand.u32 %v2158, 2
          %v2706 = vand.u32 %v2159, 2
          %v2707 = vand.u32 %v2160, 2
          %v2708 = vand.u32 %v2161, 2
          %v2709 = vand.u32 %v2162, 2
          %v2710 = vand.u32 %v2163, 2
          %v2711 = vand.u32 %v2164, 2
          %v2712 = vand.u32 %v2165, 2
          %v2713 = vand.u32 %v2166, 2
          %v2714 = vand.u32 %v2167, 2
          %v2715 = vand.u32 %v2168, 2
          %v2716 = vand.u32 %v2169, 2
          %v2717 = vand.u32 %v2170, 2
          %v2718 = vand.u32 %v2171, 2
          %v2719 = vand.u32 %v2172, 2
          %v2720 = vand.u32 %v2173, 2
          %v2721 = vand.u32 %v2174, 2
          %v2722 = vand.u32 %v2175, 2
          %v2723 = vand.u32 %v2176, 2
          %v2724 = vand.u32 %v2177, 2
          %v2725 = vand.u32 %v2178, 2
          %v2726 = vand.u32 %v2179, 2
          %v2727 = vand.u32 %v2180, 2
          %v2728 = vand.u32 %v2181, 2
          %v2729 = vand.u32 %v2182, 2
          %v2730 = vand.u32 %v2183, 2
          %v2731 = vand.u32 %v2184, 2
          %v2732 = vand.u32 %v2185, 2
          %vm2733 = vcmp.eq.s32.totalorder %v2701, 0
          %vm2734 = vcmp.eq.s32.totalorder %v2702, 0
          %vm2735 = vcmp.eq.s32.totalorder %v2703, 0
          %vm2736 = vcmp.eq.s32.totalorder %v2704, 0
          %vm2737 = vcmp.eq.s32.totalorder %v2705, 0
          %vm2738 = vcmp.eq.s32.totalorder %v2706, 0
          %vm2739 = vcmp.eq.s32.totalorder %v2707, 0
          %vm2740 = vcmp.eq.s32.totalorder %v2708, 0
          %vm2741 = vcmp.eq.s32.totalorder %v2709, 0
          %vm2742 = vcmp.eq.s32.totalorder %v2710, 0
          %vm2743 = vcmp.eq.s32.totalorder %v2711, 0
          %vm2744 = vcmp.eq.s32.totalorder %v2712, 0
          %vm2745 = vcmp.eq.s32.totalorder %v2713, 0
          %vm2746 = vcmp.eq.s32.totalorder %v2714, 0
          %vm2747 = vcmp.eq.s32.totalorder %v2715, 0
          %vm2748 = vcmp.eq.s32.totalorder %v2716, 0
          %vm2749 = vcmp.eq.s32.totalorder %v2717, 0
          %vm2750 = vcmp.eq.s32.totalorder %v2718, 0
          %vm2751 = vcmp.eq.s32.totalorder %v2719, 0
          %vm2752 = vcmp.eq.s32.totalorder %v2720, 0
          %vm2753 = vcmp.eq.s32.totalorder %v2721, 0
          %vm2754 = vcmp.eq.s32.totalorder %v2722, 0
          %vm2755 = vcmp.eq.s32.totalorder %v2723, 0
          %vm2756 = vcmp.eq.s32.totalorder %v2724, 0
          %vm2757 = vcmp.eq.s32.totalorder %v2725, 0
          %vm2758 = vcmp.eq.s32.totalorder %v2726, 0
          %vm2759 = vcmp.eq.s32.totalorder %v2727, 0
          %vm2760 = vcmp.eq.s32.totalorder %v2728, 0
          %vm2761 = vcmp.eq.s32.totalorder %v2729, 0
          %vm2762 = vcmp.eq.s32.totalorder %v2730, 0
          %vm2763 = vcmp.eq.s32.totalorder %v2731, 0
          %vm2764 = vcmp.eq.s32.totalorder %v2732, 0
          %v2765 = vsel %vm2733, %v2568, %v2699
          %v2766 = vsel %vm2733, %v2569, %v2700
          %v2767 = vsel %vm2734, %v2566, %v2697
          %v2768 = vsel %vm2734, %v2567, %v2698
          %v2769 = vsel %vm2735, %v2564, %v2695
          %v2770 = vsel %vm2735, %v2565, %v2696
          %v2771 = vsel %vm2736, %v2562, %v2693
          %v2772 = vsel %vm2736, %v2563, %v2694
          %v2773 = vsel %vm2737, %v2560, %v2691
          %v2774 = vsel %vm2737, %v2561, %v2692
          %v2775 = vsel %vm2738, %v2558, %v2689
          %v2776 = vsel %vm2738, %v2559, %v2690
          %v2777 = vsel %vm2739, %v2556, %v2687
          %v2778 = vsel %vm2739, %v2557, %v2688
          %v2779 = vsel %vm2740, %v2554, %v2685
          %v2780 = vsel %vm2740, %v2555, %v2686
          %v2781 = vsel %vm2741, %v2552, %v2683
          %v2782 = vsel %vm2741, %v2553, %v2684
          %v2783 = vsel %vm2742, %v2550, %v2681
          %v2784 = vsel %vm2742, %v2551, %v2682
          %v2785 = vsel %vm2743, %v2548, %v2679
          %v2786 = vsel %vm2743, %v2549, %v2680
          %v2787 = vsel %vm2744, %v2546, %v2677
          %v2788 = vsel %vm2744, %v2547, %v2678
          %v2789 = vsel %vm2745, %v2544, %v2675
          %v2790 = vsel %vm2745, %v2545, %v2676
          %v2791 = vsel %vm2746, %v2542, %v2673
          %v2792 = vsel %vm2746, %v2543, %v2674
          %v2793 = vsel %vm2747, %v2540, %v2671
          %v2794 = vsel %vm2747, %v2541, %v2672
          %v2795 = vsel %vm2748, %v2538, %v2669
          %v2796 = vsel %vm2748, %v2539, %v2670
          %v2797 = vsel %vm2749, %v2536, %v2667
          %v2798 = vsel %vm2749, %v2537, %v2668
          %v2799 = vsel %vm2750, %v2534, %v2665
          %v2800 = vsel %vm2750, %v2535, %v2666
          %v2801 = vsel %vm2751, %v2532, %v2663
          %v2802 = vsel %vm2751, %v2533, %v2664
          %v2803 = vsel %vm2752, %v2530, %v2661
          %v2804 = vsel %vm2752, %v2531, %v2662
          %v2805 = vsel %vm2753, %v2528, %v2659
          %v2806 = vsel %vm2753, %v2529, %v2660
          %v2807 = vsel %vm2754, %v2526, %v2657
          %v2808 = vsel %vm2754, %v2527, %v2658
          %v2809 = vsel %vm2755, %v2524, %v2655
          %v2810 = vsel %vm2755, %v2525, %v2656
          %v2811 = vsel %vm2756, %v2522, %v2653
          %v2812 = vsel %vm2756, %v2523, %v2654
          %v2813 = vsel %vm2757, %v2520, %v2651
          %v2814 = vsel %vm2757, %v2521, %v2652
          %v2815 = vsel %vm2758, %v2518, %v2649
          %v2816 = vsel %vm2758, %v2519, %v2650
          %v2817 = vsel %vm2759, %v2516, %v2647
          %v2818 = vsel %vm2759, %v2517, %v2648
          %v2819 = vsel %vm2760, %v2514, %v2645
          %v2820 = vsel %vm2760, %v2515, %v2646
          %v2821 = vsel %vm2761, %v2512, %v2643
          %v2822 = vsel %vm2761, %v2513, %v2644
          %v2823 = vsel %vm2762, %v2510, %v2641
          %v2824 = vsel %vm2762, %v2511, %v2642
          %v2825 = vsel %vm2763, %v2508, %v2639
          %v2826 = vsel %vm2763, %v2509, %v2640
          %v2827 = vsel %vm2764, %v2570, %v2637
          %v2828 = vsel %vm2764, %v2571, %v2638
          %v2829 = vrot.slane %v2765, 1
          %v2830 = vrot.slane %v2766, 1
          %v2831 = vrot.slane %v2767, 1
          %v2832 = vrot.slane %v2768, 1
          %v2833 = vrot.slane %v2769, 1
          %v2834 = vrot.slane %v2770, 1
          %v2835 = vrot.slane %v2771, 1
          %v2836 = vrot.slane %v2772, 1
          %v2837 = vrot.slane %v2773, 1
          %v2838 = vrot.slane %v2774, 1
          %v2839 = vrot.slane %v2775, 1
          %v2840 = vrot.slane %v2776, 1
          %v2841 = vrot.slane %v2777, 1
          %v2842 = vrot.slane %v2778, 1
          %v2843 = vrot.slane %v2779, 1
          %v2844 = vrot.slane %v2780, 1
          %v2845 = vrot.slane %v2781, 1
          %v2846 = vrot.slane %v2782, 1
          %v2847 = vrot.slane %v2783, 1
          %v2848 = vrot.slane %v2784, 1
          %v2849 = vrot.slane %v2785, 1
          %v2850 = vrot.slane %v2786, 1
          %v2851 = vrot.slane %v2787, 1
          %v2852 = vrot.slane %v2788, 1
          %v2853 = vrot.slane %v2789, 1
          %v2854 = vrot.slane %v2790, 1
          %v2855 = vrot.slane %v2791, 1
          %v2856 = vrot.slane %v2792, 1
          %v2857 = vrot.slane %v2793, 1
          %v2858 = vrot.slane %v2794, 1
          %v2859 = vrot.slane %v2795, 1
          %v2860 = vrot.slane %v2796, 1
          %v2861 = vrot.slane %v2797, 1
          %v2862 = vrot.slane %v2798, 1
          %v2863 = vrot.slane %v2799, 1
          %v2864 = vrot.slane %v2800, 1
          %v2865 = vrot.slane %v2801, 1
          %v2866 = vrot.slane %v2802, 1
          %v2867 = vrot.slane %v2803, 1
          %v2868 = vrot.slane %v2804, 1
          %v2869 = vrot.slane %v2805, 1
          %v2870 = vrot.slane %v2806, 1
          %v2871 = vrot.slane %v2807, 1
          %v2872 = vrot.slane %v2808, 1
          %v2873 = vrot.slane %v2809, 1
          %v2874 = vrot.slane %v2810, 1
          %v2875 = vrot.slane %v2811, 1
          %v2876 = vrot.slane %v2812, 1
          %v2877 = vrot.slane %v2813, 1
          %v2878 = vrot.slane %v2814, 1
          %v2879 = vrot.slane %v2815, 1
          %v2880 = vrot.slane %v2816, 1
          %v2881 = vrot.slane %v2817, 1
          %v2882 = vrot.slane %v2818, 1
          %v2883 = vrot.slane %v2819, 1
          %v2884 = vrot.slane %v2820, 1
          %v2885 = vrot.slane %v2821, 1
          %v2886 = vrot.slane %v2822, 1
          %v2887 = vrot.slane %v2823, 1
          %v2888 = vrot.slane %v2824, 1
          %v2889 = vrot.slane %v2825, 1
          %v2890 = vrot.slane %v2826, 1
          %v2891 = vrot.slane %v2827, 1
          %v2892 = vrot.slane %v2828, 1
          %vm2893 = vcmp.lt.s32.totalorder %v2154, 7
          %v2894 = vsel %vm2893, %v2889, %v2891
          %v2895 = vsel %vm2893, %v2890, %v2892
          %v2896 = vsel %vm2893, %v2887, %v2889
          %v2897 = vsel %vm2893, %v2888, %v2890
          %v2898 = vsel %vm2893, %v2885, %v2887
          %v2899 = vsel %vm2893, %v2886, %v2888
          %v2900 = vsel %vm2893, %v2883, %v2885
          %v2901 = vsel %vm2893, %v2884, %v2886
          %v2902 = vsel %vm2893, %v2881, %v2883
          %v2903 = vsel %vm2893, %v2882, %v2884
          %v2904 = vsel %vm2893, %v2879, %v2881
          %v2905 = vsel %vm2893, %v2880, %v2882
          %v2906 = vsel %vm2893, %v2877, %v2879
          %v2907 = vsel %vm2893, %v2878, %v2880
          %v2908 = vsel %vm2893, %v2875, %v2877
          %v2909 = vsel %vm2893, %v2876, %v2878
          %v2910 = vsel %vm2893, %v2873, %v2875
          %v2911 = vsel %vm2893, %v2874, %v2876
          %v2912 = vsel %vm2893, %v2871, %v2873
          %v2913 = vsel %vm2893, %v2872, %v2874
          %v2914 = vsel %vm2893, %v2869, %v2871
          %v2915 = vsel %vm2893, %v2870, %v2872
          %v2916 = vsel %vm2893, %v2867, %v2869
          %v2917 = vsel %vm2893, %v2868, %v2870
          %v2918 = vsel %vm2893, %v2865, %v2867
          %v2919 = vsel %vm2893, %v2866, %v2868
          %v2920 = vsel %vm2893, %v2863, %v2865
          %v2921 = vsel %vm2893, %v2864, %v2866
          %v2922 = vsel %vm2893, %v2861, %v2863
          %v2923 = vsel %vm2893, %v2862, %v2864
          %v2924 = vsel %vm2893, %v2859, %v2861
          %v2925 = vsel %vm2893, %v2860, %v2862
          %v2926 = vsel %vm2893, %v2857, %v2859
          %v2927 = vsel %vm2893, %v2858, %v2860
          %v2928 = vsel %vm2893, %v2855, %v2857
          %v2929 = vsel %vm2893, %v2856, %v2858
          %v2930 = vsel %vm2893, %v2853, %v2855
          %v2931 = vsel %vm2893, %v2854, %v2856
          %v2932 = vsel %vm2893, %v2851, %v2853
          %v2933 = vsel %vm2893, %v2852, %v2854
          %v2934 = vsel %vm2893, %v2849, %v2851
          %v2935 = vsel %vm2893, %v2850, %v2852
          %v2936 = vsel %vm2893, %v2847, %v2849
          %v2937 = vsel %vm2893, %v2848, %v2850
          %v2938 = vsel %vm2893, %v2845, %v2847
          %v2939 = vsel %vm2893, %v2846, %v2848
          %v2940 = vsel %vm2893, %v2843, %v2845
          %v2941 = vsel %vm2893, %v2844, %v2846
          %v2942 = vsel %vm2893, %v2841, %v2843
          %v2943 = vsel %vm2893, %v2842, %v2844
          %v2944 = vsel %vm2893, %v2839, %v2841
          %v2945 = vsel %vm2893, %v2840, %v2842
          %v2946 = vsel %vm2893, %v2837, %v2839
          %v2947 = vsel %vm2893, %v2838, %v2840
          %v2948 = vsel %vm2893, %v2835, %v2837
          %v2949 = vsel %vm2893, %v2836, %v2838
          %v2950 = vsel %vm2893, %v2833, %v2835
          %v2951 = vsel %vm2893, %v2834, %v2836
          %v2952 = vsel %vm2893, %v2831, %v2833
          %v2953 = vsel %vm2893, %v2832, %v2834
          %v2954 = vsel %vm2893, %v2829, %v2831
          %v2955 = vsel %vm2893, %v2830, %v2832
          %v2956 = vsel %vm2893, %v2891, %v2829
          %v2957 = vsel %vm2893, %v2892, %v2830
          %v2958 = vrot.slane %v2765, 7
          %v2959 = vrot.slane %v2766, 7
          %v2960 = vrot.slane %v2767, 7
          %v2961 = vrot.slane %v2768, 7
          %v2962 = vrot.slane %v2769, 7
          %v2963 = vrot.slane %v2770, 7
          %v2964 = vrot.slane %v2771, 7
          %v2965 = vrot.slane %v2772, 7
          %v2966 = vrot.slane %v2773, 7
          %v2967 = vrot.slane %v2774, 7
          %v2968 = vrot.slane %v2775, 7
          %v2969 = vrot.slane %v2776, 7
          %v2970 = vrot.slane %v2777, 7
          %v2971 = vrot.slane %v2778, 7
          %v2972 = vrot.slane %v2779, 7
          %v2973 = vrot.slane %v2780, 7
          %v2974 = vrot.slane %v2781, 7
          %v2975 = vrot.slane %v2782, 7
          %v2976 = vrot.slane %v2783, 7
          %v2977 = vrot.slane %v2784, 7
          %v2978 = vrot.slane %v2785, 7
          %v2979 = vrot.slane %v2786, 7
          %v2980 = vrot.slane %v2787, 7
          %v2981 = vrot.slane %v2788, 7
          %v2982 = vrot.slane %v2789, 7
          %v2983 = vrot.slane %v2790, 7
          %v2984 = vrot.slane %v2791, 7
          %v2985 = vrot.slane %v2792, 7
          %v2986 = vrot.slane %v2793, 7
          %v2987 = vrot.slane %v2794, 7
          %v2988 = vrot.slane %v2795, 7
          %v2989 = vrot.slane %v2796, 7
          %v2990 = vrot.slane %v2797, 7
          %v2991 = vrot.slane %v2798, 7
          %v2992 = vrot.slane %v2799, 7
          %v2993 = vrot.slane %v2800, 7
          %v2994 = vrot.slane %v2801, 7
          %v2995 = vrot.slane %v2802, 7
          %v2996 = vrot.slane %v2803, 7
          %v2997 = vrot.slane %v2804, 7
          %v2998 = vrot.slane %v2805, 7
          %v2999 = vrot.slane %v2806, 7
          %v3000 = vrot.slane %v2807, 7
          %v3001 = vrot.slane %v2808, 7
          %v3002 = vrot.slane %v2809, 7
          %v3003 = vrot.slane %v2810, 7
          %v3004 = vrot.slane %v2811, 7
          %v3005 = vrot.slane %v2812, 7
          %v3006 = vrot.slane %v2813, 7
          %v3007 = vrot.slane %v2814, 7
          %v3008 = vrot.slane %v2815, 7
          %v3009 = vrot.slane %v2816, 7
          %v3010 = vrot.slane %v2817, 7
          %v3011 = vrot.slane %v2818, 7
          %v3012 = vrot.slane %v2819, 7
          %v3013 = vrot.slane %v2820, 7
          %v3014 = vrot.slane %v2821, 7
          %v3015 = vrot.slane %v2822, 7
          %v3016 = vrot.slane %v2823, 7
          %v3017 = vrot.slane %v2824, 7
          %v3018 = vrot.slane %v2825, 7
          %v3019 = vrot.slane %v2826, 7
          %v3020 = vrot.slane %v2827, 7
          %v3021 = vrot.slane %v2828, 7
          %vm3022 = vcmp.lt.s32.totalorder %v2154, 1
          %v3023 = vsel %vm3022, %v3018, %v3020
          %v3024 = vsel %vm3022, %v3019, %v3021
          %v3025 = vsel %vm3022, %v3016, %v3018
          %v3026 = vsel %vm3022, %v3017, %v3019
          %v3027 = vsel %vm3022, %v3014, %v3016
          %v3028 = vsel %vm3022, %v3015, %v3017
          %v3029 = vsel %vm3022, %v3012, %v3014
          %v3030 = vsel %vm3022, %v3013, %v3015
          %v3031 = vsel %vm3022, %v3010, %v3012
          %v3032 = vsel %vm3022, %v3011, %v3013
          %v3033 = vsel %vm3022, %v3008, %v3010
          %v3034 = vsel %vm3022, %v3009, %v3011
          %v3035 = vsel %vm3022, %v3006, %v3008
          %v3036 = vsel %vm3022, %v3007, %v3009
          %v3037 = vsel %vm3022, %v3004, %v3006
          %v3038 = vsel %vm3022, %v3005, %v3007
          %v3039 = vsel %vm3022, %v3002, %v3004
          %v3040 = vsel %vm3022, %v3003, %v3005
          %v3041 = vsel %vm3022, %v3000, %v3002
          %v3042 = vsel %vm3022, %v3001, %v3003
          %v3043 = vsel %vm3022, %v2998, %v3000
          %v3044 = vsel %vm3022, %v2999, %v3001
          %v3045 = vsel %vm3022, %v2996, %v2998
          %v3046 = vsel %vm3022, %v2997, %v2999
          %v3047 = vsel %vm3022, %v2994, %v2996
          %v3048 = vsel %vm3022, %v2995, %v2997
          %v3049 = vsel %vm3022, %v2992, %v2994
          %v3050 = vsel %vm3022, %v2993, %v2995
          %v3051 = vsel %vm3022, %v2990, %v2992
          %v3052 = vsel %vm3022, %v2991, %v2993
          %v3053 = vsel %vm3022, %v2988, %v2990
          %v3054 = vsel %vm3022, %v2989, %v2991
          %v3055 = vsel %vm3022, %v2986, %v2988
          %v3056 = vsel %vm3022, %v2987, %v2989
          %v3057 = vsel %vm3022, %v2984, %v2986
          %v3058 = vsel %vm3022, %v2985, %v2987
          %v3059 = vsel %vm3022, %v2982, %v2984
          %v3060 = vsel %vm3022, %v2983, %v2985
          %v3061 = vsel %vm3022, %v2980, %v2982
          %v3062 = vsel %vm3022, %v2981, %v2983
          %v3063 = vsel %vm3022, %v2978, %v2980
          %v3064 = vsel %vm3022, %v2979, %v2981
          %v3065 = vsel %vm3022, %v2976, %v2978
          %v3066 = vsel %vm3022, %v2977, %v2979
          %v3067 = vsel %vm3022, %v2974, %v2976
          %v3068 = vsel %vm3022, %v2975, %v2977
          %v3069 = vsel %vm3022, %v2972, %v2974
          %v3070 = vsel %vm3022, %v2973, %v2975
          %v3071 = vsel %vm3022, %v2970, %v2972
          %v3072 = vsel %vm3022, %v2971, %v2973
          %v3073 = vsel %vm3022, %v2968, %v2970
          %v3074 = vsel %vm3022, %v2969, %v2971
          %v3075 = vsel %vm3022, %v2966, %v2968
          %v3076 = vsel %vm3022, %v2967, %v2969
          %v3077 = vsel %vm3022, %v2964, %v2966
          %v3078 = vsel %vm3022, %v2965, %v2967
          %v3079 = vsel %vm3022, %v2962, %v2964
          %v3080 = vsel %vm3022, %v2963, %v2965
          %v3081 = vsel %vm3022, %v2960, %v2962
          %v3082 = vsel %vm3022, %v2961, %v2963
          %v3083 = vsel %vm3022, %v2958, %v2960
          %v3084 = vsel %vm3022, %v2959, %v2961
          %v3085 = vsel %vm3022, %v3020, %v2958
          %v3086 = vsel %vm3022, %v3021, %v2959
          %v3087 = vand.u32 %v2154, 1
          %v3088 = vand.u32 %v2155, 1
          %v3089 = vand.u32 %v2156, 1
          %v3090 = vand.u32 %v2157, 1
          %v3091 = vand.u32 %v2158, 1
          %v3092 = vand.u32 %v2159, 1
          %v3093 = vand.u32 %v2160, 1
          %v3094 = vand.u32 %v2161, 1
          %v3095 = vand.u32 %v2162, 1
          %v3096 = vand.u32 %v2163, 1
          %v3097 = vand.u32 %v2164, 1
          %v3098 = vand.u32 %v2165, 1
          %v3099 = vand.u32 %v2166, 1
          %v3100 = vand.u32 %v2167, 1
          %v3101 = vand.u32 %v2168, 1
          %v3102 = vand.u32 %v2169, 1
          %v3103 = vand.u32 %v2170, 1
          %v3104 = vand.u32 %v2171, 1
          %v3105 = vand.u32 %v2172, 1
          %v3106 = vand.u32 %v2173, 1
          %v3107 = vand.u32 %v2174, 1
          %v3108 = vand.u32 %v2175, 1
          %v3109 = vand.u32 %v2176, 1
          %v3110 = vand.u32 %v2177, 1
          %v3111 = vand.u32 %v2178, 1
          %v3112 = vand.u32 %v2179, 1
          %v3113 = vand.u32 %v2180, 1
          %v3114 = vand.u32 %v2181, 1
          %v3115 = vand.u32 %v2182, 1
          %v3116 = vand.u32 %v2183, 1
          %v3117 = vand.u32 %v2184, 1
          %v3118 = vand.u32 %v2185, 1
          %vm3119 = vcmp.eq.s32.totalorder %v3087, 0
          %vm3120 = vcmp.eq.s32.totalorder %v3088, 0
          %vm3121 = vcmp.eq.s32.totalorder %v3089, 0
          %vm3122 = vcmp.eq.s32.totalorder %v3090, 0
          %vm3123 = vcmp.eq.s32.totalorder %v3091, 0
          %vm3124 = vcmp.eq.s32.totalorder %v3092, 0
          %vm3125 = vcmp.eq.s32.totalorder %v3093, 0
          %vm3126 = vcmp.eq.s32.totalorder %v3094, 0
          %vm3127 = vcmp.eq.s32.totalorder %v3095, 0
          %vm3128 = vcmp.eq.s32.totalorder %v3096, 0
          %vm3129 = vcmp.eq.s32.totalorder %v3097, 0
          %vm3130 = vcmp.eq.s32.totalorder %v3098, 0
          %vm3131 = vcmp.eq.s32.totalorder %v3099, 0
          %vm3132 = vcmp.eq.s32.totalorder %v3100, 0
          %vm3133 = vcmp.eq.s32.totalorder %v3101, 0
          %vm3134 = vcmp.eq.s32.totalorder %v3102, 0
          %vm3135 = vcmp.eq.s32.totalorder %v3103, 0
          %vm3136 = vcmp.eq.s32.totalorder %v3104, 0
          %vm3137 = vcmp.eq.s32.totalorder %v3105, 0
          %vm3138 = vcmp.eq.s32.totalorder %v3106, 0
          %vm3139 = vcmp.eq.s32.totalorder %v3107, 0
          %vm3140 = vcmp.eq.s32.totalorder %v3108, 0
          %vm3141 = vcmp.eq.s32.totalorder %v3109, 0
          %vm3142 = vcmp.eq.s32.totalorder %v3110, 0
          %vm3143 = vcmp.eq.s32.totalorder %v3111, 0
          %vm3144 = vcmp.eq.s32.totalorder %v3112, 0
          %vm3145 = vcmp.eq.s32.totalorder %v3113, 0
          %vm3146 = vcmp.eq.s32.totalorder %v3114, 0
          %vm3147 = vcmp.eq.s32.totalorder %v3115, 0
          %vm3148 = vcmp.eq.s32.totalorder %v3116, 0
          %vm3149 = vcmp.eq.s32.totalorder %v3117, 0
          %vm3150 = vcmp.eq.s32.totalorder %v3118, 0
          %v3151 = vsel %vm3119, %v2954, %v3085
          %v3152 = vsel %vm3119, %v2955, %v3086
          %v3153 = vsel %vm3120, %v2952, %v3083
          %v3154 = vsel %vm3120, %v2953, %v3084
          %v3155 = vsel %vm3121, %v2950, %v3081
          %v3156 = vsel %vm3121, %v2951, %v3082
          %v3157 = vsel %vm3122, %v2948, %v3079
          %v3158 = vsel %vm3122, %v2949, %v3080
          %v3159 = vsel %vm3123, %v2946, %v3077
          %v3160 = vsel %vm3123, %v2947, %v3078
          %v3161 = vsel %vm3124, %v2944, %v3075
          %v3162 = vsel %vm3124, %v2945, %v3076
          %v3163 = vsel %vm3125, %v2942, %v3073
          %v3164 = vsel %vm3125, %v2943, %v3074
          %v3165 = vsel %vm3126, %v2940, %v3071
          %v3166 = vsel %vm3126, %v2941, %v3072
          %v3167 = vsel %vm3127, %v2938, %v3069
          %v3168 = vsel %vm3127, %v2939, %v3070
          %v3169 = vsel %vm3128, %v2936, %v3067
          %v3170 = vsel %vm3128, %v2937, %v3068
          %v3171 = vsel %vm3129, %v2934, %v3065
          %v3172 = vsel %vm3129, %v2935, %v3066
          %v3173 = vsel %vm3130, %v2932, %v3063
          %v3174 = vsel %vm3130, %v2933, %v3064
          %v3175 = vsel %vm3131, %v2930, %v3061
          %v3176 = vsel %vm3131, %v2931, %v3062
          %v3177 = vsel %vm3132, %v2928, %v3059
          %v3178 = vsel %vm3132, %v2929, %v3060
          %v3179 = vsel %vm3133, %v2926, %v3057
          %v3180 = vsel %vm3133, %v2927, %v3058
          %v3181 = vsel %vm3134, %v2924, %v3055
          %v3182 = vsel %vm3134, %v2925, %v3056
          %v3183 = vsel %vm3135, %v2922, %v3053
          %v3184 = vsel %vm3135, %v2923, %v3054
          %v3185 = vsel %vm3136, %v2920, %v3051
          %v3186 = vsel %vm3136, %v2921, %v3052
          %v3187 = vsel %vm3137, %v2918, %v3049
          %v3188 = vsel %vm3137, %v2919, %v3050
          %v3189 = vsel %vm3138, %v2916, %v3047
          %v3190 = vsel %vm3138, %v2917, %v3048
          %v3191 = vsel %vm3139, %v2914, %v3045
          %v3192 = vsel %vm3139, %v2915, %v3046
          %v3193 = vsel %vm3140, %v2912, %v3043
          %v3194 = vsel %vm3140, %v2913, %v3044
          %v3195 = vsel %vm3141, %v2910, %v3041
          %v3196 = vsel %vm3141, %v2911, %v3042
          %v3197 = vsel %vm3142, %v2908, %v3039
          %v3198 = vsel %vm3142, %v2909, %v3040
          %v3199 = vsel %vm3143, %v2906, %v3037
          %v3200 = vsel %vm3143, %v2907, %v3038
          %v3201 = vsel %vm3144, %v2904, %v3035
          %v3202 = vsel %vm3144, %v2905, %v3036
          %v3203 = vsel %vm3145, %v2902, %v3033
          %v3204 = vsel %vm3145, %v2903, %v3034
          %v3205 = vsel %vm3146, %v2900, %v3031
          %v3206 = vsel %vm3146, %v2901, %v3032
          %v3207 = vsel %vm3147, %v2898, %v3029
          %v3208 = vsel %vm3147, %v2899, %v3030
          %v3209 = vsel %vm3148, %v2896, %v3027
          %v3210 = vsel %vm3148, %v2897, %v3028
          %v3211 = vsel %vm3149, %v2894, %v3025
          %v3212 = vsel %vm3149, %v2895, %v3026
          %v3213 = vsel %vm3150, %v2956, %v3023
          %v3214 = vsel %vm3150, %v2957, %v3024
          %3215 = vst [vmem:[%s220] sm:$0xff] %v3151
          %3216 = vst [vmem:[%s220 + $0x8] sm:$0xff] %v3152
          %3217 = vst [vmem:[%s220 + $0x10] sm:$0xff] %v3153
          %3218 = vst [vmem:[%s220 + $0x18] sm:$0xff] %v3154
          %3219 = vst [vmem:[%s220 + $0x20] sm:$0xff] %v3155
          %3220 = vst [vmem:[%s220 + $0x28] sm:$0xff] %v3156
          %3221 = vst [vmem:[%s220 + $0x30] sm:$0xff] %v3157
          %3222 = vst [vmem:[%s220 + $0x38] sm:$0xff] %v3158
          %3223 = vst [vmem:[%s220 + $0x40] sm:$0xff] %v3159
          %3224 = vst [vmem:[%s220 + $0x48] sm:$0xff] %v3160
          %3225 = vst [vmem:[%s220 + $0x50] sm:$0xff] %v3161
          %3226 = vst [vmem:[%s220 + $0x58] sm:$0xff] %v3162
          %3227 = vst [vmem:[%s220 + $0x60] sm:$0xff] %v3163
          %3228 = vst [vmem:[%s220 + $0x68] sm:$0xff] %v3164
          %3229 = vst [vmem:[%s220 + $0x70] sm:$0xff] %v3165
          %3230 = vst [vmem:[%s220 + $0x78] sm:$0xff] %v3166
          %3231 = vst [vmem:[%s220 + $0x80] sm:$0xff] %v3167
          %3232 = vst [vmem:[%s220 + $0x88] sm:$0xff] %v3168
          %3233 = vst [vmem:[%s220 + $0x90] sm:$0xff] %v3169
          %3234 = vst [vmem:[%s220 + $0x98] sm:$0xff] %v3170
          %3235 = vst [vmem:[%s220 + $0xa0] sm:$0xff] %v3171
          %3236 = vst [vmem:[%s220 + $0xa8] sm:$0xff] %v3172
          %3237 = vst [vmem:[%s220 + $0xb0] sm:$0xff] %v3173
          %3238 = vst [vmem:[%s220 + $0xb8] sm:$0xff] %v3174
          %3239 = vst [vmem:[%s220 + $0xc0] sm:$0xff] %v3175
          %3240 = vst [vmem:[%s220 + $0xc8] sm:$0xff] %v3176
          %3241 = vst [vmem:[%s220 + $0xd0] sm:$0xff] %v3177
          %3242 = vst [vmem:[%s220 + $0xd8] sm:$0xff] %v3178
          %3243 = vst [vmem:[%s220 + $0xe0] sm:$0xff] %v3179
          %3244 = vst [vmem:[%s220 + $0xe8] sm:$0xff] %v3180
          %3245 = vst [vmem:[%s220 + $0xf0] sm:$0xff] %v3181
          %3246 = vst [vmem:[%s220 + $0xf8] sm:$0xff] %v3182
          %3247 = vst [vmem:[%s220 + $0x100] sm:$0xff] %v3183
          %3248 = vst [vmem:[%s220 + $0x108] sm:$0xff] %v3184
          %3249 = vst [vmem:[%s220 + $0x110] sm:$0xff] %v3185
          %3250 = vst [vmem:[%s220 + $0x118] sm:$0xff] %v3186
          %3251 = vst [vmem:[%s220 + $0x120] sm:$0xff] %v3187
          %3252 = vst [vmem:[%s220 + $0x128] sm:$0xff] %v3188
          %3253 = vst [vmem:[%s220 + $0x130] sm:$0xff] %v3189
          %3254 = vst [vmem:[%s220 + $0x138] sm:$0xff] %v3190
          %3255 = vst [vmem:[%s220 + $0x140] sm:$0xff] %v3191
          %3256 = vst [vmem:[%s220 + $0x148] sm:$0xff] %v3192
          %3257 = vst [vmem:[%s220 + $0x150] sm:$0xff] %v3193
          %3258 = vst [vmem:[%s220 + $0x158] sm:$0xff] %v3194
          %3259 = vst [vmem:[%s220 + $0x160] sm:$0xff] %v3195
          %3260 = vst [vmem:[%s220 + $0x168] sm:$0xff] %v3196
          %3261 = vst [vmem:[%s220 + $0x170] sm:$0xff] %v3197
          %3262 = vst [vmem:[%s220 + $0x178] sm:$0xff] %v3198
          %3263 = vst [vmem:[%s220 + $0x180] sm:$0xff] %v3199
          %3264 = vst [vmem:[%s220 + $0x188] sm:$0xff] %v3200
          %3265 = vst [vmem:[%s220 + $0x190] sm:$0xff] %v3201
          %3266 = vst [vmem:[%s220 + $0x198] sm:$0xff] %v3202
          %3267 = vst [vmem:[%s220 + $0x1a0] sm:$0xff] %v3203
          %3268 = vst [vmem:[%s220 + $0x1a8] sm:$0xff] %v3204
          %3269 = vst [vmem:[%s220 + $0x1b0] sm:$0xff] %v3205
          %3270 = vst [vmem:[%s220 + $0x1b8] sm:$0xff] %v3206
          %3271 = vst [vmem:[%s220 + $0x1c0] sm:$0xff] %v3207
          %3272 = vst [vmem:[%s220 + $0x1c8] sm:$0xff] %v3208
          %3273 = vst [vmem:[%s220 + $0x1d0] sm:$0xff] %v3209
          %3274 = vst [vmem:[%s220 + $0x1d8] sm:$0xff] %v3210
          %3275 = vst [vmem:[%s220 + $0x1e0] sm:$0xff] %v3211
          %3276 = vst [vmem:[%s220 + $0x1e8] sm:$0xff] %v3212
          %3277 = vst [vmem:[%s220 + $0x1f0] sm:$0xff] %v3213
          %3278 = vst [vmem:[%s220 + $0x1f8] sm:$0xff] %v3214
        $region48: #{tpu_custom_call.1} parent=23 // pred_fallthru
          _
        %s3279 = sand.u32 %s119, 1
        %s3280 = scalar_lea.sflag [#allocation6], %s3279
        %s3281 = sand.u32 %s119, 1
        %s3282 = smul.addr %s3281, 512
        %s3283 = scalar_lea.vmem [#allocation7], %s3282
        // Predicated region
        $region49: #{tpu_custom_call.1} parent=23 // pred_check
          %p3284 = pneg %p129
        $region50: #{tpu_custom_call.1} parent=23 // pred_check_branch
          %3286 = sbr.rel (%p3284) target = $region52
        $region51: #{tpu_custom_call.1} parent=23 // pred_region
          %s3287 = smul.u32 32, %s31
          %s3288 = smul.u32 2, %s32
          %s3290 = ssub.s32 8192, 8192
          %3291 = vsyncadd %s3280, %s3290
          %s3292 = smul.addr %s3287, 2
          %s3293 = sadd.s32 %s3288, %s3292
          %s3294 = smul.addr %s30, 64
          %s3295 = sadd.s32 %s3293, %s3294
          %s3296 = smul.addr %s29, 192
          %s3297 = sadd.s32 %s3295, %s3296
          %s3298 = smul.addr %s3297, 128
          %s3299 = scalar_lea.hbm %s2, %s3298
          %s3300 = sshll.u32 %s3283, 4
          %s3301 = int_to_ptr.vmem [resolvable:$true] %s3300
          %3306 = dma.vmem_to_hbm [thread:$0]  %s3301, 8192, %s3299, %s3280, 256, 256, 16
        $region52: #{tpu_custom_call.1} parent=23 // pred_fallthru
          _
      $region24: #{tpu_custom_call.1} parent=5 // pred_fallthru
        _
      %p3307 = scmp.le.s32.totalorder 2, %s18
      // Predicated region
      $region53: #{tpu_custom_call.1} parent=5 // pred_check
        %p3308 = pneg %p3307
      $region54: #{tpu_custom_call.1} parent=5 // pred_check_branch
        %3310 = sbr.rel (%p3308) target = $region56
      $region55: #{tpu_custom_call.1} parent=5 // pred_region
        %s3311 = ssub.s32 %s18, 2
        // Predicated region
        $region57: #{tpu_custom_call.1} parent=55 // pred_check
          %p3312 = pneg %p135
        $region58: #{tpu_custom_call.1} parent=55 // pred_check_branch
          %3314 = sbr.rel (%p3312) target = $region60
        $region59: #{tpu_custom_call.1} parent=55 // pred_region
          %s3315 = sand.u32 %s120, 1
          %s3316 = scalar_lea.sflag [#allocation6], %s3315
          %s3317 = sand.u32 %s120, 1
          %s3318 = smul.addr %s3317, 512
          %s3319 = scalar_lea.vmem [#allocation7], %s3318
          %3320 = dma.done %s3316, 8192
        $region60: #{tpu_custom_call.1} parent=55 // pred_fallthru
          _
      $region56: #{tpu_custom_call.1} parent=5 // pred_fallthru
        _
    $region6: #{tpu_custom_call.1} parent=1 // loop_footer
      %s22 = sadd.s32 1, %s18
    $region7: #{tpu_custom_call.1} parent=1 // loop_footer_branch
      %17 = sbr.rel target = $region3
    $region8: #{tpu_custom_call.1} parent=1 // loop_exit
      _
    %3321 = vsyncpa [#allocation5], 1
    %s3322 = scalar_lea.sflag [#allocation5], 1
    %3323 = vsyncpa %s3322, 1
    %3324 = vsyncpa [#allocation6], 1
    %s3325 = scalar_lea.sflag [#allocation6], 1
    %3326 = vsyncpa %s3325, 1

</llo_original>
